<compile_context>
chip_gen: v7x
topology: tpu7x:2x2x1
jax: 0.10.0
libtpu: 0.0.40
codegen_flags: <defaults>
</compile_context>

<pallas_src>
import numpy as np
import jax
import jax.numpy as jnp
from jax.experimental import pallas as pl
from jax.experimental.pallas import tpu as pltpu

ALPHA = 0.1      # LeakyReLU negative slope
NUM_CH = 6       # h_A, h_A2, h_A3, h_sct1, h_sct2, h_sct3


def _round_up(v, m):
    return ((v + m - 1) // m) * m


def _lrelu(v, alpha=ALPHA):
    return jnp.where(v > 0, v, alpha * v)


def _sct_attention_kernel(ahat_ref, p_ref, x_ref, wmlp_ref, a_left_ref,
                          a_rbd_ref, g_ref, s_pad_ref, e_pad_ref,
                          out_ref, hcat_ref):
    """One packed/padded tile of graphs per grid step; operands VMEM resident."""
    f32 = jnp.float32
    fo = wmlp_ref.shape[1]                      # out_features
    cdt = ahat_ref.dtype                        # MXU input dtype (bf16 or f32)
    a_hat = ahat_ref[...]                       # (T, T), cdt
    p = p_ref[...]                              # (T, T), cdt

    def hop(op, v):
        # bf16 (or f32) MXU inputs, fp32 accumulation; running value stays f32.
        return jnp.dot(op, v.astype(cdt), preferred_element_type=f32)

    # support0 = mlp(input)  (Linear, no bias) -- tiny, kept fp32.
    s = jnp.dot(x_ref[...], wmlp_ref[...], preferred_element_type=f32)      # (T, fo)
    # Left half of the attention score (shared by all 6 channels).
    e_h = jnp.dot(_lrelu(s), a_left_ref[...], preferred_element_type=f32)   # (T, 1)

    # --- GCN diffusion (channels 0..2) written straight into the h_cat slab ---
    h = hop(a_hat, s)
    hcat_ref[:, 0 * fo:1 * fo] = h
    h = hop(a_hat, h)
    hcat_ref[:, 1 * fo:2 * fo] = h
    h = hop(a_hat, h)
    hcat_ref[:, 2 * fo:3 * fo] = h

    # --- scattering diffusion (channels 3..5); <= 2 live P^k s intermediates ---
    p1 = hop(p, s)
    p2 = hop(p, p1)
    hcat_ref[:, 3 * fo:4 * fo] = jnp.abs(p1 - p2)            # |Psi_1 s|
    p4 = hop(p, hop(p, p2))
    hcat_ref[:, 4 * fo:5 * fo] = jnp.abs(p2 - p4)            # |Psi_2 s|
    t = p4
    for _ in range(4):                                       # P^5 .. P^8
        t = hop(p, t)
    hcat_ref[:, 5 * fo:6 * fo] = jnp.abs(p4 - t)             # |Psi_3 s|

    h_cat = hcat_ref[...]                                    # (T, 6*fo), f32

    # --- attention: one fused matmul for all 6 channels ---
    e = e_h + jnp.dot(_lrelu(h_cat), a_rbd_ref[...], preferred_element_type=f32)
    e_max = jnp.max(e, axis=-1, keepdims=True)
    ex = jnp.exp(e - e_max)
    denom = jnp.sum(ex, axis=-1, keepdims=True)
    inv = pl.reciprocal(denom, approx=True)      # EUP slot (cheap)
    inv = inv * (2.0 - denom * inv)              # one Newton step -> ~fp32 accurate
    att = ex * inv                               # (T, 6)

    # --- torch  stack(hs,2).view(N,6,-1)  + attention-weighted mean, folded
    #     into host-built 0/1 matrices; result written as ONE lane-dense
    #     (T, OUT_PAD) slab: cols [0:fo) = h_prime, cols [fo:fo+6) = att, rest 0.
    w_cat = jnp.dot(att, g_ref[...], preferred_element_type=f32)            # (T, 6*fo)
    out_ref[...] = (jnp.dot(h_cat * w_cat, s_pad_ref[...],
                            preferred_element_type=f32) * (1.0 / NUM_CH)
                    + jnp.dot(att, e_pad_ref[...], preferred_element_type=f32))


def _build_operators(adj_p):
    """A_hat and P on the (packed, padded) adjacency; plain XLA, reusable."""
    n = adj_p.shape[-1]
    eye = jnp.eye(n, dtype=jnp.float32)
    a_t = adj_p + eye
    d = jnp.sum(a_t, axis=-1)
    sq = jnp.sqrt(d)
    a_hat = a_t / sq[..., :, None] / sq[..., None, :]
    deg = jnp.sum(adj_p, axis=-2)                    # column degrees
    dinv = jnp.where(deg > 0, 1.0 / deg, 0.0)
    p = 0.5 * (eye + adj_p * dinv[..., None, :])
    return a_hat.astype(jnp.float32), p.astype(jnp.float32)


def _vmem_capacity_bytes():
    try:
        return int(pltpu.get_tpu_info().vmem_capacity_bytes)
    except Exception:
        return 64 * 2 ** 20          # v7x (smallest current VMEM) as safe default


def scatter_attention_forward(x, adj, w_mlp, a_weight, *, mxu_dtype=jnp.bfloat16):
    """x: (B,N,F_in) or (N,F_in); adj: (B,N,N) or (N,N);
    w_mlp: (F_out,F_in); a_weight: (1, 2*F_out).
    mxu_dtype: dtype of A_hat/P and of the diffusion-hop MXU inputs
    (jnp.bfloat16 = fast path, jnp.float32 = exact torch semantics)."""
    x = jnp.asarray(x, jnp.float32)
    adj = jnp.asarray(adj, jnp.float32)
    squeeze = (x.ndim == 2)
    if squeeze:
        x, adj = x[None], adj[None]
    b, n, f_in = x.shape
    f_out = w_mlp.shape[0]
    out_pad = _round_up(f_out + NUM_CH, 128)         # lane-dense output width

    # --- pack small graphs block-diagonally into 128-row tiles (exact) ---
    gpt = 1 if n >= 128 else max(1, 128 // n)        # graphs per tile
    tile_rows = _round_up(gpt * n, 128)
    num_tiles = -(-b // gpt)
    b_pad = num_tiles * gpt

    x_b = jnp.zeros((b_pad, n, f_in), jnp.float32).at[:b].set(x)
    adj_b = jnp.zeros((b_pad, n, n), jnp.float32).at[:b].set(adj)

    x_p = jnp.zeros((num_tiles, tile_rows, f_in), jnp.float32)
    x_p = x_p.at[:, :gpt * n, :].set(x_b.reshape(num_tiles, gpt * n, f_in))
    eye_g = jnp.eye(gpt, dtype=jnp.float32)
    adj_bd = jnp.einsum("tgij,gh->tgihj",
                        adj_b.reshape(num_tiles, gpt, n, n),
                        eye_g).reshape(num_tiles, gpt * n, gpt * n)
    adj_p = jnp.zeros((num_tiles, tile_rows, tile_rows), jnp.float32)
    adj_p = adj_p.at[:, :gpt * n, :gpt * n].set(adj_bd)

    a_hat, p_op = _build_operators(adj_p)
    a_hat = a_hat.astype(mxu_dtype)                  # halves operator DMA/VMEM in bf16
    p_op = p_op.astype(mxu_dtype)

    # --- host-built parameter / selection matrices ---
    a_w = np.asarray(a_weight, np.float32)
    a_left = jnp.asarray(a_w[0, :f_out].reshape(f_out, 1))
    a_rbd_np = np.zeros((NUM_CH * f_out, NUM_CH), np.float32)   # blockdiag(a_right)
    for r in range(NUM_CH):
        a_rbd_np[r * f_out:(r + 1) * f_out, r] = a_w[0, f_out:]
    # G / S_pad encode torch's stack(hs, 2).view(N, 6, F_out) interleave:
    # flat index m = q*6 + r maps to (channel, feature) = (m//F_out, m%F_out).
    # E_pad drops the attention weights into cols [f_out : f_out+6) of the slab.
    g_np = np.zeros((NUM_CH, NUM_CH * f_out), np.float32)
    s_np = np.zeros((NUM_CH * f_out, out_pad), np.float32)
    for r in range(NUM_CH):
        for q in range(f_out):
            m = q * NUM_CH + r
            g_np[m // f_out, r * f_out + q] = 1.0
            s_np[r * f_out + q, m % f_out] = 1.0
    e_np = np.zeros((NUM_CH, out_pad), np.float32)
    for r in range(NUM_CH):
        e_np[r, f_out + r] = 1.0
    a_rbd, g_mat = jnp.asarray(a_rbd_np), jnp.asarray(g_np)
    s_pad, e_pad = jnp.asarray(s_np), jnp.asarray(e_np)
    w_t = jnp.asarray(w_mlp, jnp.float32).T                     # (f_in, f_out)

    # --- VMEM budgeting: only grid-blocked operands get the 2x buffer factor ---
    op_bytes = jnp.dtype(mxu_dtype).itemsize
    param_bytes = 4 * (f_in * f_out + f_out + NUM_CH * f_out * NUM_CH
                       + NUM_CH * NUM_CH * f_out + NUM_CH * f_out * out_pad
                       + NUM_CH * out_pad)

    def footprint(op_bufs):
        return (2 * op_bufs * tile_rows * tile_rows * op_bytes    # A_hat, P
                + 2 * tile_rows * f_in * 4                        # x (2 bufs)
                + 2 * tile_rows * out_pad * 4                     # output (2 bufs)
                + tile_rows * NUM_CH * f_out * 4                  # h_cat scratch (1x)
                + param_bytes)                                    # constant-index (1x)

    vmem_cap = _vmem_capacity_bytes()
    budget = vmem_cap - 8 * 2 ** 20
    single_buffer_ops = footprint(2) > budget        # Buffered(1) only when needed
    need = footprint(1 if single_buffer_ops else 2)
    # TODO(synk): if `need` still exceeds the budget, switch to an HBM-streaming
    # emit_pipeline variant (row-slabs of A_hat/P per hop) instead of failing.
    vmem_limit = int(min(vmem_cap - 4 * 2 ** 20,
                         max(32 * 2 ** 20, need + 8 * 2 ** 20)))
    op_kwargs = {"pipeline_mode": pl.Buffered(1)} if single_buffer_ops else {}

    flops = num_tiles * (
        2 * tile_rows * f_in * f_out
        + 11 * 2 * tile_rows * tile_rows * f_out          # 3 A_hat + 8 P hops
        + 2 * tile_rows * f_out                            # e_h
        + 2 * tile_rows * (NUM_CH * f_out) * NUM_CH        # fused attention matmul
        + 2 * tile_rows * NUM_CH * (NUM_CH * f_out)        # att @ G
        + 2 * tile_rows * (NUM_CH * f_out) * out_pad       # combine @ S_pad
        + 2 * tile_rows * NUM_CH * out_pad)                # att @ E_pad
    bytes_accessed = int(
        sum(int(v.size) * v.dtype.itemsize
            for v in (a_hat, p_op, x_p, w_t, a_left, a_rbd, g_mat, s_pad, e_pad))
        + num_tiles * tile_rows * out_pad * 4)

    out = pl.pallas_call(
        _sct_attention_kernel,
        out_shape=jax.ShapeDtypeStruct((num_tiles, tile_rows, out_pad), jnp.float32),
        grid=(num_tiles,),
        in_specs=[
            pl.BlockSpec((None, tile_rows, tile_rows), lambda i: (i, 0, 0), **op_kwargs),
            pl.BlockSpec((None, tile_rows, tile_rows), lambda i: (i, 0, 0), **op_kwargs),
            pl.BlockSpec((None, tile_rows, f_in), lambda i: (i, 0, 0)),
            pl.BlockSpec((f_in, f_out), lambda i: (0, 0)),              # mlp.weight^T
            pl.BlockSpec((f_out, 1), lambda i: (0, 0)),                 # a_left
            pl.BlockSpec((NUM_CH * f_out, NUM_CH), lambda i: (0, 0)),   # blockdiag a_right
            pl.BlockSpec((NUM_CH, NUM_CH * f_out), lambda i: (0, 0)),   # G
            pl.BlockSpec((NUM_CH * f_out, out_pad), lambda i: (0, 0)),  # S_pad
            pl.BlockSpec((NUM_CH, out_pad), lambda i: (0, 0)),          # E_pad
        ],
        out_specs=pl.BlockSpec((None, tile_rows, out_pad), lambda i: (i, 0, 0)),
        scratch_shapes=[pltpu.VMEM((tile_rows, NUM_CH * f_out), jnp.float32)],
        compiler_params=pltpu.CompilerParams(
            dimension_semantics=("parallel",),     # tiles shard across v7x's 2 TCs
            vmem_limit_bytes=vmem_limit),
        cost_estimate=pl.CostEstimate(flops=flops,
                                      transcendentals=num_tiles * tile_rows * (NUM_CH + 1),
                                      bytes_accessed=bytes_accessed),
    )(a_hat, p_op, x_p, w_t, a_left, a_rbd, g_mat, s_pad, e_pad)

    out = out[:, :gpt * n, :].reshape(b_pad, n, out_pad)[:b]
    h_prime = out[..., :f_out]
    att = out[..., f_out:f_out + NUM_CH][..., None]      # torch returns (N, 6, 1)
    if squeeze:
        return h_prime[0], att[0]
    return h_prime, att


def reference_forward(x, adj, w_mlp, a_weight, alpha=ALPHA):
    """Pure-JAX mirror of the PyTorch forward (single graph, same diffusion defs)."""
    n = x.shape[0]
    eye = jnp.eye(n, dtype=jnp.float32)
    a_t = adj + eye
    d = jnp.sum(a_t, axis=1)
    a_hat = a_t / jnp.sqrt(d)[:, None] / jnp.sqrt(d)[None, :]
    deg = jnp.sum(adj, axis=0)
    dinv = jnp.where(deg > 0, 1.0 / deg, 0.0)
    p = 0.5 * (eye + adj * dinv[None, :])

    s = x @ w_mlp.T
    h_a = a_hat @ s
    h_a2 = a_hat @ h_a
    h_a3 = a_hat @ h_a2
    pw, pows = s, {}
    for k in range(1, 9):
        pw = p @ pw
        pows[k] = pw
    h_s1 = jnp.abs(pows[1] - pows[2])
    h_s2 = jnp.abs(pows[2] - pows[4])
    h_s3 = jnp.abs(pows[4] - pows[8])
    hs = [h_a, h_a2, h_a3, h_s1, h_s2, h_s3]

    a_input = jnp.stack([jnp.concatenate([s, h], axis=1) for h in hs], axis=1)
    lrelu = lambda v: jnp.where(v > 0, v, alpha * v)
    e = lrelu(a_input) @ a_weight[0]                        # (N, 6)
    att = jax.nn.softmax(e, axis=1)
    h_all = jnp.stack(hs, axis=2).reshape(n, NUM_CH, -1)    # exact torch .view semantics
    h_prime = jnp.mean(att[:, :, None] * h_all, axis=1)
    return h_prime, att[:, :, None]


if __name__ == "__main__":
    key = jax.random.PRNGKey(0)
    k1, k2, k3, k4 = jax.random.split(key, 4)
    B, N, F_IN, F_OUT = 2, 16, 8, 32

    x = jax.random.normal(k1, (B, N, F_IN), jnp.float32)
    u = (jax.random.uniform(k2, (B, N, N)) < 0.35).astype(jnp.float32)
    upper = (jnp.arange(N)[None, :] > jnp.arange(N)[:, None]).astype(jnp.float32)
    adj = u * upper
    adj = adj + jnp.swapaxes(adj, -1, -2)                  # symmetric, no self-loops

    # Deterministic synthetic parameters (nn.Linear weight shapes).
    w_mlp = 0.1 * jax.random.normal(k3, (F_OUT, F_IN), jnp.float32)     # mlp.weight
    a_w = 0.1 * jax.random.normal(k4, (1, 2 * F_OUT), jnp.float32)      # a.weight

    # Exact fp32 path (matches the torch forward to 1e-4).
    h32, att32 = scatter_attention_forward(x, adj, w_mlp, a_w, mxu_dtype=jnp.float32)
    # Fast bf16-operator path (the performance default).
    hbf, attbf = scatter_attention_forward(x, adj, w_mlp, a_w, mxu_dtype=jnp.bfloat16)
    jax.block_until_ready((h32, att32, hbf, attbf))

    assert h32.shape == (B, N, F_OUT) and att32.shape == (B, N, NUM_CH, 1)
    assert hbf.shape == (B, N, F_OUT) and attbf.shape == (B, N, NUM_CH, 1)

    for g in range(B):
        h_exp, att_exp = reference_forward(x[g], adj[g], w_mlp, a_w)
        assert jnp.allclose(h32[g], h_exp, rtol=1e-4, atol=1e-4)
        assert jnp.allclose(att32[g], att_exp, rtol=1e-4, atol=1e-4)
        # bf16 hop inputs with fp32 accumulation: re-validated at loose tolerance.
        assert jnp.allclose(hbf[g], h_exp, rtol=3e-2, atol=3e-2)
        assert jnp.allclose(attbf[g], att_exp, rtol=3e-2, atol=3e-2)
    print("KERNEL_OK")
</pallas_src>

<mosaic_0001>
module attributes {stable_mosaic.version = 11 : i64} {
  func.func @_sct_attention_kernel(%arg0: i32, %arg1: memref<1x128x128xf32, #tpu.memory_space<vmem>>, %arg2: memref<1x128x128xf32, #tpu.memory_space<vmem>>, %arg3: memref<1x128x8xf32, #tpu.memory_space<vmem>>, %arg4: memref<8x32xf32, #tpu.memory_space<vmem>>, %arg5: memref<32x1xf32, #tpu.memory_space<vmem>>, %arg6: memref<192x6xf32, #tpu.memory_space<vmem>>, %arg7: memref<6x192xf32, #tpu.memory_space<vmem>>, %arg8: memref<192x128xf32, #tpu.memory_space<vmem>>, %arg9: memref<6x128xf32, #tpu.memory_space<vmem>>, %arg10: memref<1x128x128xf32, #tpu.memory_space<vmem>>, %arg11: memref<128x192xf32, #tpu.memory_space<vmem>>) attributes {dimension_semantics = [#tpu.dimension_semantics<parallel>], iteration_bounds = array<i64: 1>, scalar_prefetch = 0 : i64, scratch_operands = 1 : i64, tpu.core_type = #tpu.core_type<tc>, window_params = [{transform_indices = @transform_0, window_bounds = array<i64: 1, 128, 128>}, {transform_indices = @transform_1, window_bounds = array<i64: 1, 128, 128>}, {transform_indices = @transform_2, window_bounds = array<i64: 1, 128, 8>}, {pipeline_mode = #tpu.pipeline_mode<synchronous>, transform_indices = @transform_3, window_bounds = array<i64: 8, 32>}, {pipeline_mode = #tpu.pipeline_mode<synchronous>, transform_indices = @transform_4, window_bounds = array<i64: 32, 1>}, {pipeline_mode = #tpu.pipeline_mode<synchronous>, transform_indices = @transform_5, window_bounds = array<i64: 192, 6>}, {pipeline_mode = #tpu.pipeline_mode<synchronous>, transform_indices = @transform_6, window_bounds = array<i64: 6, 192>}, {pipeline_mode = #tpu.pipeline_mode<synchronous>, transform_indices = @transform_7, window_bounds = array<i64: 192, 128>}, {pipeline_mode = #tpu.pipeline_mode<synchronous>, transform_indices = @transform_8, window_bounds = array<i64: 6, 128>}, {transform_indices = @transform_9, window_bounds = array<i64: 1, 128, 128>}]} {
    %c0 = arith.constant 0 : index
    %c0_0 = arith.constant 0 : index
    %c0_1 = arith.constant 0 : index
    %0 = vector.load %arg1[%c0, %c0_0, %c0_1] : memref<1x128x128xf32, #tpu.memory_space<vmem>>, vector<1x128x128xf32>
    %1 = vector.shape_cast %0 : vector<1x128x128xf32> to vector<128x128xf32>
    %c0_2 = arith.constant 0 : index
    %c0_3 = arith.constant 0 : index
    %c0_4 = arith.constant 0 : index
    %2 = vector.load %arg2[%c0_2, %c0_3, %c0_4] : memref<1x128x128xf32, #tpu.memory_space<vmem>>, vector<1x128x128xf32>
    %3 = vector.shape_cast %2 : vector<1x128x128xf32> to vector<128x128xf32>
    %c0_5 = arith.constant 0 : index
    %c0_6 = arith.constant 0 : index
    %c0_7 = arith.constant 0 : index
    %4 = vector.load %arg3[%c0_5, %c0_6, %c0_7] : memref<1x128x8xf32, #tpu.memory_space<vmem>>, vector<1x128x8xf32>
    %5 = vector.shape_cast %4 : vector<1x128x8xf32> to vector<128x8xf32>
    %c0_8 = arith.constant 0 : index
    %c0_9 = arith.constant 0 : index
    %6 = vector.load %arg4[%c0_8, %c0_9] : memref<8x32xf32, #tpu.memory_space<vmem>>, vector<8x32xf32>
    %cst = arith.constant dense<0.000000e+00> : vector<128x32xf32>
    %7 = tpu.matmul %5, %6, %cst {dimension_numbers = #tpu.dot_dimension_numbers<[1], [0], [0], [1], [0, 0, 1, 1], [], []>} : vector<128x8xf32>, vector<8x32xf32>, vector<128x32xf32> -> vector<128x32xf32>
    %cst_10 = arith.constant 0.000000e+00 : f32
    %8 = vector.broadcast %cst_10 : f32 to vector<128x32xf32>
    %9 = arith.cmpf ogt, %7, %8 : vector<128x32xf32>
    %cst_11 = arith.constant 1.000000e-01 : f32
    %10 = vector.broadcast %cst_11 : f32 to vector<128x32xf32>
    %11 = arith.mulf %10, %7 : vector<128x32xf32>
    %12 = arith.select %9, %7, %11 : vector<128x32xi1>, vector<128x32xf32>
    %c0_12 = arith.constant 0 : index
    %c0_13 = arith.constant 0 : index
    %13 = vector.load %arg5[%c0_12, %c0_13] : memref<32x1xf32, #tpu.memory_space<vmem>>, vector<32x1xf32>
    %cst_14 = arith.constant dense<0.000000e+00> : vector<128x1xf32>
    %14 = tpu.matmul %12, %13, %cst_14 {dimension_numbers = #tpu.dot_dimension_numbers<[1], [0], [0], [1], [0, 0, 1, 1], [], []>} : vector<128x32xf32>, vector<32x1xf32>, vector<128x1xf32> -> vector<128x1xf32>
    %cst_15 = arith.constant dense<0.000000e+00> : vector<128x32xf32>
    %15 = tpu.matmul %1, %7, %cst_15 {dimension_numbers = #tpu.dot_dimension_numbers<[1], [0], [0], [1], [0, 0, 1, 1], [], []>} : vector<128x128xf32>, vector<128x32xf32>, vector<128x32xf32> -> vector<128x32xf32>
    %c0_16 = arith.constant 0 : index
    %c0_17 = arith.constant 0 : index
    %16 = vector.load %arg11[%c0_16, %c0_17] : memref<128x192xf32, #tpu.memory_space<vmem>>, vector<128x32xf32>
    tpu.vector_store %arg11[%c0_16, %c0_17], %15 {strides = array<i32>} : memref<128x192xf32, #tpu.memory_space<vmem>>, vector<128x32xf32>,
    %cst_18 = arith.constant dense<0.000000e+00> : vector<128x32xf32>
    %17 = tpu.matmul %1, %15, %cst_18 {dimension_numbers = #tpu.dot_dimension_numbers<[1], [0], [0], [1], [0, 0, 1, 1], [], []>} : vector<128x128xf32>, vector<128x32xf32>, vector<128x32xf32> -> vector<128x32xf32>
    %c0_19 = arith.constant 0 : index
    %c32 = arith.constant 32 : index
    %18 = vector.load %arg11[%c0_19, %c32] : memref<128x192xf32, #tpu.memory_space<vmem>>, vector<128x32xf32>
    tpu.vector_store %arg11[%c0_19, %c32], %17 {strides = array<i32>} : memref<128x192xf32, #tpu.memory_space<vmem>>, vector<128x32xf32>,
    %cst_20 = arith.constant dense<0.000000e+00> : vector<128x32xf32>
    %19 = tpu.matmul %1, %17, %cst_20 {dimension_numbers = #tpu.dot_dimension_numbers<[1], [0], [0], [1], [0, 0, 1, 1], [], []>} : vector<128x128xf32>, vector<128x32xf32>, vector<128x32xf32> -> vector<128x32xf32>
    %c0_21 = arith.constant 0 : index
    %c64 = arith.constant 64 : index
    %20 = vector.load %arg11[%c0_21, %c64] : memref<128x192xf32, #tpu.memory_space<vmem>>, vector<128x32xf32>
    tpu.vector_store %arg11[%c0_21, %c64], %19 {strides = array<i32>} : memref<128x192xf32, #tpu.memory_space<vmem>>, vector<128x32xf32>,
    %cst_22 = arith.constant dense<0.000000e+00> : vector<128x32xf32>
    %21 = tpu.matmul %3, %7, %cst_22 {dimension_numbers = #tpu.dot_dimension_numbers<[1], [0], [0], [1], [0, 0, 1, 1], [], []>} : vector<128x128xf32>, vector<128x32xf32>, vector<128x32xf32> -> vector<128x32xf32>
    %cst_23 = arith.constant dense<0.000000e+00> : vector<128x32xf32>
    %22 = tpu.matmul %3, %21, %cst_23 {dimension_numbers = #tpu.dot_dimension_numbers<[1], [0], [0], [1], [0, 0, 1, 1], [], []>} : vector<128x128xf32>, vector<128x32xf32>, vector<128x32xf32> -> vector<128x32xf32>
    %23 = arith.subf %21, %22 : vector<128x32xf32>
    %24 = math.absf %23 : vector<128x32xf32>
    %c0_24 = arith.constant 0 : index
    %c96 = arith.constant 96 : index
    %25 = vector.load %arg11[%c0_24, %c96] : memref<128x192xf32, #tpu.memory_space<vmem>>, vector<128x32xf32>
    tpu.vector_store %arg11[%c0_24, %c96], %24 {strides = array<i32>} : memref<128x192xf32, #tpu.memory_space<vmem>>, vector<128x32xf32>,
    %cst_25 = arith.constant dense<0.000000e+00> : vector<128x32xf32>
    %26 = tpu.matmul %3, %22, %cst_25 {dimension_numbers = #tpu.dot_dimension_numbers<[1], [0], [0], [1], [0, 0, 1, 1], [], []>} : vector<128x128xf32>, vector<128x32xf32>, vector<128x32xf32> -> vector<128x32xf32>
    %cst_26 = arith.constant dense<0.000000e+00> : vector<128x32xf32>
    %27 = tpu.matmul %3, %26, %cst_26 {dimension_numbers = #tpu.dot_dimension_numbers<[1], [0], [0], [1], [0, 0, 1, 1], [], []>} : vector<128x128xf32>, vector<128x32xf32>, vector<128x32xf32> -> vector<128x32xf32>
    %28 = arith.subf %22, %27 : vector<128x32xf32>
    %29 = math.absf %28 : vector<128x32xf32>
    %c0_27 = arith.constant 0 : index
    %c128 = arith.constant 128 : index
    %30 = vector.load %arg11[%c0_27, %c128] : memref<128x192xf32, #tpu.memory_space<vmem>>, vector<128x32xf32>
    tpu.vector_store %arg11[%c0_27, %c128], %29 {strides = array<i32>} : memref<128x192xf32, #tpu.memory_space<vmem>>, vector<128x32xf32>,
    %cst_28 = arith.constant dense<0.000000e+00> : vector<128x32xf32>
    %31 = tpu.matmul %3, %27, %cst_28 {dimension_numbers = #tpu.dot_dimension_numbers<[1], [0], [0], [1], [0, 0, 1, 1], [], []>} : vector<128x128xf32>, vector<128x32xf32>, vector<128x32xf32> -> vector<128x32xf32>
    %cst_29 = arith.constant dense<0.000000e+00> : vector<128x32xf32>
    %32 = tpu.matmul %3, %31, %cst_29 {dimension_numbers = #tpu.dot_dimension_numbers<[1], [0], [0], [1], [0, 0, 1, 1], [], []>} : vector<128x128xf32>, vector<128x32xf32>, vector<128x32xf32> -> vector<128x32xf32>
    %cst_30 = arith.constant dense<0.000000e+00> : vector<128x32xf32>
    %33 = tpu.matmul %3, %32, %cst_30 {dimension_numbers = #tpu.dot_dimension_numbers<[1], [0], [0], [1], [0, 0, 1, 1], [], []>} : vector<128x128xf32>, vector<128x32xf32>, vector<128x32xf32> -> vector<128x32xf32>
    %cst_31 = arith.constant dense<0.000000e+00> : vector<128x32xf32>
    %34 = tpu.matmul %3, %33, %cst_31 {dimension_numbers = #tpu.dot_dimension_numbers<[1], [0], [0], [1], [0, 0, 1, 1], [], []>} : vector<128x128xf32>, vector<128x32xf32>, vector<128x32xf32> -> vector<128x32xf32>
    %35 = arith.subf %27, %34 : vector<128x32xf32>
    %36 = math.absf %35 : vector<128x32xf32>
    %c0_32 = arith.constant 0 : index
    %c160 = arith.constant 160 : index
    %37 = vector.load %arg11[%c0_32, %c160] : memref<128x192xf32, #tpu.memory_space<vmem>>, vector<128x32xf32>
    tpu.vector_store %arg11[%c0_32, %c160], %36 {strides = array<i32>} : memref<128x192xf32, #tpu.memory_space<vmem>>, vector<128x32xf32>,
    %c0_33 = arith.constant 0 : index
    %c0_34 = arith.constant 0 : index
    %38 = vector.load %arg11[%c0_33, %c0_34] : memref<128x192xf32, #tpu.memory_space<vmem>>, vector<128x192xf32>
    %cst_35 = arith.constant 0.000000e+00 : f32
    %39 = vector.broadcast %cst_35 : f32 to vector<128x192xf32>
    %40 = arith.cmpf ogt, %38, %39 : vector<128x192xf32>
    %cst_36 = arith.constant 1.000000e-01 : f32
    %41 = vector.broadcast %cst_36 : f32 to vector<128x192xf32>
    %42 = arith.mulf %41, %38 : vector<128x192xf32>
    %43 = arith.select %40, %38, %42 : vector<128x192xi1>, vector<128x192xf32>
    %c0_37 = arith.constant 0 : index
    %c0_38 = arith.constant 0 : index
    %44 = vector.load %arg6[%c0_37, %c0_38] : memref<192x6xf32, #tpu.memory_space<vmem>>, vector<192x6xf32>
    %cst_39 = arith.constant dense<0.000000e+00> : vector<128x6xf32>
    %45 = tpu.matmul %43, %44, %cst_39 {dimension_numbers = #tpu.dot_dimension_numbers<[1], [0], [0], [1], [0, 0, 1, 1], [], []>} : vector<128x192xf32>, vector<192x6xf32>, vector<128x6xf32> -> vector<128x6xf32>
    %46 = vector.broadcast %14 : vector<128x1xf32> to vector<128x6xf32>
    %47 = arith.addf %46, %45 : vector<128x6xf32>
    %cst_40 = arith.constant dense<0xFF800000> : vector<128xf32>
    %48 = vector.multi_reduction <maximumf>, %47, %cst_40 [1] : vector<128x6xf32> to vector<128xf32>
    %49 = vector.shape_cast %48 : vector<128xf32> to vector<128x1xf32>
    %50 = vector.broadcast %49 : vector<128x1xf32> to vector<128x6xf32>
    %51 = arith.subf %47, %50 : vector<128x6xf32>
    %52 = math.exp %51 : vector<128x6xf32>
    %cst_41 = arith.constant dense<0.000000e+00> : vector<128xf32>
    %53 = vector.multi_reduction <add>, %52, %cst_41 [1] : vector<128x6xf32> to vector<128xf32>
    %54 = vector.shape_cast %53 : vector<128xf32> to vector<128x1xf32>
    %55 = tpu.reciprocal %54 {approx = true} : vector<128x1xf32> -> vector<128x1xf32>
    %56 = arith.mulf %54, %55 : vector<128x1xf32>
    %cst_42 = arith.constant 2.000000e+00 : f32
    %57 = vector.broadcast %cst_42 : f32 to vector<128x1xf32>
    %58 = arith.subf %57, %56 : vector<128x1xf32>
    %59 = arith.mulf %55, %58 : vector<128x1xf32>
    %60 = vector.broadcast %59 : vector<128x1xf32> to vector<128x6xf32>
    %61 = arith.mulf %52, %60 : vector<128x6xf32>
    %c0_43 = arith.constant 0 : index
    %c0_44 = arith.constant 0 : index
    %62 = vector.load %arg7[%c0_43, %c0_44] : memref<6x192xf32, #tpu.memory_space<vmem>>, vector<6x192xf32>
    %cst_45 = arith.constant dense<0.000000e+00> : vector<128x192xf32>
    %63 = tpu.matmul %61, %62, %cst_45 {dimension_numbers = #tpu.dot_dimension_numbers<[1], [0], [0], [1], [0, 0, 1, 1], [], []>} : vector<128x6xf32>, vector<6x192xf32>, vector<128x192xf32> -> vector<128x192xf32>
    %64 = arith.mulf %38, %63 : vector<128x192xf32>
    %c0_46 = arith.constant 0 : index
    %c0_47 = arith.constant 0 : index
    %65 = vector.load %arg8[%c0_46, %c0_47] : memref<192x128xf32, #tpu.memory_space<vmem>>, vector<192x128xf32>
    %cst_48 = arith.constant dense<0.000000e+00> : vector<128x128xf32>
    %66 = tpu.matmul %64, %65, %cst_48 {dimension_numbers = #tpu.dot_dimension_numbers<[1], [0], [0], [1], [0, 0, 1, 1], [], []>} : vector<128x192xf32>, vector<192x128xf32>, vector<128x128xf32> -> vector<128x128xf32>
    %cst_49 = arith.constant 0.166666672 : f32
    %67 = vector.broadcast %cst_49 : f32 to vector<128x128xf32>
    %68 = arith.mulf %66, %67 : vector<128x128xf32>
    %c0_50 = arith.constant 0 : index
    %c0_51 = arith.constant 0 : index
    %69 = vector.load %arg9[%c0_50, %c0_51] : memref<6x128xf32, #tpu.memory_space<vmem>>, vector<6x128xf32>
    %cst_52 = arith.constant dense<0.000000e+00> : vector<128x128xf32>
    %70 = tpu.matmul %61, %69, %cst_52 {dimension_numbers = #tpu.dot_dimension_numbers<[1], [0], [0], [1], [0, 0, 1, 1], [], []>} : vector<128x6xf32>, vector<6x128xf32>, vector<128x128xf32> -> vector<128x128xf32>
    %71 = arith.addf %68, %70 : vector<128x128xf32>
    %c0_53 = arith.constant 0 : index
    %c0_54 = arith.constant 0 : index
    %c0_55 = arith.constant 0 : index
    %72 = vector.load %arg10[%c0_53, %c0_54, %c0_55] : memref<1x128x128xf32, #tpu.memory_space<vmem>>, vector<1x128x128xf32>
    %73 = vector.shape_cast %72 : vector<1x128x128xf32> to vector<128x128xf32>
    %74 = vector.shape_cast %71 : vector<128x128xf32> to vector<1x128x128xf32>
    tpu.vector_store %arg10[%c0_53, %c0_54, %c0_55], %74 {strides = array<i32>} : memref<1x128x128xf32, #tpu.memory_space<vmem>>, vector<1x128x128xf32>,
    return
  }
  func.func @transform_0(%arg0: i32) -> (i32, i32, i32) {
    %c0_i32 = arith.constant 0 : i32
    %c0_i32_0 = arith.constant 0 : i32
    %c0_i32_1 = arith.constant 0 : i32
    return %arg0, %c0_i32, %c0_i32_0 : i32, i32, i32
  }
  func.func @transform_1(%arg0: i32) -> (i32, i32, i32) {
    %c0_i32 = arith.constant 0 : i32
    %c0_i32_0 = arith.constant 0 : i32
    %c0_i32_1 = arith.constant 0 : i32
    return %arg0, %c0_i32, %c0_i32_0 : i32, i32, i32
  }
  func.func @transform_2(%arg0: i32) -> (i32, i32, i32) {
    %c0_i32 = arith.constant 0 : i32
    %c0_i32_0 = arith.constant 0 : i32
    %c0_i32_1 = arith.constant 0 : i32
    return %arg0, %c0_i32, %c0_i32_0 : i32, i32, i32
  }
  func.func @transform_3(%arg0: i32) -> (i32, i32) {
    %c0_i32 = arith.constant 0 : i32
    %c0_i32_0 = arith.constant 0 : i32
    %c0_i32_1 = arith.constant 0 : i32
    return %c0_i32, %c0_i32_0 : i32, i32
  }
  func.func @transform_4(%arg0: i32) -> (i32, i32) {
    %c0_i32 = arith.constant 0 : i32
    %c0_i32_0 = arith.constant 0 : i32
    %c0_i32_1 = arith.constant 0 : i32
    return %c0_i32, %c0_i32_0 : i32, i32
  }
  func.func @transform_5(%arg0: i32) -> (i32, i32) {
    %c0_i32 = arith.constant 0 : i32
    %c0_i32_0 = arith.constant 0 : i32
    %c0_i32_1 = arith.constant 0 : i32
    return %c0_i32, %c0_i32_0 : i32, i32
  }
  func.func @transform_6(%arg0: i32) -> (i32, i32) {
    %c0_i32 = arith.constant 0 : i32
    %c0_i32_0 = arith.constant 0 : i32
    %c0_i32_1 = arith.constant 0 : i32
    return %c0_i32, %c0_i32_0 : i32, i32
  }
  func.func @transform_7(%arg0: i32) -> (i32, i32) {
    %c0_i32 = arith.constant 0 : i32
    %c0_i32_0 = arith.constant 0 : i32
    %c0_i32_1 = arith.constant 0 : i32
    return %c0_i32, %c0_i32_0 : i32, i32
  }
  func.func @transform_8(%arg0: i32) -> (i32, i32) {
    %c0_i32 = arith.constant 0 : i32
    %c0_i32_0 = arith.constant 0 : i32
    %c0_i32_1 = arith.constant 0 : i32
    return %c0_i32, %c0_i32_0 : i32, i32
  }
  func.func @transform_9(%arg0: i32) -> (i32, i32, i32) {
    %c0_i32 = arith.constant 0 : i32
    %c0_i32_0 = arith.constant 0 : i32
    %c0_i32_1 = arith.constant 0 : i32
    return %arg0, %c0_i32, %c0_i32_0 : i32, i32, i32
  }
}

</mosaic_0001>

<llo_original>
// kernel: tpu_custom_call.1
$region0: #{tpu_custom_call.1}
  #allocation0 [shape = 'u32[]', space=smem, size = 0x4, offset = 0x4, fixed_abs, tag = 'smem constant byte address 0x4 - core index']
  #allocation1 [shape = 'u32[144,128]{1,0:T(1,128)}', space=vmem, size = 0x12000, scoped, tag = 'internal scratch']
  #allocation2 [shape = 'f32[128,192]{1,0:T(8,128)}', space=vmem, size = 0x20000, scoped, tag = 'scratch operand']
  %s0 = inlined_call_operand.vmem [shape: f32[1,128,128], index: 0, kind: input, shape index: {}]
  %s1 = inlined_call_operand.hbm [shape: f32[1,128,128], index: 1, kind: input, shape index: {}]
  %s2 = inlined_call_operand.vmem [shape: f32[1,128,8], index: 2, kind: input, shape index: {}]
  %s3 = inlined_call_operand.vmem [shape: f32[8,32], index: 3, kind: input, shape index: {}]
  %s4 = inlined_call_operand.vmem [shape: f32[32,1], index: 4, kind: input, shape index: {}]
  %s5 = inlined_call_operand.vmem [shape: f32[192,6], index: 5, kind: input, shape index: {}]
  %s6 = inlined_call_operand.vmem [shape: f32[6,192], index: 6, kind: input, shape index: {}]
  %s7 = inlined_call_operand.vmem [shape: f32[192,128], index: 7, kind: input, shape index: {}]
  %s8 = inlined_call_operand.vmem [shape: f32[6,128], index: 8, kind: input, shape index: {}]
  %s9 = inlined_call_operand.hbm [shape: f32[1,128,128], index: 9, kind: output, shape index: {}]
  %s10 = sld [smem:[#allocation0]]
  $region50: #{tpu_custom_call.1} parent=0
    _
  %s12 = ssub.s32 1, %s10
  %s13 = scalar_select 0, %s12, %s10
  $region1: #{tpu_custom_call.1} parent=0
    #allocation3 [shape = 'u8[65536]{0}', space=vmem, size = 0x10000, scoped, tag = 'input window, operand 1, single buffered']
    #allocation4 [shape = 's32[1]{0}', space=sflag, size = 0x4, scoped, tag = 'scoped memory for tpu_custom_call.1']
    #allocation5 [shape = 's32[1]{0}', space=sflag, size = 0x4, scoped, tag = 'scoped memory for tpu_custom_call.1']
    #allocation6 [shape = 'u8[65536]{0}', space=vmem, size = 0x10000, scoped, tag = 'output window, operand 0, single buffered']
    %14 = vsyncpa [#allocation4], 0
    %15 = vsyncpa [#allocation5], 0
    // Predicated region
    $region2: #{tpu_custom_call.1} parent=1 // pred_check
      _
    $region3: #{tpu_custom_call.1} parent=1 // pred_check_branch
      %17 = sbr.rel (0) target = $region5
    $region4: #{tpu_custom_call.1} parent=1 // pred_region
      _
    $region5: #{tpu_custom_call.1} parent=1 // pred_fallthru
      _
    // Predicated region
    $region6: #{tpu_custom_call.1} parent=1 // pred_check
      _
    $region7: #{tpu_custom_call.1} parent=1 // pred_check_branch
      %19 = sbr.rel (0) target = $region9
    $region8: #{tpu_custom_call.1} parent=1 // pred_region
      %s21 = ssub.s32 2048, 2048
      %22 = vsyncadd [#allocation4], %s21
      %s23 = sshll.u32 [#allocation3], 4
      %s24 = int_to_ptr.vmem [resolvable:$true] %s23
      %29 = dma.hbm_to_vmem [thread:$0]  %s1, 2048, %s24, [#allocation4], 128, 128, 8
    $region9: #{tpu_custom_call.1} parent=1 // pred_fallthru
      _
    // Predicated region
    $region10: #{tpu_custom_call.1} parent=1 // pred_check
      _
    $region11: #{tpu_custom_call.1} parent=1 // pred_check_branch
      %31 = sbr.rel (0) target = $region13
    $region12: #{tpu_custom_call.1} parent=1 // pred_region
      _
    $region13: #{tpu_custom_call.1} parent=1 // pred_fallthru
      _
    // Predicated region
    $region14: #{tpu_custom_call.1} parent=1 // pred_check
      _
    $region15: #{tpu_custom_call.1} parent=1 // pred_check_branch
      %33 = sbr.rel (0) target = $region17
    $region16: #{tpu_custom_call.1} parent=1 // pred_region
      _
    $region17: #{tpu_custom_call.1} parent=1 // pred_fallthru
      _
    // Predicated region
    $region18: #{tpu_custom_call.1} parent=1 // pred_check
      _
    $region19: #{tpu_custom_call.1} parent=1 // pred_check_branch
      %35 = sbr.rel (0) target = $region21
    $region20: #{tpu_custom_call.1} parent=1 // pred_region
      _
    $region21: #{tpu_custom_call.1} parent=1 // pred_fallthru
      _
    // Predicated region
    $region22: #{tpu_custom_call.1} parent=1 // pred_check
      _
    $region23: #{tpu_custom_call.1} parent=1 // pred_check_branch
      %37 = sbr.rel (0) target = $region25
    $region24: #{tpu_custom_call.1} parent=1 // pred_region
      _
    $region25: #{tpu_custom_call.1} parent=1 // pred_fallthru
      _
    // Predicated region
    $region26: #{tpu_custom_call.1} parent=1 // pred_check
      _
    $region27: #{tpu_custom_call.1} parent=1 // pred_check_branch
      %39 = sbr.rel (0) target = $region29
    $region28: #{tpu_custom_call.1} parent=1 // pred_region
      _
    $region29: #{tpu_custom_call.1} parent=1 // pred_fallthru
      _
    // Predicated region
    $region30: #{tpu_custom_call.1} parent=1 // pred_check
      _
    $region31: #{tpu_custom_call.1} parent=1 // pred_check_branch
      %41 = sbr.rel (0) target = $region33
    $region32: #{tpu_custom_call.1} parent=1 // pred_region
      _
    $region33: #{tpu_custom_call.1} parent=1 // pred_fallthru
      _
    // Predicated region
    $region34: #{tpu_custom_call.1} parent=1 // pred_check
      _
    $region35: #{tpu_custom_call.1} parent=1 // pred_check_branch
      %43 = sbr.rel (0) target = $region37
    $region36: #{tpu_custom_call.1} parent=1 // pred_region
      _
    $region37: #{tpu_custom_call.1} parent=1 // pred_fallthru
      _
    // Predicated region
    $region38: #{tpu_custom_call.1} parent=1 // pred_check
      _
    $region39: #{tpu_custom_call.1} parent=1 // pred_check_branch
      %45 = sbr.rel (0) target = $region41
    $region40: #{tpu_custom_call.1} parent=1 // pred_region
      %46 = dma.done [#allocation4], 2048
    $region41: #{tpu_custom_call.1} parent=1 // pred_fallthru
      _
    %v47 = vld [vmem:[%s0] sm:$0xff]
    %v48 = vld [vmem:[%s0 + $0x8] sm:$0xff]
    %v49 = vld [vmem:[%s0 + $0x10] sm:$0xff]
    %v50 = vld [vmem:[%s0 + $0x18] sm:$0xff]
    %v51 = vld [vmem:[%s0 + $0x20] sm:$0xff]
    %v52 = vld [vmem:[%s0 + $0x28] sm:$0xff]
    %v53 = vld [vmem:[%s0 + $0x30] sm:$0xff]
    %v54 = vld [vmem:[%s0 + $0x38] sm:$0xff]
    %v55 = vld [vmem:[%s0 + $0x40] sm:$0xff]
    %v56 = vld [vmem:[%s0 + $0x48] sm:$0xff]
    %v57 = vld [vmem:[%s0 + $0x50] sm:$0xff]
    %v58 = vld [vmem:[%s0 + $0x58] sm:$0xff]
    %v59 = vld [vmem:[%s0 + $0x60] sm:$0xff]
    %v60 = vld [vmem:[%s0 + $0x68] sm:$0xff]
    %v61 = vld [vmem:[%s0 + $0x70] sm:$0xff]
    %v62 = vld [vmem:[%s0 + $0x78] sm:$0xff]
    %v63 = vld [vmem:[#allocation3] sm:$0xff]
    %v64 = vld [vmem:[#allocation3 + $0x8] sm:$0xff]
    %v65 = vld [vmem:[#allocation3 + $0x10] sm:$0xff]
    %v66 = vld [vmem:[#allocation3 + $0x18] sm:$0xff]
    %v67 = vld [vmem:[#allocation3 + $0x20] sm:$0xff]
    %v68 = vld [vmem:[#allocation3 + $0x28] sm:$0xff]
    %v69 = vld [vmem:[#allocation3 + $0x30] sm:$0xff]
    %v70 = vld [vmem:[#allocation3 + $0x38] sm:$0xff]
    %v71 = vld [vmem:[#allocation3 + $0x40] sm:$0xff]
    %v72 = vld [vmem:[#allocation3 + $0x48] sm:$0xff]
    %v73 = vld [vmem:[#allocation3 + $0x50] sm:$0xff]
    %v74 = vld [vmem:[#allocation3 + $0x58] sm:$0xff]
    %v75 = vld [vmem:[#allocation3 + $0x60] sm:$0xff]
    %v76 = vld [vmem:[#allocation3 + $0x68] sm:$0xff]
    %v77 = vld [vmem:[#allocation3 + $0x70] sm:$0xff]
    %v78 = vld [vmem:[#allocation3 + $0x78] sm:$0xff]
    %v79 = vld [vmem:[%s2] sm:$0xff]
    %v80 = vld [vmem:[%s2 + $0x8] sm:$0xff]
    %v81 = vld [vmem:[%s2 + $0x10] sm:$0xff]
    %v82 = vld [vmem:[%s2 + $0x18] sm:$0xff]
    %v83 = vld [vmem:[%s2 + $0x20] sm:$0xff]
    %v84 = vld [vmem:[%s2 + $0x28] sm:$0xff]
    %v85 = vld [vmem:[%s2 + $0x30] sm:$0xff]
    %v86 = vld [vmem:[%s2 + $0x38] sm:$0xff]
    %v87 = vld [vmem:[%s2 + $0x40] sm:$0xff]
    %v88 = vld [vmem:[%s2 + $0x48] sm:$0xff]
    %v89 = vld [vmem:[%s2 + $0x50] sm:$0xff]
    %v90 = vld [vmem:[%s2 + $0x58] sm:$0xff]
    %v91 = vld [vmem:[%s2 + $0x60] sm:$0xff]
    %v92 = vld [vmem:[%s2 + $0x68] sm:$0xff]
    %v93 = vld [vmem:[%s2 + $0x70] sm:$0xff]
    %v94 = vld [vmem:[%s2 + $0x78] sm:$0xff]
    %v95 = vld [vmem:[%s3] sm:$0xff]
    %vm96 = vcmask 64512
    %v98 = vsel %vm96, %v79, 0
    %v101 = vsel %vm96, %v80, 0
    %v104 = vsel %vm96, %v81, 0
    %v107 = vsel %vm96, %v82, 0
    %v110 = vsel %vm96, %v83, 0
    %v113 = vsel %vm96, %v84, 0
    %v116 = vsel %vm96, %v85, 0
    %v119 = vsel %vm96, %v86, 0
    %v122 = vsel %vm96, %v87, 0
    %v125 = vsel %vm96, %v88, 0
    %v128 = vsel %vm96, %v89, 0
    %v131 = vsel %vm96, %v90, 0
    %v134 = vsel %vm96, %v91, 0
    %v137 = vsel %vm96, %v92, 0
    %v140 = vsel %vm96, %v93, 0
    %v143 = vsel %vm96, %v94, 0
    %145 = vmatprep.subr.mxu0 0.0
    %146 = vmatpush1.msra.mxu0 %v95
    %147 = vmatprep.subr.mxu0 0.0
    %148 = vmatpush1.msra.mxu0 0.0
    %149 = vmatprep.subr.mxu0 0.0
    %150 = vmatpush1.msra.mxu0 0.0
    %151 = vmatprep.subr.mxu0 0.0
    %152 = vmatpush1.msra.mxu0 0.0
    %153 = vmatprep.subr.mxu0 0.0
    %154 = vmatpush1.msra.mxu0 0.0
    %155 = vmatprep.subr.mxu0 0.0
    %156 = vmatpush1.msra.mxu0 0.0
    %157 = vmatprep.subr.mxu0 0.0
    %158 = vmatpush1.msra.mxu0 0.0
    %159 = vmatprep.subr.mxu0 0.0
    %160 = vmatpush1.msra.mxu0 0.0
    %161 = vmatprep.subr.mxu0 0.0
    %162 = vmatpush1.msra.mxu0 0.0
    %163 = vmatprep.subr.mxu0 0.0
    %164 = vmatpush1.msra.mxu0 0.0
    %165 = vmatprep.subr.mxu0 0.0
    %166 = vmatpush1.msra.mxu0 0.0
    %167 = vmatprep.subr.mxu0 0.0
    %168 = vmatpush1.msra.mxu0 0.0
    %169 = vmatprep.subr.mxu0 0.0
    %170 = vmatpush1.msra.mxu0 0.0
    %171 = vmatprep.subr.mxu0 0.0
    %172 = vmatpush1.msra.mxu0 0.0
    %173 = vmatprep.subr.mxu0 0.0
    %174 = vmatpush1.msra.mxu0 0.0
    %175 = vmatprep.subr.mxu0 0.0
    %176 = vmatpush1.msra.mxu0 0.0
    %177 = vmatprep.subr.mxu0 0.0
    %178 = vmatpush1.msra.mxu0 0.0
    %179 = vmatprep.subr.mxu0 0.0
    %180 = vmatpush1.msra.mxu0 0.0
    %181 = vmatprep.subr.mxu0 0.0
    %182 = vmatpush1.msra.mxu0 0.0
    %183 = vmatprep.subr.mxu0 0.0
    %184 = vmatpush1.msra.mxu0 0.0
    %185 = vmatprep.subr.mxu0 0.0
    %186 = vmatpush1.msra.mxu0 0.0
    %187 = vmatprep.subr.mxu0 0.0
    %188 = vmatpush1.msra.mxu0 0.0
    %189 = vmatprep.subr.mxu0 0.0
    %190 = vmatpush1.msra.mxu0 0.0
    %191 = vmatprep.subr.mxu0 0.0
    %192 = vmatpush1.msra.mxu0 0.0
    %193 = vmatprep.subr.mxu0 0.0
    %194 = vmatpush1.msra.mxu0 0.0
    %195 = vmatprep.subr.mxu0 0.0
    %196 = vmatpush1.msra.mxu0 0.0
    %197 = vmatprep.subr.mxu0 0.0
    %198 = vmatpush1.msra.mxu0 0.0
    %199 = vmatprep.subr.mxu0 0.0
    %200 = vmatpush1.msra.mxu0 0.0
    %201 = vmatprep.subr.mxu0 0.0
    %202 = vmatpush1.msra.mxu0 0.0
    %203 = vmatprep.subr.mxu0 0.0
    %204 = vmatpush1.msra.mxu0 0.0
    %205 = vmatprep.subr.mxu0 0.0
    %206 = vmatpush1.msra.mxu0 0.0
    %207 = vmatprep.subr.mxu0 0.0
    %208 = vmatpush1.msra.mxu0 0.0
    %209 = vmatprep.mubr.f32.mxu0 0.0
    %210 = vmatmul.mubr.f32.gmra.mrb[0].mxu0 %v98
    %v211 = vpop.f32.mrb[0].mxu0
    %v212 = vadd.f32 0.0, %v211
    %v213 = vpop.f32.mrb[0].mxu0
    %214 = vmatprep.mubr.f32.mxu0 0.0
    %215 = vmatmul.mubr.f32.gmra.mrb[0].mxu0 %v101
    %v216 = vpop.f32.mrb[0].mxu0
    %v217 = vadd.f32 0.0, %v216
    %v218 = vpop.f32.mrb[0].mxu0
    %219 = vmatprep.mubr.f32.mxu0 0.0
    %220 = vmatmul.mubr.f32.gmra.mrb[0].mxu0 %v104
    %v221 = vpop.f32.mrb[0].mxu0
    %v222 = vadd.f32 0.0, %v221
    %v223 = vpop.f32.mrb[0].mxu0
    %224 = vmatprep.mubr.f32.mxu0 0.0
    %225 = vmatmul.mubr.f32.gmra.mrb[0].mxu0 %v107
    %v226 = vpop.f32.mrb[0].mxu0
    %v227 = vadd.f32 0.0, %v226
    %v228 = vpop.f32.mrb[0].mxu0
    %229 = vmatprep.mubr.f32.mxu0 0.0
    %230 = vmatmul.mubr.f32.gmra.mrb[0].mxu0 %v110
    %v231 = vpop.f32.mrb[0].mxu0
    %v232 = vadd.f32 0.0, %v231
    %v233 = vpop.f32.mrb[0].mxu0
    %234 = vmatprep.mubr.f32.mxu0 0.0
    %235 = vmatmul.mubr.f32.gmra.mrb[0].mxu0 %v113
    %v236 = vpop.f32.mrb[0].mxu0
    %v237 = vadd.f32 0.0, %v236
    %v238 = vpop.f32.mrb[0].mxu0
    %239 = vmatprep.mubr.f32.mxu0 0.0
    %240 = vmatmul.mubr.f32.gmra.mrb[0].mxu0 %v116
    %v241 = vpop.f32.mrb[0].mxu0
    %v242 = vadd.f32 0.0, %v241
    %v243 = vpop.f32.mrb[0].mxu0
    %244 = vmatprep.mubr.f32.mxu0 0.0
    %245 = vmatmul.mubr.f32.gmra.mrb[0].mxu0 %v119
    %v246 = vpop.f32.mrb[0].mxu0
    %v247 = vadd.f32 0.0, %v246
    %v248 = vpop.f32.mrb[0].mxu0
    %249 = vmatprep.mubr.f32.mxu0 0.0
    %250 = vmatmul.mubr.f32.gmra.mrb[0].mxu0 %v122
    %v251 = vpop.f32.mrb[0].mxu0
    %v252 = vadd.f32 0.0, %v251
    %v253 = vpop.f32.mrb[0].mxu0
    %254 = vmatprep.mubr.f32.mxu0 0.0
    %255 = vmatmul.mubr.f32.gmra.mrb[0].mxu0 %v125
    %v256 = vpop.f32.mrb[0].mxu0
    %v257 = vadd.f32 0.0, %v256
    %v258 = vpop.f32.mrb[0].mxu0
    %259 = vmatprep.mubr.f32.mxu0 0.0
    %260 = vmatmul.mubr.f32.gmra.mrb[0].mxu0 %v128
    %v261 = vpop.f32.mrb[0].mxu0
    %v262 = vadd.f32 0.0, %v261
    %v263 = vpop.f32.mrb[0].mxu0
    %264 = vmatprep.mubr.f32.mxu0 0.0
    %265 = vmatmul.mubr.f32.gmra.mrb[0].mxu0 %v131
    %v266 = vpop.f32.mrb[0].mxu0
    %v267 = vadd.f32 0.0, %v266
    %v268 = vpop.f32.mrb[0].mxu0
    %269 = vmatprep.mubr.f32.mxu0 0.0
    %270 = vmatmul.mubr.f32.gmra.mrb[0].mxu0 %v134
    %v271 = vpop.f32.mrb[0].mxu0
    %v272 = vadd.f32 0.0, %v271
    %v273 = vpop.f32.mrb[0].mxu0
    %274 = vmatprep.mubr.f32.mxu0 0.0
    %275 = vmatmul.mubr.f32.gmra.mrb[0].mxu0 %v137
    %v276 = vpop.f32.mrb[0].mxu0
    %v277 = vadd.f32 0.0, %v276
    %v278 = vpop.f32.mrb[0].mxu0
    %279 = vmatprep.mubr.f32.mxu0 0.0
    %280 = vmatmul.mubr.f32.gmra.mrb[0].mxu0 %v140
    %v281 = vpop.f32.mrb[0].mxu0
    %v282 = vadd.f32 0.0, %v281
    %v283 = vpop.f32.mrb[0].mxu0
    %284 = vmatprep.mubr.f32.mxu0 0.0
    %285 = vmatmul.mubr.f32.gmra.mrb[0].mxu0 %v143
    %v286 = vpop.f32.mrb[0].mxu0
    %v287 = vadd.f32 0.0, %v286
    %v288 = vpop.f32.mrb[0].mxu0
    %289 = vdwg.mxu0
    %vm290 = vcmp.gt.f32.partialorder %v212, 0.0
    %vm291 = vcmp.gt.f32.partialorder %v217, 0.0
    %vm292 = vcmp.gt.f32.partialorder %v222, 0.0
    %vm293 = vcmp.gt.f32.partialorder %v227, 0.0
    %vm294 = vcmp.gt.f32.partialorder %v232, 0.0
    %vm295 = vcmp.gt.f32.partialorder %v237, 0.0
    %vm296 = vcmp.gt.f32.partialorder %v242, 0.0
    %vm297 = vcmp.gt.f32.partialorder %v247, 0.0
    %vm298 = vcmp.gt.f32.partialorder %v252, 0.0
    %vm299 = vcmp.gt.f32.partialorder %v257, 0.0
    %vm300 = vcmp.gt.f32.partialorder %v262, 0.0
    %vm301 = vcmp.gt.f32.partialorder %v267, 0.0
    %vm302 = vcmp.gt.f32.partialorder %v272, 0.0
    %vm303 = vcmp.gt.f32.partialorder %v277, 0.0
    %vm304 = vcmp.gt.f32.partialorder %v282, 0.0
    %vm305 = vcmp.gt.f32.partialorder %v287, 0.0
    %v306 = vmul.f32 %v212, 0.1
    %v307 = vmul.f32 %v217, 0.1
    %v308 = vmul.f32 %v222, 0.1
    %v309 = vmul.f32 %v227, 0.1
    %v310 = vmul.f32 %v232, 0.1
    %v311 = vmul.f32 %v237, 0.1
    %v312 = vmul.f32 %v242, 0.1
    %v313 = vmul.f32 %v247, 0.1
    %v314 = vmul.f32 %v252, 0.1
    %v315 = vmul.f32 %v257, 0.1
    %v316 = vmul.f32 %v262, 0.1
    %v317 = vmul.f32 %v267, 0.1
    %v318 = vmul.f32 %v272, 0.1
    %v319 = vmul.f32 %v277, 0.1
    %v320 = vmul.f32 %v282, 0.1
    %v321 = vmul.f32 %v287, 0.1
    %v322 = vsel %vm290, %v212, %v306
    %v323 = vsel %vm291, %v217, %v307
    %v324 = vsel %vm292, %v222, %v308
    %v325 = vsel %vm293, %v227, %v309
    %v326 = vsel %vm294, %v232, %v310
    %v327 = vsel %vm295, %v237, %v311
    %v328 = vsel %vm296, %v242, %v312
    %v329 = vsel %vm297, %v247, %v313
    %v330 = vsel %vm298, %v252, %v314
    %v331 = vsel %vm299, %v257, %v315
    %v332 = vsel %vm300, %v262, %v316
    %v333 = vsel %vm301, %v267, %v317
    %v334 = vsel %vm302, %v272, %v318
    %v335 = vsel %vm303, %v277, %v319
    %v336 = vsel %vm304, %v282, %v320
    %v337 = vsel %vm305, %v287, %v321
    %v338 = vld [vmem:[%s4] sm:$0xff]
    %v339 = vld [vmem:[%s4 + $0x8] sm:$0xff]
    %v340 = vld [vmem:[%s4 + $0x10] sm:$0xff]
    %v341 = vld [vmem:[%s4 + $0x18] sm:$0xff]
    %vm342 = vcmask 261120
    %v344 = vsel %vm342, %v322, 0
    %v347 = vsel %vm342, %v323, 0
    %v350 = vsel %vm342, %v324, 0
    %v353 = vsel %vm342, %v325, 0
    %v356 = vsel %vm342, %v326, 0
    %v359 = vsel %vm342, %v327, 0
    %v362 = vsel %vm342, %v328, 0
    %v365 = vsel %vm342, %v329, 0
    %v368 = vsel %vm342, %v330, 0
    %v371 = vsel %vm342, %v331, 0
    %v374 = vsel %vm342, %v332, 0
    %v377 = vsel %vm342, %v333, 0
    %v380 = vsel %vm342, %v334, 0
    %v383 = vsel %vm342, %v335, 0
    %v386 = vsel %vm342, %v336, 0
    %v389 = vsel %vm342, %v337, 0
    %391 = vmatprep.subr.mxu0 0.0
    %392 = vmatpush1.msra.mxu0 %v338
    %393 = vmatprep.subr.mxu0 0.0
    %394 = vmatpush1.msra.mxu0 %v339
    %395 = vmatprep.subr.mxu0 0.0
    %396 = vmatpush1.msra.mxu0 %v340
    %397 = vmatprep.subr.mxu0 0.0
    %398 = vmatpush1.msra.mxu0 %v341
    %399 = vmatprep.subr.mxu0 0.0
    %400 = vmatpush1.msra.mxu0 0.0
    %401 = vmatprep.subr.mxu0 0.0
    %402 = vmatpush1.msra.mxu0 0.0
    %403 = vmatprep.subr.mxu0 0.0
    %404 = vmatpush1.msra.mxu0 0.0
    %405 = vmatprep.subr.mxu0 0.0
    %406 = vmatpush1.msra.mxu0 0.0
    %407 = vmatprep.subr.mxu0 0.0
    %408 = vmatpush1.msra.mxu0 0.0
    %409 = vmatprep.subr.mxu0 0.0
    %410 = vmatpush1.msra.mxu0 0.0
    %411 = vmatprep.subr.mxu0 0.0
    %412 = vmatpush1.msra.mxu0 0.0
    %413 = vmatprep.subr.mxu0 0.0
    %414 = vmatpush1.msra.mxu0 0.0
    %415 = vmatprep.subr.mxu0 0.0
    %416 = vmatpush1.msra.mxu0 0.0
    %417 = vmatprep.subr.mxu0 0.0
    %418 = vmatpush1.msra.mxu0 0.0
    %419 = vmatprep.subr.mxu0 0.0
    %420 = vmatpush1.msra.mxu0 0.0
    %421 = vmatprep.subr.mxu0 0.0
    %422 = vmatpush1.msra.mxu0 0.0
    %423 = vmatprep.subr.mxu0 0.0
    %424 = vmatpush1.msra.mxu0 0.0
    %425 = vmatprep.subr.mxu0 0.0
    %426 = vmatpush1.msra.mxu0 0.0
    %427 = vmatprep.subr.mxu0 0.0
    %428 = vmatpush1.msra.mxu0 0.0
    %429 = vmatprep.subr.mxu0 0.0
    %430 = vmatpush1.msra.mxu0 0.0
    %431 = vmatprep.subr.mxu0 0.0
    %432 = vmatpush1.msra.mxu0 0.0
    %433 = vmatprep.subr.mxu0 0.0
    %434 = vmatpush1.msra.mxu0 0.0
    %435 = vmatprep.subr.mxu0 0.0
    %436 = vmatpush1.msra.mxu0 0.0
    %437 = vmatprep.subr.mxu0 0.0
    %438 = vmatpush1.msra.mxu0 0.0
    %439 = vmatprep.subr.mxu0 0.0
    %440 = vmatpush1.msra.mxu0 0.0
    %441 = vmatprep.subr.mxu0 0.0
    %442 = vmatpush1.msra.mxu0 0.0
    %443 = vmatprep.subr.mxu0 0.0
    %444 = vmatpush1.msra.mxu0 0.0
    %445 = vmatprep.subr.mxu0 0.0
    %446 = vmatpush1.msra.mxu0 0.0
    %447 = vmatprep.subr.mxu0 0.0
    %448 = vmatpush1.msra.mxu0 0.0
    %449 = vmatprep.subr.mxu0 0.0
    %450 = vmatpush1.msra.mxu0 0.0
    %451 = vmatprep.subr.mxu0 0.0
    %452 = vmatpush1.msra.mxu0 0.0
    %453 = vmatprep.subr.mxu0 0.0
    %454 = vmatpush1.msra.mxu0 0.0
    %455 = vmatprep.mubr.f32.mxu0 0.0
    %456 = vmatmul.mubr.f32.gmra.mrb[0].mxu0 %v344
    %v457 = vpop.f32.mrb[0].mxu0
    %v458 = vadd.f32 0.0, %v457
    %v459 = vpop.f32.mrb[0].mxu0
    %460 = vmatprep.mubr.f32.mxu0 0.0
    %461 = vmatmul.mubr.f32.gmra.mrb[0].mxu0 %v347
    %v462 = vpop.f32.mrb[0].mxu0
    %v463 = vadd.f32 0.0, %v462
    %v464 = vpop.f32.mrb[0].mxu0
    %465 = vmatprep.mubr.f32.mxu0 0.0
    %466 = vmatmul.mubr.f32.gmra.mrb[0].mxu0 %v350
    %v467 = vpop.f32.mrb[0].mxu0
    %v468 = vadd.f32 0.0, %v467
    %v469 = vpop.f32.mrb[0].mxu0
    %470 = vmatprep.mubr.f32.mxu0 0.0
    %471 = vmatmul.mubr.f32.gmra.mrb[0].mxu0 %v353
    %v472 = vpop.f32.mrb[0].mxu0
    %v473 = vadd.f32 0.0, %v472
    %v474 = vpop.f32.mrb[0].mxu0
    %475 = vmatprep.mubr.f32.mxu0 0.0
    %476 = vmatmul.mubr.f32.gmra.mrb[0].mxu0 %v356
    %v477 = vpop.f32.mrb[0].mxu0
    %v478 = vadd.f32 0.0, %v477
    %v479 = vpop.f32.mrb[0].mxu0
    %480 = vmatprep.mubr.f32.mxu0 0.0
    %481 = vmatmul.mubr.f32.gmra.mrb[0].mxu0 %v359
    %v482 = vpop.f32.mrb[0].mxu0
    %v483 = vadd.f32 0.0, %v482
    %v484 = vpop.f32.mrb[0].mxu0
    %485 = vmatprep.mubr.f32.mxu0 0.0
    %486 = vmatmul.mubr.f32.gmra.mrb[0].mxu0 %v362
    %v487 = vpop.f32.mrb[0].mxu0
    %v488 = vadd.f32 0.0, %v487
    %v489 = vpop.f32.mrb[0].mxu0
    %490 = vmatprep.mubr.f32.mxu0 0.0
    %491 = vmatmul.mubr.f32.gmra.mrb[0].mxu0 %v365
    %v492 = vpop.f32.mrb[0].mxu0
    %v493 = vadd.f32 0.0, %v492
    %v494 = vpop.f32.mrb[0].mxu0
    %495 = vmatprep.mubr.f32.mxu0 0.0
    %496 = vmatmul.mubr.f32.gmra.mrb[0].mxu0 %v368
    %v497 = vpop.f32.mrb[0].mxu0
    %v498 = vadd.f32 0.0, %v497
    %v499 = vpop.f32.mrb[0].mxu0
    %500 = vmatprep.mubr.f32.mxu0 0.0
    %501 = vmatmul.mubr.f32.gmra.mrb[0].mxu0 %v371
    %v502 = vpop.f32.mrb[0].mxu0
    %v503 = vadd.f32 0.0, %v502
    %v504 = vpop.f32.mrb[0].mxu0
    %505 = vmatprep.mubr.f32.mxu0 0.0
    %506 = vmatmul.mubr.f32.gmra.mrb[0].mxu0 %v374
    %v507 = vpop.f32.mrb[0].mxu0
    %v508 = vadd.f32 0.0, %v507
    %v509 = vpop.f32.mrb[0].mxu0
    %510 = vmatprep.mubr.f32.mxu0 0.0
    %511 = vmatmul.mubr.f32.gmra.mrb[0].mxu0 %v377
    %v512 = vpop.f32.mrb[0].mxu0
    %v513 = vadd.f32 0.0, %v512
    %v514 = vpop.f32.mrb[0].mxu0
    %515 = vmatprep.mubr.f32.mxu0 0.0
    %516 = vmatmul.mubr.f32.gmra.mrb[0].mxu0 %v380
    %v517 = vpop.f32.mrb[0].mxu0
    %v518 = vadd.f32 0.0, %v517
    %v519 = vpop.f32.mrb[0].mxu0
    %520 = vmatprep.mubr.f32.mxu0 0.0
    %521 = vmatmul.mubr.f32.gmra.mrb[0].mxu0 %v383
    %v522 = vpop.f32.mrb[0].mxu0
    %v523 = vadd.f32 0.0, %v522
    %v524 = vpop.f32.mrb[0].mxu0
    %525 = vmatprep.mubr.f32.mxu0 0.0
    %526 = vmatmul.mubr.f32.gmra.mrb[0].mxu0 %v386
    %v527 = vpop.f32.mrb[0].mxu0
    %v528 = vadd.f32 0.0, %v527
    %v529 = vpop.f32.mrb[0].mxu0
    %530 = vmatprep.mubr.f32.mxu0 0.0
    %531 = vmatmul.mubr.f32.gmra.mrb[0].mxu0 %v389
    %v532 = vpop.f32.mrb[0].mxu0
    %v533 = vadd.f32 0.0, %v532
    %v534 = vpop.f32.mrb[0].mxu0
    %535 = vdwg.mxu0
    %536 = vmatprep.subr.mxu0 0.0
    %537 = vmatpush1.msra.mxu0 %v212
    %538 = vmatprep.subr.mxu0 0.0
    %539 = vmatpush1.msra.mxu0 %v217
    %540 = vmatprep.subr.mxu0 0.0
    %541 = vmatpush1.msra.mxu0 %v222
    %542 = vmatprep.subr.mxu0 0.0
    %543 = vmatpush1.msra.mxu0 %v227
    %544 = vmatprep.subr.mxu0 0.0
    %545 = vmatpush1.msra.mxu0 %v232
    %546 = vmatprep.subr.mxu0 0.0
    %547 = vmatpush1.msra.mxu0 %v237
    %548 = vmatprep.subr.mxu0 0.0
    %549 = vmatpush1.msra.mxu0 %v242
    %550 = vmatprep.subr.mxu0 0.0
    %551 = vmatpush1.msra.mxu0 %v247
    %552 = vmatprep.subr.mxu0 0.0
    %553 = vmatpush1.msra.mxu0 %v252
    %554 = vmatprep.subr.mxu0 0.0
    %555 = vmatpush1.msra.mxu0 %v257
    %556 = vmatprep.subr.mxu0 0.0
    %557 = vmatpush1.msra.mxu0 %v262
    %558 = vmatprep.subr.mxu0 0.0
    %559 = vmatpush1.msra.mxu0 %v267
    %560 = vmatprep.subr.mxu0 0.0
    %561 = vmatpush1.msra.mxu0 %v272
    %562 = vmatprep.subr.mxu0 0.0
    %563 = vmatpush1.msra.mxu0 %v277
    %564 = vmatprep.subr.mxu0 0.0
    %565 = vmatpush1.msra.mxu0 %v282
    %566 = vmatprep.subr.mxu0 0.0
    %567 = vmatpush1.msra.mxu0 %v287
    %568 = vmatprep.subr.mxu0 0.0
    %569 = vmatpush1.msra.mxu0 0.0
    %570 = vmatprep.subr.mxu0 0.0
    %571 = vmatpush1.msra.mxu0 0.0
    %572 = vmatprep.subr.mxu0 0.0
    %573 = vmatpush1.msra.mxu0 0.0
    %574 = vmatprep.subr.mxu0 0.0
    %575 = vmatpush1.msra.mxu0 0.0
    %576 = vmatprep.subr.mxu0 0.0
    %577 = vmatpush1.msra.mxu0 0.0
    %578 = vmatprep.subr.mxu0 0.0
    %579 = vmatpush1.msra.mxu0 0.0
    %580 = vmatprep.subr.mxu0 0.0
    %581 = vmatpush1.msra.mxu0 0.0
    %582 = vmatprep.subr.mxu0 0.0
    %583 = vmatpush1.msra.mxu0 0.0
    %584 = vmatprep.subr.mxu0 0.0
    %585 = vmatpush1.msra.mxu0 0.0
    %586 = vmatprep.subr.mxu0 0.0
    %587 = vmatpush1.msra.mxu0 0.0
    %588 = vmatprep.subr.mxu0 0.0
    %589 = vmatpush1.msra.mxu0 0.0
    %590 = vmatprep.subr.mxu0 0.0
    %591 = vmatpush1.msra.mxu0 0.0
    %592 = vmatprep.subr.mxu0 0.0
    %593 = vmatpush1.msra.mxu0 0.0
    %594 = vmatprep.subr.mxu0 0.0
    %595 = vmatpush1.msra.mxu0 0.0
    %596 = vmatprep.subr.mxu0 0.0
    %597 = vmatpush1.msra.mxu0 0.0
    %598 = vmatprep.subr.mxu0 0.0
    %599 = vmatpush1.msra.mxu0 0.0
    %600 = vmatprep.mubr.f32.mxu0 0.0
    %601 = vmatmul.mubr.f32.gmra.mrb[0].mxu0 %v47
    %v602 = vpop.f32.mrb[0].mxu0
    %v603 = vadd.f32 0.0, %v602
    %v604 = vpop.f32.mrb[0].mxu0
    %605 = vmatprep.mubr.f32.mxu0 0.0
    %606 = vmatmul.mubr.f32.gmra.mrb[0].mxu0 %v48
    %v607 = vpop.f32.mrb[0].mxu0
    %v608 = vadd.f32 0.0, %v607
    %v609 = vpop.f32.mrb[0].mxu0
    %610 = vmatprep.mubr.f32.mxu0 0.0
    %611 = vmatmul.mubr.f32.gmra.mrb[0].mxu0 %v49
    %v612 = vpop.f32.mrb[0].mxu0
    %v613 = vadd.f32 0.0, %v612
    %v614 = vpop.f32.mrb[0].mxu0
    %615 = vmatprep.mubr.f32.mxu0 0.0
    %616 = vmatmul.mubr.f32.gmra.mrb[0].mxu0 %v50
    %v617 = vpop.f32.mrb[0].mxu0
    %v618 = vadd.f32 0.0, %v617
    %v619 = vpop.f32.mrb[0].mxu0
    %620 = vmatprep.mubr.f32.mxu0 0.0
    %621 = vmatmul.mubr.f32.gmra.mrb[0].mxu0 %v51
    %v622 = vpop.f32.mrb[0].mxu0
    %v623 = vadd.f32 0.0, %v622
    %v624 = vpop.f32.mrb[0].mxu0
    %625 = vmatprep.mubr.f32.mxu0 0.0
    %626 = vmatmul.mubr.f32.gmra.mrb[0].mxu0 %v52
    %v627 = vpop.f32.mrb[0].mxu0
    %v628 = vadd.f32 0.0, %v627
    %v629 = vpop.f32.mrb[0].mxu0
    %630 = vmatprep.mubr.f32.mxu0 0.0
    %631 = vmatmul.mubr.f32.gmra.mrb[0].mxu0 %v53
    %v632 = vpop.f32.mrb[0].mxu0
    %v633 = vadd.f32 0.0, %v632
    %v634 = vpop.f32.mrb[0].mxu0
    %635 = vmatprep.mubr.f32.mxu0 0.0
    %636 = vmatmul.mubr.f32.gmra.mrb[0].mxu0 %v54
    %v637 = vpop.f32.mrb[0].mxu0
    %v638 = vadd.f32 0.0, %v637
    %v639 = vpop.f32.mrb[0].mxu0
    %640 = vmatprep.mubr.f32.mxu0 0.0
    %641 = vmatmul.mubr.f32.gmra.mrb[0].mxu0 %v55
    %v642 = vpop.f32.mrb[0].mxu0
    %v643 = vadd.f32 0.0, %v642
    %v644 = vpop.f32.mrb[0].mxu0
    %645 = vmatprep.mubr.f32.mxu0 0.0
    %646 = vmatmul.mubr.f32.gmra.mrb[0].mxu0 %v56
    %v647 = vpop.f32.mrb[0].mxu0
    %v648 = vadd.f32 0.0, %v647
    %v649 = vpop.f32.mrb[0].mxu0
    %650 = vmatprep.mubr.f32.mxu0 0.0
    %651 = vmatmul.mubr.f32.gmra.mrb[0].mxu0 %v57
    %v652 = vpop.f32.mrb[0].mxu0
    %v653 = vadd.f32 0.0, %v652
    %v654 = vpop.f32.mrb[0].mxu0
    %655 = vmatprep.mubr.f32.mxu0 0.0
    %656 = vmatmul.mubr.f32.gmra.mrb[0].mxu0 %v58
    %v657 = vpop.f32.mrb[0].mxu0
    %v658 = vadd.f32 0.0, %v657
    %v659 = vpop.f32.mrb[0].mxu0
    %660 = vmatprep.mubr.f32.mxu0 0.0
    %661 = vmatmul.mubr.f32.gmra.mrb[0].mxu0 %v59
    %v662 = vpop.f32.mrb[0].mxu0
    %v663 = vadd.f32 0.0, %v662
    %v664 = vpop.f32.mrb[0].mxu0
    %665 = vmatprep.mubr.f32.mxu0 0.0
    %666 = vmatmul.mubr.f32.gmra.mrb[0].mxu0 %v60
    %v667 = vpop.f32.mrb[0].mxu0
    %v668 = vadd.f32 0.0, %v667
    %v669 = vpop.f32.mrb[0].mxu0
    %670 = vmatprep.mubr.f32.mxu0 0.0
    %671 = vmatmul.mubr.f32.gmra.mrb[0].mxu0 %v61
    %v672 = vpop.f32.mrb[0].mxu0
    %v673 = vadd.f32 0.0, %v672
    %v674 = vpop.f32.mrb[0].mxu0
    %675 = vmatprep.mubr.f32.mxu0 0.0
    %676 = vmatmul.mubr.f32.gmra.mrb[0].mxu0 %v62
    %v677 = vpop.f32.mrb[0].mxu0
    %v678 = vadd.f32 0.0, %v677
    %v679 = vpop.f32.mrb[0].mxu0
    %680 = vdwg.mxu0
    %681 = vst.msk [vmem:[#allocation2] sm:$0xff] %vm342, %v603
    %682 = vst.msk [vmem:[#allocation2 + $0x10] sm:$0xff] %vm342, %v608
    %683 = vst.msk [vmem:[#allocation2 + $0x20] sm:$0xff] %vm342, %v613
    %684 = vst.msk [vmem:[#allocation2 + $0x30] sm:$0xff] %vm342, %v618
    %685 = vst.msk [vmem:[#allocation2 + $0x40] sm:$0xff] %vm342, %v623
    %686 = vst.msk [vmem:[#allocation2 + $0x50] sm:$0xff] %vm342, %v628
    %687 = vst.msk [vmem:[#allocation2 + $0x60] sm:$0xff] %vm342, %v633
    %688 = vst.msk [vmem:[#allocation2 + $0x70] sm:$0xff] %vm342, %v638
    %689 = vst.msk [vmem:[#allocation2 + $0x80] sm:$0xff] %vm342, %v643
    %690 = vst.msk [vmem:[#allocation2 + $0x90] sm:$0xff] %vm342, %v648
    %691 = vst.msk [vmem:[#allocation2 + $0xa0] sm:$0xff] %vm342, %v653
    %692 = vst.msk [vmem:[#allocation2 + $0xb0] sm:$0xff] %vm342, %v658
    %693 = vst.msk [vmem:[#allocation2 + $0xc0] sm:$0xff] %vm342, %v663
    %694 = vst.msk [vmem:[#allocation2 + $0xd0] sm:$0xff] %vm342, %v668
    %695 = vst.msk [vmem:[#allocation2 + $0xe0] sm:$0xff] %vm342, %v673
    %696 = vst.msk [vmem:[#allocation2 + $0xf0] sm:$0xff] %vm342, %v678
    %697 = vmatprep.subr.mxu0 0.0
    %698 = vmatpush1.msra.mxu0 %v603
    %699 = vmatprep.subr.mxu0 0.0
    %700 = vmatpush1.msra.mxu0 %v608
    %701 = vmatprep.subr.mxu0 0.0
    %702 = vmatpush1.msra.mxu0 %v613
    %703 = vmatprep.subr.mxu0 0.0
    %704 = vmatpush1.msra.mxu0 %v618
    %705 = vmatprep.subr.mxu0 0.0
    %706 = vmatpush1.msra.mxu0 %v623
    %707 = vmatprep.subr.mxu0 0.0
    %708 = vmatpush1.msra.mxu0 %v628
    %709 = vmatprep.subr.mxu0 0.0
    %710 = vmatpush1.msra.mxu0 %v633
    %711 = vmatprep.subr.mxu0 0.0
    %712 = vmatpush1.msra.mxu0 %v638
    %713 = vmatprep.subr.mxu0 0.0
    %714 = vmatpush1.msra.mxu0 %v643
    %715 = vmatprep.subr.mxu0 0.0
    %716 = vmatpush1.msra.mxu0 %v648
    %717 = vmatprep.subr.mxu0 0.0
    %718 = vmatpush1.msra.mxu0 %v653
    %719 = vmatprep.subr.mxu0 0.0
    %720 = vmatpush1.msra.mxu0 %v658
    %721 = vmatprep.subr.mxu0 0.0
    %722 = vmatpush1.msra.mxu0 %v663
    %723 = vmatprep.subr.mxu0 0.0
    %724 = vmatpush1.msra.mxu0 %v668
    %725 = vmatprep.subr.mxu0 0.0
    %726 = vmatpush1.msra.mxu0 %v673
    %727 = vmatprep.subr.mxu0 0.0
    %728 = vmatpush1.msra.mxu0 %v678
    %729 = vmatprep.subr.mxu0 0.0
    %730 = vmatpush1.msra.mxu0 0.0
    %731 = vmatprep.subr.mxu0 0.0
    %732 = vmatpush1.msra.mxu0 0.0
    %733 = vmatprep.subr.mxu0 0.0
    %734 = vmatpush1.msra.mxu0 0.0
    %735 = vmatprep.subr.mxu0 0.0
    %736 = vmatpush1.msra.mxu0 0.0
    %737 = vmatprep.subr.mxu0 0.0
    %738 = vmatpush1.msra.mxu0 0.0
    %739 = vmatprep.subr.mxu0 0.0
    %740 = vmatpush1.msra.mxu0 0.0
    %741 = vmatprep.subr.mxu0 0.0
    %742 = vmatpush1.msra.mxu0 0.0
    %743 = vmatprep.subr.mxu0 0.0
    %744 = vmatpush1.msra.mxu0 0.0
    %745 = vmatprep.subr.mxu0 0.0
    %746 = vmatpush1.msra.mxu0 0.0
    %747 = vmatprep.subr.mxu0 0.0
    %748 = vmatpush1.msra.mxu0 0.0
    %749 = vmatprep.subr.mxu0 0.0
    %750 = vmatpush1.msra.mxu0 0.0
    %751 = vmatprep.subr.mxu0 0.0
    %752 = vmatpush1.msra.mxu0 0.0
    %753 = vmatprep.subr.mxu0 0.0
    %754 = vmatpush1.msra.mxu0 0.0
    %755 = vmatprep.subr.mxu0 0.0
    %756 = vmatpush1.msra.mxu0 0.0
    %757 = vmatprep.subr.mxu0 0.0
    %758 = vmatpush1.msra.mxu0 0.0
    %759 = vmatprep.subr.mxu0 0.0
    %760 = vmatpush1.msra.mxu0 0.0
    %761 = vmatprep.mubr.f32.mxu0 0.0
    %762 = vmatmul.mubr.f32.gmra.mrb[0].mxu0 %v47
    %v763 = vpop.f32.mrb[0].mxu0
    %v764 = vadd.f32 0.0, %v763
    %v765 = vpop.f32.mrb[0].mxu0
    %766 = vmatprep.mubr.f32.mxu0 0.0
    %767 = vmatmul.mubr.f32.gmra.mrb[0].mxu0 %v48
    %v768 = vpop.f32.mrb[0].mxu0
    %v769 = vadd.f32 0.0, %v768
    %v770 = vpop.f32.mrb[0].mxu0
    %771 = vmatprep.mubr.f32.mxu0 0.0
    %772 = vmatmul.mubr.f32.gmra.mrb[0].mxu0 %v49
    %v773 = vpop.f32.mrb[0].mxu0
    %v774 = vadd.f32 0.0, %v773
    %v775 = vpop.f32.mrb[0].mxu0
    %776 = vmatprep.mubr.f32.mxu0 0.0
    %777 = vmatmul.mubr.f32.gmra.mrb[0].mxu0 %v50
    %v778 = vpop.f32.mrb[0].mxu0
    %v779 = vadd.f32 0.0, %v778
    %v780 = vpop.f32.mrb[0].mxu0
    %781 = vmatprep.mubr.f32.mxu0 0.0
    %782 = vmatmul.mubr.f32.gmra.mrb[0].mxu0 %v51
    %v783 = vpop.f32.mrb[0].mxu0
    %v784 = vadd.f32 0.0, %v783
    %v785 = vpop.f32.mrb[0].mxu0
    %786 = vmatprep.mubr.f32.mxu0 0.0
    %787 = vmatmul.mubr.f32.gmra.mrb[0].mxu0 %v52
    %v788 = vpop.f32.mrb[0].mxu0
    %v789 = vadd.f32 0.0, %v788
    %v790 = vpop.f32.mrb[0].mxu0
    %791 = vmatprep.mubr.f32.mxu0 0.0
    %792 = vmatmul.mubr.f32.gmra.mrb[0].mxu0 %v53
    %v793 = vpop.f32.mrb[0].mxu0
    %v794 = vadd.f32 0.0, %v793
    %v795 = vpop.f32.mrb[0].mxu0
    %796 = vmatprep.mubr.f32.mxu0 0.0
    %797 = vmatmul.mubr.f32.gmra.mrb[0].mxu0 %v54
    %v798 = vpop.f32.mrb[0].mxu0
    %v799 = vadd.f32 0.0, %v798
    %v800 = vpop.f32.mrb[0].mxu0
    %801 = vmatprep.mubr.f32.mxu0 0.0
    %802 = vmatmul.mubr.f32.gmra.mrb[0].mxu0 %v55
    %v803 = vpop.f32.mrb[0].mxu0
    %v804 = vadd.f32 0.0, %v803
    %v805 = vpop.f32.mrb[0].mxu0
    %806 = vmatprep.mubr.f32.mxu0 0.0
    %807 = vmatmul.mubr.f32.gmra.mrb[0].mxu0 %v56
    %v808 = vpop.f32.mrb[0].mxu0
    %v809 = vadd.f32 0.0, %v808
    %v810 = vpop.f32.mrb[0].mxu0
    %811 = vmatprep.mubr.f32.mxu0 0.0
    %812 = vmatmul.mubr.f32.gmra.mrb[0].mxu0 %v57
    %v813 = vpop.f32.mrb[0].mxu0
    %v814 = vadd.f32 0.0, %v813
    %v815 = vpop.f32.mrb[0].mxu0
    %816 = vmatprep.mubr.f32.mxu0 0.0
    %817 = vmatmul.mubr.f32.gmra.mrb[0].mxu0 %v58
    %v818 = vpop.f32.mrb[0].mxu0
    %v819 = vadd.f32 0.0, %v818
    %v820 = vpop.f32.mrb[0].mxu0
    %821 = vmatprep.mubr.f32.mxu0 0.0
    %822 = vmatmul.mubr.f32.gmra.mrb[0].mxu0 %v59
    %v823 = vpop.f32.mrb[0].mxu0
    %v824 = vadd.f32 0.0, %v823
    %v825 = vpop.f32.mrb[0].mxu0
    %826 = vmatprep.mubr.f32.mxu0 0.0
    %827 = vmatmul.mubr.f32.gmra.mrb[0].mxu0 %v60
    %v828 = vpop.f32.mrb[0].mxu0
    %v829 = vadd.f32 0.0, %v828
    %v830 = vpop.f32.mrb[0].mxu0
    %831 = vmatprep.mubr.f32.mxu0 0.0
    %832 = vmatmul.mubr.f32.gmra.mrb[0].mxu0 %v61
    %v833 = vpop.f32.mrb[0].mxu0
    %v834 = vadd.f32 0.0, %v833
    %v835 = vpop.f32.mrb[0].mxu0
    %836 = vmatprep.mubr.f32.mxu0 0.0
    %837 = vmatmul.mubr.f32.gmra.mrb[0].mxu0 %v62
    %v838 = vpop.f32.mrb[0].mxu0
    %v839 = vadd.f32 0.0, %v838
    %v840 = vpop.f32.mrb[0].mxu0
    %841 = vdwg.mxu0
    %858 = vrot.lane.b32.xlu0 %v764, 32
    %v859 = vpop.permute.xlu0 %858
    %860 = vrot.lane.b32.xlu0 %v769, 32
    %v861 = vpop.permute.xlu0 %860
    %862 = vrot.lane.b32.xlu0 %v774, 32
    %v863 = vpop.permute.xlu0 %862
    %864 = vrot.lane.b32.xlu0 %v779, 32
    %v865 = vpop.permute.xlu0 %864
    %866 = vrot.lane.b32.xlu0 %v784, 32
    %v867 = vpop.permute.xlu0 %866
    %868 = vrot.lane.b32.xlu0 %v789, 32
    %v869 = vpop.permute.xlu0 %868
    %870 = vrot.lane.b32.xlu0 %v794, 32
    %v871 = vpop.permute.xlu0 %870
    %872 = vrot.lane.b32.xlu0 %v799, 32
    %v873 = vpop.permute.xlu0 %872
    %874 = vrot.lane.b32.xlu0 %v804, 32
    %v875 = vpop.permute.xlu0 %874
    %876 = vrot.lane.b32.xlu0 %v809, 32
    %v877 = vpop.permute.xlu0 %876
    %878 = vrot.lane.b32.xlu0 %v814, 32
    %v879 = vpop.permute.xlu0 %878
    %880 = vrot.lane.b32.xlu0 %v819, 32
    %v881 = vpop.permute.xlu0 %880
    %882 = vrot.lane.b32.xlu0 %v824, 32
    %v883 = vpop.permute.xlu0 %882
    %884 = vrot.lane.b32.xlu0 %v829, 32
    %v885 = vpop.permute.xlu0 %884
    %886 = vrot.lane.b32.xlu0 %v834, 32
    %v887 = vpop.permute.xlu0 %886
    %888 = vrot.lane.b32.xlu0 %v839, 32
    %v889 = vpop.permute.xlu0 %888
    %vm906 = vcmask 523520
    %907 = vst.msk [vmem:[#allocation2] sm:$0xff] %vm906, %v859
    %908 = vst.msk [vmem:[#allocation2 + $0x10] sm:$0xff] %vm906, %v861
    %909 = vst.msk [vmem:[#allocation2 + $0x20] sm:$0xff] %vm906, %v863
    %910 = vst.msk [vmem:[#allocation2 + $0x30] sm:$0xff] %vm906, %v865
    %911 = vst.msk [vmem:[#allocation2 + $0x40] sm:$0xff] %vm906, %v867
    %912 = vst.msk [vmem:[#allocation2 + $0x50] sm:$0xff] %vm906, %v869
    %913 = vst.msk [vmem:[#allocation2 + $0x60] sm:$0xff] %vm906, %v871
    %914 = vst.msk [vmem:[#allocation2 + $0x70] sm:$0xff] %vm906, %v873
    %915 = vst.msk [vmem:[#allocation2 + $0x80] sm:$0xff] %vm906, %v875
    %916 = vst.msk [vmem:[#allocation2 + $0x90] sm:$0xff] %vm906, %v877
    %917 = vst.msk [vmem:[#allocation2 + $0xa0] sm:$0xff] %vm906, %v879
    %918 = vst.msk [vmem:[#allocation2 + $0xb0] sm:$0xff] %vm906, %v881
    %919 = vst.msk [vmem:[#allocation2 + $0xc0] sm:$0xff] %vm906, %v883
    %920 = vst.msk [vmem:[#allocation2 + $0xd0] sm:$0xff] %vm906, %v885
    %921 = vst.msk [vmem:[#allocation2 + $0xe0] sm:$0xff] %vm906, %v887
    %922 = vst.msk [vmem:[#allocation2 + $0xf0] sm:$0xff] %vm906, %v889
    %923 = vmatprep.subr.mxu0 0.0
    %924 = vmatpush1.msra.mxu0 %v764
    %925 = vmatprep.subr.mxu0 0.0
    %926 = vmatpush1.msra.mxu0 %v769
    %927 = vmatprep.subr.mxu0 0.0
    %928 = vmatpush1.msra.mxu0 %v774
    %929 = vmatprep.subr.mxu0 0.0
    %930 = vmatpush1.msra.mxu0 %v779
    %931 = vmatprep.subr.mxu0 0.0
    %932 = vmatpush1.msra.mxu0 %v784
    %933 = vmatprep.subr.mxu0 0.0
    %934 = vmatpush1.msra.mxu0 %v789
    %935 = vmatprep.subr.mxu0 0.0
    %936 = vmatpush1.msra.mxu0 %v794
    %937 = vmatprep.subr.mxu0 0.0
    %938 = vmatpush1.msra.mxu0 %v799
    %939 = vmatprep.subr.mxu0 0.0
    %940 = vmatpush1.msra.mxu0 %v804
    %941 = vmatprep.subr.mxu0 0.0
    %942 = vmatpush1.msra.mxu0 %v809
    %943 = vmatprep.subr.mxu0 0.0
    %944 = vmatpush1.msra.mxu0 %v814
    %945 = vmatprep.subr.mxu0 0.0
    %946 = vmatpush1.msra.mxu0 %v819
    %947 = vmatprep.subr.mxu0 0.0
    %948 = vmatpush1.msra.mxu0 %v824
    %949 = vmatprep.subr.mxu0 0.0
    %950 = vmatpush1.msra.mxu0 %v829
    %951 = vmatprep.subr.mxu0 0.0
    %952 = vmatpush1.msra.mxu0 %v834
    %953 = vmatprep.subr.mxu0 0.0
    %954 = vmatpush1.msra.mxu0 %v839
    %955 = vmatprep.subr.mxu0 0.0
    %956 = vmatpush1.msra.mxu0 0.0
    %957 = vmatprep.subr.mxu0 0.0
    %958 = vmatpush1.msra.mxu0 0.0
    %959 = vmatprep.subr.mxu0 0.0
    %960 = vmatpush1.msra.mxu0 0.0
    %961 = vmatprep.subr.mxu0 0.0
    %962 = vmatpush1.msra.mxu0 0.0
    %963 = vmatprep.subr.mxu0 0.0
    %964 = vmatpush1.msra.mxu0 0.0
    %965 = vmatprep.subr.mxu0 0.0
    %966 = vmatpush1.msra.mxu0 0.0
    %967 = vmatprep.subr.mxu0 0.0
    %968 = vmatpush1.msra.mxu0 0.0
    %969 = vmatprep.subr.mxu0 0.0
    %970 = vmatpush1.msra.mxu0 0.0
    %971 = vmatprep.subr.mxu0 0.0
    %972 = vmatpush1.msra.mxu0 0.0
    %973 = vmatprep.subr.mxu0 0.0
    %974 = vmatpush1.msra.mxu0 0.0
    %975 = vmatprep.subr.mxu0 0.0
    %976 = vmatpush1.msra.mxu0 0.0
    %977 = vmatprep.subr.mxu0 0.0
    %978 = vmatpush1.msra.mxu0 0.0
    %979 = vmatprep.subr.mxu0 0.0
    %980 = vmatpush1.msra.mxu0 0.0
    %981 = vmatprep.subr.mxu0 0.0
    %982 = vmatpush1.msra.mxu0 0.0
    %983 = vmatprep.subr.mxu0 0.0
    %984 = vmatpush1.msra.mxu0 0.0
    %985 = vmatprep.subr.mxu0 0.0
    %986 = vmatpush1.msra.mxu0 0.0
    %987 = vmatprep.mubr.f32.mxu0 0.0
    %988 = vmatmul.mubr.f32.gmra.mrb[0].mxu0 %v47
    %v989 = vpop.f32.mrb[0].mxu0
    %v990 = vadd.f32 0.0, %v989
    %v991 = vpop.f32.mrb[0].mxu0
    %992 = vmatprep.mubr.f32.mxu0 0.0
    %993 = vmatmul.mubr.f32.gmra.mrb[0].mxu0 %v48
    %v994 = vpop.f32.mrb[0].mxu0
    %v995 = vadd.f32 0.0, %v994
    %v996 = vpop.f32.mrb[0].mxu0
    %997 = vmatprep.mubr.f32.mxu0 0.0
    %998 = vmatmul.mubr.f32.gmra.mrb[0].mxu0 %v49
    %v999 = vpop.f32.mrb[0].mxu0
    %v1000 = vadd.f32 0.0, %v999
    %v1001 = vpop.f32.mrb[0].mxu0
    %1002 = vmatprep.mubr.f32.mxu0 0.0
    %1003 = vmatmul.mubr.f32.gmra.mrb[0].mxu0 %v50
    %v1004 = vpop.f32.mrb[0].mxu0
    %v1005 = vadd.f32 0.0, %v1004
    %v1006 = vpop.f32.mrb[0].mxu0
    %1007 = vmatprep.mubr.f32.mxu0 0.0
    %1008 = vmatmul.mubr.f32.gmra.mrb[0].mxu0 %v51
    %v1009 = vpop.f32.mrb[0].mxu0
    %v1010 = vadd.f32 0.0, %v1009
    %v1011 = vpop.f32.mrb[0].mxu0
    %1012 = vmatprep.mubr.f32.mxu0 0.0
    %1013 = vmatmul.mubr.f32.gmra.mrb[0].mxu0 %v52
    %v1014 = vpop.f32.mrb[0].mxu0
    %v1015 = vadd.f32 0.0, %v1014
    %v1016 = vpop.f32.mrb[0].mxu0
    %1017 = vmatprep.mubr.f32.mxu0 0.0
    %1018 = vmatmul.mubr.f32.gmra.mrb[0].mxu0 %v53
    %v1019 = vpop.f32.mrb[0].mxu0
    %v1020 = vadd.f32 0.0, %v1019
    %v1021 = vpop.f32.mrb[0].mxu0
    %1022 = vmatprep.mubr.f32.mxu0 0.0
    %1023 = vmatmul.mubr.f32.gmra.mrb[0].mxu0 %v54
    %v1024 = vpop.f32.mrb[0].mxu0
    %v1025 = vadd.f32 0.0, %v1024
    %v1026 = vpop.f32.mrb[0].mxu0
    %1027 = vmatprep.mubr.f32.mxu0 0.0
    %1028 = vmatmul.mubr.f32.gmra.mrb[0].mxu0 %v55
    %v1029 = vpop.f32.mrb[0].mxu0
    %v1030 = vadd.f32 0.0, %v1029
    %v1031 = vpop.f32.mrb[0].mxu0
    %1032 = vmatprep.mubr.f32.mxu0 0.0
    %1033 = vmatmul.mubr.f32.gmra.mrb[0].mxu0 %v56
    %v1034 = vpop.f32.mrb[0].mxu0
    %v1035 = vadd.f32 0.0, %v1034
    %v1036 = vpop.f32.mrb[0].mxu0
    %1037 = vmatprep.mubr.f32.mxu0 0.0
    %1038 = vmatmul.mubr.f32.gmra.mrb[0].mxu0 %v57
    %v1039 = vpop.f32.mrb[0].mxu0
    %v1040 = vadd.f32 0.0, %v1039
    %v1041 = vpop.f32.mrb[0].mxu0
    %1042 = vmatprep.mubr.f32.mxu0 0.0
    %1043 = vmatmul.mubr.f32.gmra.mrb[0].mxu0 %v58
    %v1044 = vpop.f32.mrb[0].mxu0
    %v1045 = vadd.f32 0.0, %v1044
    %v1046 = vpop.f32.mrb[0].mxu0
    %1047 = vmatprep.mubr.f32.mxu0 0.0
    %1048 = vmatmul.mubr.f32.gmra.mrb[0].mxu0 %v59
    %v1049 = vpop.f32.mrb[0].mxu0
    %v1050 = vadd.f32 0.0, %v1049
    %v1051 = vpop.f32.mrb[0].mxu0
    %1052 = vmatprep.mubr.f32.mxu0 0.0
    %1053 = vmatmul.mubr.f32.gmra.mrb[0].mxu0 %v60
    %v1054 = vpop.f32.mrb[0].mxu0
    %v1055 = vadd.f32 0.0, %v1054
    %v1056 = vpop.f32.mrb[0].mxu0
    %1057 = vmatprep.mubr.f32.mxu0 0.0
    %1058 = vmatmul.mubr.f32.gmra.mrb[0].mxu0 %v61
    %v1059 = vpop.f32.mrb[0].mxu0
    %v1060 = vadd.f32 0.0, %v1059
    %v1061 = vpop.f32.mrb[0].mxu0
    %1062 = vmatprep.mubr.f32.mxu0 0.0
    %1063 = vmatmul.mubr.f32.gmra.mrb[0].mxu0 %v62
    %v1064 = vpop.f32.mrb[0].mxu0
    %v1065 = vadd.f32 0.0, %v1064
    %v1066 = vpop.f32.mrb[0].mxu0
    %1067 = vdwg.mxu0
    %1084 = vrot.lane.b32.xlu0 %v990, 64
    %v1085 = vpop.permute.xlu0 %1084
    %1086 = vrot.lane.b32.xlu0 %v995, 64
    %v1087 = vpop.permute.xlu0 %1086
    %1088 = vrot.lane.b32.xlu0 %v1000, 64
    %v1089 = vpop.permute.xlu0 %1088
    %1090 = vrot.lane.b32.xlu0 %v1005, 64
    %v1091 = vpop.permute.xlu0 %1090
    %1092 = vrot.lane.b32.xlu0 %v1010, 64
    %v1093 = vpop.permute.xlu0 %1092
    %1094 = vrot.lane.b32.xlu0 %v1015, 64
    %v1095 = vpop.permute.xlu0 %1094
    %1096 = vrot.lane.b32.xlu0 %v1020, 64
    %v1097 = vpop.permute.xlu0 %1096
    %1098 = vrot.lane.b32.xlu0 %v1025, 64
    %v1099 = vpop.permute.xlu0 %1098
    %1100 = vrot.lane.b32.xlu0 %v1030, 64
    %v1101 = vpop.permute.xlu0 %1100
    %1102 = vrot.lane.b32.xlu0 %v1035, 64
    %v1103 = vpop.permute.xlu0 %1102
    %1104 = vrot.lane.b32.xlu0 %v1040, 64
    %v1105 = vpop.permute.xlu0 %1104
    %1106 = vrot.lane.b32.xlu0 %v1045, 64
    %v1107 = vpop.permute.xlu0 %1106
    %1108 = vrot.lane.b32.xlu0 %v1050, 64
    %v1109 = vpop.permute.xlu0 %1108
    %1110 = vrot.lane.b32.xlu0 %v1055, 64
    %v1111 = vpop.permute.xlu0 %1110
    %1112 = vrot.lane.b32.xlu0 %v1060, 64
    %v1113 = vpop.permute.xlu0 %1112
    %1114 = vrot.lane.b32.xlu0 %v1065, 64
    %v1115 = vpop.permute.xlu0 %1114
    %vm1132 = vcmask 785920
    %1133 = vst.msk [vmem:[#allocation2] sm:$0xff] %vm1132, %v1085
    %1134 = vst.msk [vmem:[#allocation2 + $0x10] sm:$0xff] %vm1132, %v1087
    %1135 = vst.msk [vmem:[#allocation2 + $0x20] sm:$0xff] %vm1132, %v1089
    %1136 = vst.msk [vmem:[#allocation2 + $0x30] sm:$0xff] %vm1132, %v1091
    %1137 = vst.msk [vmem:[#allocation2 + $0x40] sm:$0xff] %vm1132, %v1093
    %1138 = vst.msk [vmem:[#allocation2 + $0x50] sm:$0xff] %vm1132, %v1095
    %1139 = vst.msk [vmem:[#allocation2 + $0x60] sm:$0xff] %vm1132, %v1097
    %1140 = vst.msk [vmem:[#allocation2 + $0x70] sm:$0xff] %vm1132, %v1099
    %1141 = vst.msk [vmem:[#allocation2 + $0x80] sm:$0xff] %vm1132, %v1101
    %1142 = vst.msk [vmem:[#allocation2 + $0x90] sm:$0xff] %vm1132, %v1103
    %1143 = vst.msk [vmem:[#allocation2 + $0xa0] sm:$0xff] %vm1132, %v1105
    %1144 = vst.msk [vmem:[#allocation2 + $0xb0] sm:$0xff] %vm1132, %v1107
    %1145 = vst.msk [vmem:[#allocation2 + $0xc0] sm:$0xff] %vm1132, %v1109
    %1146 = vst.msk [vmem:[#allocation2 + $0xd0] sm:$0xff] %vm1132, %v1111
    %1147 = vst.msk [vmem:[#allocation2 + $0xe0] sm:$0xff] %vm1132, %v1113
    %1148 = vst.msk [vmem:[#allocation2 + $0xf0] sm:$0xff] %vm1132, %v1115
    %1149 = vmatprep.subr.mxu0 0.0
    %1150 = vmatpush1.msra.mxu0 %v212
    %1151 = vmatprep.subr.mxu0 0.0
    %1152 = vmatpush1.msra.mxu0 %v217
    %1153 = vmatprep.subr.mxu0 0.0
    %1154 = vmatpush1.msra.mxu0 %v222
    %1155 = vmatprep.subr.mxu0 0.0
    %1156 = vmatpush1.msra.mxu0 %v227
    %1157 = vmatprep.subr.mxu0 0.0
    %1158 = vmatpush1.msra.mxu0 %v232
    %1159 = vmatprep.subr.mxu0 0.0
    %1160 = vmatpush1.msra.mxu0 %v237
    %1161 = vmatprep.subr.mxu0 0.0
    %1162 = vmatpush1.msra.mxu0 %v242
    %1163 = vmatprep.subr.mxu0 0.0
    %1164 = vmatpush1.msra.mxu0 %v247
    %1165 = vmatprep.subr.mxu0 0.0
    %1166 = vmatpush1.msra.mxu0 %v252
    %1167 = vmatprep.subr.mxu0 0.0
    %1168 = vmatpush1.msra.mxu0 %v257
    %1169 = vmatprep.subr.mxu0 0.0
    %1170 = vmatpush1.msra.mxu0 %v262
    %1171 = vmatprep.subr.mxu0 0.0
    %1172 = vmatpush1.msra.mxu0 %v267
    %1173 = vmatprep.subr.mxu0 0.0
    %1174 = vmatpush1.msra.mxu0 %v272
    %1175 = vmatprep.subr.mxu0 0.0
    %1176 = vmatpush1.msra.mxu0 %v277
    %1177 = vmatprep.subr.mxu0 0.0
    %1178 = vmatpush1.msra.mxu0 %v282
    %1179 = vmatprep.subr.mxu0 0.0
    %1180 = vmatpush1.msra.mxu0 %v287
    %1181 = vmatprep.subr.mxu0 0.0
    %1182 = vmatpush1.msra.mxu0 0.0
    %1183 = vmatprep.subr.mxu0 0.0
    %1184 = vmatpush1.msra.mxu0 0.0
    %1185 = vmatprep.subr.mxu0 0.0
    %1186 = vmatpush1.msra.mxu0 0.0
    %1187 = vmatprep.subr.mxu0 0.0
    %1188 = vmatpush1.msra.mxu0 0.0
    %1189 = vmatprep.subr.mxu0 0.0
    %1190 = vmatpush1.msra.mxu0 0.0
    %1191 = vmatprep.subr.mxu0 0.0
    %1192 = vmatpush1.msra.mxu0 0.0
    %1193 = vmatprep.subr.mxu0 0.0
    %1194 = vmatpush1.msra.mxu0 0.0
    %1195 = vmatprep.subr.mxu0 0.0
    %1196 = vmatpush1.msra.mxu0 0.0
    %1197 = vmatprep.subr.mxu0 0.0
    %1198 = vmatpush1.msra.mxu0 0.0
    %1199 = vmatprep.subr.mxu0 0.0
    %1200 = vmatpush1.msra.mxu0 0.0
    %1201 = vmatprep.subr.mxu0 0.0
    %1202 = vmatpush1.msra.mxu0 0.0
    %1203 = vmatprep.subr.mxu0 0.0
    %1204 = vmatpush1.msra.mxu0 0.0
    %1205 = vmatprep.subr.mxu0 0.0
    %1206 = vmatpush1.msra.mxu0 0.0
    %1207 = vmatprep.subr.mxu0 0.0
    %1208 = vmatpush1.msra.mxu0 0.0
    %1209 = vmatprep.subr.mxu0 0.0
    %1210 = vmatpush1.msra.mxu0 0.0
    %1211 = vmatprep.subr.mxu0 0.0
    %1212 = vmatpush1.msra.mxu0 0.0
    %1213 = vmatprep.mubr.f32.mxu0 0.0
    %1214 = vmatmul.mubr.f32.gmra.mrb[0].mxu0 %v63
    %v1215 = vpop.f32.mrb[0].mxu0
    %v1216 = vadd.f32 0.0, %v1215
    %v1217 = vpop.f32.mrb[0].mxu0
    %1218 = vmatprep.mubr.f32.mxu0 0.0
    %1219 = vmatmul.mubr.f32.gmra.mrb[0].mxu0 %v64
    %v1220 = vpop.f32.mrb[0].mxu0
    %v1221 = vadd.f32 0.0, %v1220
    %v1222 = vpop.f32.mrb[0].mxu0
    %1223 = vmatprep.mubr.f32.mxu0 0.0
    %1224 = vmatmul.mubr.f32.gmra.mrb[0].mxu0 %v65
    %v1225 = vpop.f32.mrb[0].mxu0
    %v1226 = vadd.f32 0.0, %v1225
    %v1227 = vpop.f32.mrb[0].mxu0
    %1228 = vmatprep.mubr.f32.mxu0 0.0
    %1229 = vmatmul.mubr.f32.gmra.mrb[0].mxu0 %v66
    %v1230 = vpop.f32.mrb[0].mxu0
    %v1231 = vadd.f32 0.0, %v1230
    %v1232 = vpop.f32.mrb[0].mxu0
    %1233 = vmatprep.mubr.f32.mxu0 0.0
    %1234 = vmatmul.mubr.f32.gmra.mrb[0].mxu0 %v67
    %v1235 = vpop.f32.mrb[0].mxu0
    %v1236 = vadd.f32 0.0, %v1235
    %v1237 = vpop.f32.mrb[0].mxu0
    %1238 = vmatprep.mubr.f32.mxu0 0.0
    %1239 = vmatmul.mubr.f32.gmra.mrb[0].mxu0 %v68
    %v1240 = vpop.f32.mrb[0].mxu0
    %v1241 = vadd.f32 0.0, %v1240
    %v1242 = vpop.f32.mrb[0].mxu0
    %1243 = vmatprep.mubr.f32.mxu0 0.0
    %1244 = vmatmul.mubr.f32.gmra.mrb[0].mxu0 %v69
    %v1245 = vpop.f32.mrb[0].mxu0
    %v1246 = vadd.f32 0.0, %v1245
    %v1247 = vpop.f32.mrb[0].mxu0
    %1248 = vmatprep.mubr.f32.mxu0 0.0
    %1249 = vmatmul.mubr.f32.gmra.mrb[0].mxu0 %v70
    %v1250 = vpop.f32.mrb[0].mxu0
    %v1251 = vadd.f32 0.0, %v1250
    %v1252 = vpop.f32.mrb[0].mxu0
    %1253 = vmatprep.mubr.f32.mxu0 0.0
    %1254 = vmatmul.mubr.f32.gmra.mrb[0].mxu0 %v71
    %v1255 = vpop.f32.mrb[0].mxu0
    %v1256 = vadd.f32 0.0, %v1255
    %v1257 = vpop.f32.mrb[0].mxu0
    %1258 = vmatprep.mubr.f32.mxu0 0.0
    %1259 = vmatmul.mubr.f32.gmra.mrb[0].mxu0 %v72
    %v1260 = vpop.f32.mrb[0].mxu0
    %v1261 = vadd.f32 0.0, %v1260
    %v1262 = vpop.f32.mrb[0].mxu0
    %1263 = vmatprep.mubr.f32.mxu0 0.0
    %1264 = vmatmul.mubr.f32.gmra.mrb[0].mxu0 %v73
    %v1265 = vpop.f32.mrb[0].mxu0
    %v1266 = vadd.f32 0.0, %v1265
    %v1267 = vpop.f32.mrb[0].mxu0
    %1268 = vmatprep.mubr.f32.mxu0 0.0
    %1269 = vmatmul.mubr.f32.gmra.mrb[0].mxu0 %v74
    %v1270 = vpop.f32.mrb[0].mxu0
    %v1271 = vadd.f32 0.0, %v1270
    %v1272 = vpop.f32.mrb[0].mxu0
    %1273 = vmatprep.mubr.f32.mxu0 0.0
    %1274 = vmatmul.mubr.f32.gmra.mrb[0].mxu0 %v75
    %v1275 = vpop.f32.mrb[0].mxu0
    %v1276 = vadd.f32 0.0, %v1275
    %v1277 = vpop.f32.mrb[0].mxu0
    %1278 = vmatprep.mubr.f32.mxu0 0.0
    %1279 = vmatmul.mubr.f32.gmra.mrb[0].mxu0 %v76
    %v1280 = vpop.f32.mrb[0].mxu0
    %v1281 = vadd.f32 0.0, %v1280
    %v1282 = vpop.f32.mrb[0].mxu0
    %1283 = vmatprep.mubr.f32.mxu0 0.0
    %1284 = vmatmul.mubr.f32.gmra.mrb[0].mxu0 %v77
    %v1285 = vpop.f32.mrb[0].mxu0
    %v1286 = vadd.f32 0.0, %v1285
    %v1287 = vpop.f32.mrb[0].mxu0
    %1288 = vmatprep.mubr.f32.mxu0 0.0
    %1289 = vmatmul.mubr.f32.gmra.mrb[0].mxu0 %v78
    %v1290 = vpop.f32.mrb[0].mxu0
    %v1291 = vadd.f32 0.0, %v1290
    %v1292 = vpop.f32.mrb[0].mxu0
    %1293 = vdwg.mxu0
    %1294 = vmatprep.subr.mxu0 0.0
    %1295 = vmatpush1.msra.mxu0 %v1216
    %1296 = vmatprep.subr.mxu0 0.0
    %1297 = vmatpush1.msra.mxu0 %v1221
    %1298 = vmatprep.subr.mxu0 0.0
    %1299 = vmatpush1.msra.mxu0 %v1226
    %1300 = vmatprep.subr.mxu0 0.0
    %1301 = vmatpush1.msra.mxu0 %v1231
    %1302 = vmatprep.subr.mxu0 0.0
    %1303 = vmatpush1.msra.mxu0 %v1236
    %1304 = vmatprep.subr.mxu0 0.0
    %1305 = vmatpush1.msra.mxu0 %v1241
    %1306 = vmatprep.subr.mxu0 0.0
    %1307 = vmatpush1.msra.mxu0 %v1246
    %1308 = vmatprep.subr.mxu0 0.0
    %1309 = vmatpush1.msra.mxu0 %v1251
    %1310 = vmatprep.subr.mxu0 0.0
    %1311 = vmatpush1.msra.mxu0 %v1256
    %1312 = vmatprep.subr.mxu0 0.0
    %1313 = vmatpush1.msra.mxu0 %v1261
    %1314 = vmatprep.subr.mxu0 0.0
    %1315 = vmatpush1.msra.mxu0 %v1266
    %1316 = vmatprep.subr.mxu0 0.0
    %1317 = vmatpush1.msra.mxu0 %v1271
    %1318 = vmatprep.subr.mxu0 0.0
    %1319 = vmatpush1.msra.mxu0 %v1276
    %1320 = vmatprep.subr.mxu0 0.0
    %1321 = vmatpush1.msra.mxu0 %v1281
    %1322 = vmatprep.subr.mxu0 0.0
    %1323 = vmatpush1.msra.mxu0 %v1286
    %1324 = vmatprep.subr.mxu0 0.0
    %1325 = vmatpush1.msra.mxu0 %v1291
    %1326 = vmatprep.subr.mxu0 0.0
    %1327 = vmatpush1.msra.mxu0 0.0
    %1328 = vmatprep.subr.mxu0 0.0
    %1329 = vmatpush1.msra.mxu0 0.0
    %1330 = vmatprep.subr.mxu0 0.0
    %1331 = vmatpush1.msra.mxu0 0.0
    %1332 = vmatprep.subr.mxu0 0.0
    %1333 = vmatpush1.msra.mxu0 0.0
    %1334 = vmatprep.subr.mxu0 0.0
    %1335 = vmatpush1.msra.mxu0 0.0
    %1336 = vmatprep.subr.mxu0 0.0
    %1337 = vmatpush1.msra.mxu0 0.0
    %1338 = vmatprep.subr.mxu0 0.0
    %1339 = vmatpush1.msra.mxu0 0.0
    %1340 = vmatprep.subr.mxu0 0.0
    %1341 = vmatpush1.msra.mxu0 0.0
    %1342 = vmatprep.subr.mxu0 0.0
    %1343 = vmatpush1.msra.mxu0 0.0
    %1344 = vmatprep.subr.mxu0 0.0
    %1345 = vmatpush1.msra.mxu0 0.0
    %1346 = vmatprep.subr.mxu0 0.0
    %1347 = vmatpush1.msra.mxu0 0.0
    %1348 = vmatprep.subr.mxu0 0.0
    %1349 = vmatpush1.msra.mxu0 0.0
    %1350 = vmatprep.subr.mxu0 0.0
    %1351 = vmatpush1.msra.mxu0 0.0
    %1352 = vmatprep.subr.mxu0 0.0
    %1353 = vmatpush1.msra.mxu0 0.0
    %1354 = vmatprep.subr.mxu0 0.0
    %1355 = vmatpush1.msra.mxu0 0.0
    %1356 = vmatprep.subr.mxu0 0.0
    %1357 = vmatpush1.msra.mxu0 0.0
    %1358 = vmatprep.mubr.f32.mxu0 0.0
    %1359 = vmatmul.mubr.f32.gmra.mrb[0].mxu0 %v63
    %v1360 = vpop.f32.mrb[0].mxu0
    %v1361 = vadd.f32 0.0, %v1360
    %v1362 = vpop.f32.mrb[0].mxu0
    %1363 = vmatprep.mubr.f32.mxu0 0.0
    %1364 = vmatmul.mubr.f32.gmra.mrb[0].mxu0 %v64
    %v1365 = vpop.f32.mrb[0].mxu0
    %v1366 = vadd.f32 0.0, %v1365
    %v1367 = vpop.f32.mrb[0].mxu0
    %1368 = vmatprep.mubr.f32.mxu0 0.0
    %1369 = vmatmul.mubr.f32.gmra.mrb[0].mxu0 %v65
    %v1370 = vpop.f32.mrb[0].mxu0
    %v1371 = vadd.f32 0.0, %v1370
    %v1372 = vpop.f32.mrb[0].mxu0
    %1373 = vmatprep.mubr.f32.mxu0 0.0
    %1374 = vmatmul.mubr.f32.gmra.mrb[0].mxu0 %v66
    %v1375 = vpop.f32.mrb[0].mxu0
    %v1376 = vadd.f32 0.0, %v1375
    %v1377 = vpop.f32.mrb[0].mxu0
    %1378 = vmatprep.mubr.f32.mxu0 0.0
    %1379 = vmatmul.mubr.f32.gmra.mrb[0].mxu0 %v67
    %v1380 = vpop.f32.mrb[0].mxu0
    %v1381 = vadd.f32 0.0, %v1380
    %v1382 = vpop.f32.mrb[0].mxu0
    %1383 = vmatprep.mubr.f32.mxu0 0.0
    %1384 = vmatmul.mubr.f32.gmra.mrb[0].mxu0 %v68
    %v1385 = vpop.f32.mrb[0].mxu0
    %v1386 = vadd.f32 0.0, %v1385
    %v1387 = vpop.f32.mrb[0].mxu0
    %1388 = vmatprep.mubr.f32.mxu0 0.0
    %1389 = vmatmul.mubr.f32.gmra.mrb[0].mxu0 %v69
    %v1390 = vpop.f32.mrb[0].mxu0
    %v1391 = vadd.f32 0.0, %v1390
    %v1392 = vpop.f32.mrb[0].mxu0
    %1393 = vmatprep.mubr.f32.mxu0 0.0
    %1394 = vmatmul.mubr.f32.gmra.mrb[0].mxu0 %v70
    %v1395 = vpop.f32.mrb[0].mxu0
    %v1396 = vadd.f32 0.0, %v1395
    %v1397 = vpop.f32.mrb[0].mxu0
    %1398 = vmatprep.mubr.f32.mxu0 0.0
    %1399 = vmatmul.mubr.f32.gmra.mrb[0].mxu0 %v71
    %v1400 = vpop.f32.mrb[0].mxu0
    %v1401 = vadd.f32 0.0, %v1400
    %v1402 = vpop.f32.mrb[0].mxu0
    %1403 = vmatprep.mubr.f32.mxu0 0.0
    %1404 = vmatmul.mubr.f32.gmra.mrb[0].mxu0 %v72
    %v1405 = vpop.f32.mrb[0].mxu0
    %v1406 = vadd.f32 0.0, %v1405
    %v1407 = vpop.f32.mrb[0].mxu0
    %1408 = vmatprep.mubr.f32.mxu0 0.0
    %1409 = vmatmul.mubr.f32.gmra.mrb[0].mxu0 %v73
    %v1410 = vpop.f32.mrb[0].mxu0
    %v1411 = vadd.f32 0.0, %v1410
    %v1412 = vpop.f32.mrb[0].mxu0
    %1413 = vmatprep.mubr.f32.mxu0 0.0
    %1414 = vmatmul.mubr.f32.gmra.mrb[0].mxu0 %v74
    %v1415 = vpop.f32.mrb[0].mxu0
    %v1416 = vadd.f32 0.0, %v1415
    %v1417 = vpop.f32.mrb[0].mxu0
    %1418 = vmatprep.mubr.f32.mxu0 0.0
    %1419 = vmatmul.mubr.f32.gmra.mrb[0].mxu0 %v75
    %v1420 = vpop.f32.mrb[0].mxu0
    %v1421 = vadd.f32 0.0, %v1420
    %v1422 = vpop.f32.mrb[0].mxu0
    %1423 = vmatprep.mubr.f32.mxu0 0.0
    %1424 = vmatmul.mubr.f32.gmra.mrb[0].mxu0 %v76
    %v1425 = vpop.f32.mrb[0].mxu0
    %v1426 = vadd.f32 0.0, %v1425
    %v1427 = vpop.f32.mrb[0].mxu0
    %1428 = vmatprep.mubr.f32.mxu0 0.0
    %1429 = vmatmul.mubr.f32.gmra.mrb[0].mxu0 %v77
    %v1430 = vpop.f32.mrb[0].mxu0
    %v1431 = vadd.f32 0.0, %v1430
    %v1432 = vpop.f32.mrb[0].mxu0
    %1433 = vmatprep.mubr.f32.mxu0 0.0
    %1434 = vmatmul.mubr.f32.gmra.mrb[0].mxu0 %v78
    %v1435 = vpop.f32.mrb[0].mxu0
    %v1436 = vadd.f32 0.0, %v1435
    %v1437 = vpop.f32.mrb[0].mxu0
    %1438 = vdwg.mxu0
    %v1439 = vsub.f32 %v1216, %v1361
    %v1440 = vsub.f32 %v1221, %v1366
    %v1441 = vsub.f32 %v1226, %v1371
    %v1442 = vsub.f32 %v1231, %v1376
    %v1443 = vsub.f32 %v1236, %v1381
    %v1444 = vsub.f32 %v1241, %v1386
    %v1445 = vsub.f32 %v1246, %v1391
    %v1446 = vsub.f32 %v1251, %v1396
    %v1447 = vsub.f32 %v1256, %v1401
    %v1448 = vsub.f32 %v1261, %v1406
    %v1449 = vsub.f32 %v1266, %v1411
    %v1450 = vsub.f32 %v1271, %v1416
    %v1451 = vsub.f32 %v1276, %v1421
    %v1452 = vsub.f32 %v1281, %v1426
    %v1453 = vsub.f32 %v1286, %v1431
    %v1454 = vsub.f32 %v1291, %v1436
    %v1455 = vand.u32 2147483647, %v1439
    %v1456 = vand.u32 2147483647, %v1440
    %v1457 = vand.u32 2147483647, %v1441
    %v1458 = vand.u32 2147483647, %v1442
    %v1459 = vand.u32 2147483647, %v1443
    %v1460 = vand.u32 2147483647, %v1444
    %v1461 = vand.u32 2147483647, %v1445
    %v1462 = vand.u32 2147483647, %v1446
    %v1463 = vand.u32 2147483647, %v1447
    %v1464 = vand.u32 2147483647, %v1448
    %v1465 = vand.u32 2147483647, %v1449
    %v1466 = vand.u32 2147483647, %v1450
    %v1467 = vand.u32 2147483647, %v1451
    %v1468 = vand.u32 2147483647, %v1452
    %v1469 = vand.u32 2147483647, %v1453
    %v1470 = vand.u32 2147483647, %v1454
    %1487 = vrot.lane.b32.xlu0 %v1455, 96
    %v1488 = vpop.permute.xlu0 %1487
    %1489 = vrot.lane.b32.xlu0 %v1456, 96
    %v1490 = vpop.permute.xlu0 %1489
    %1491 = vrot.lane.b32.xlu0 %v1457, 96
    %v1492 = vpop.permute.xlu0 %1491
    %1493 = vrot.lane.b32.xlu0 %v1458, 96
    %v1494 = vpop.permute.xlu0 %1493
    %1495 = vrot.lane.b32.xlu0 %v1459, 96
    %v1496 = vpop.permute.xlu0 %1495
    %1497 = vrot.lane.b32.xlu0 %v1460, 96
    %v1498 = vpop.permute.xlu0 %1497
    %1499 = vrot.lane.b32.xlu0 %v1461, 96
    %v1500 = vpop.permute.xlu0 %1499
    %1501 = vrot.lane.b32.xlu0 %v1462, 96
    %v1502 = vpop.permute.xlu0 %1501
    %1503 = vrot.lane.b32.xlu0 %v1463, 96
    %v1504 = vpop.permute.xlu0 %1503
    %1505 = vrot.lane.b32.xlu0 %v1464, 96
    %v1506 = vpop.permute.xlu0 %1505
    %1507 = vrot.lane.b32.xlu0 %v1465, 96
    %v1508 = vpop.permute.xlu0 %1507
    %1509 = vrot.lane.b32.xlu0 %v1466, 96
    %v1510 = vpop.permute.xlu0 %1509
    %1511 = vrot.lane.b32.xlu0 %v1467, 96
    %v1512 = vpop.permute.xlu0 %1511
    %1513 = vrot.lane.b32.xlu0 %v1468, 96
    %v1514 = vpop.permute.xlu0 %1513
    %1515 = vrot.lane.b32.xlu0 %v1469, 96
    %v1516 = vpop.permute.xlu0 %1515
    %1517 = vrot.lane.b32.xlu0 %v1470, 96
    %v1518 = vpop.permute.xlu0 %1517
    %vm1535 = vcmask 1048320
    %1536 = vst.msk [vmem:[#allocation2] sm:$0xff] %vm1535, %v1488
    %1537 = vst.msk [vmem:[#allocation2 + $0x10] sm:$0xff] %vm1535, %v1490
    %1538 = vst.msk [vmem:[#allocation2 + $0x20] sm:$0xff] %vm1535, %v1492
    %1539 = vst.msk [vmem:[#allocation2 + $0x30] sm:$0xff] %vm1535, %v1494
    %1540 = vst.msk [vmem:[#allocation2 + $0x40] sm:$0xff] %vm1535, %v1496
    %1541 = vst.msk [vmem:[#allocation2 + $0x50] sm:$0xff] %vm1535, %v1498
    %1542 = vst.msk [vmem:[#allocation2 + $0x60] sm:$0xff] %vm1535, %v1500
    %1543 = vst.msk [vmem:[#allocation2 + $0x70] sm:$0xff] %vm1535, %v1502
    %1544 = vst.msk [vmem:[#allocation2 + $0x80] sm:$0xff] %vm1535, %v1504
    %1545 = vst.msk [vmem:[#allocation2 + $0x90] sm:$0xff] %vm1535, %v1506
    %1546 = vst.msk [vmem:[#allocation2 + $0xa0] sm:$0xff] %vm1535, %v1508
    %1547 = vst.msk [vmem:[#allocation2 + $0xb0] sm:$0xff] %vm1535, %v1510
    %1548 = vst.msk [vmem:[#allocation2 + $0xc0] sm:$0xff] %vm1535, %v1512
    %1549 = vst.msk [vmem:[#allocation2 + $0xd0] sm:$0xff] %vm1535, %v1514
    %1550 = vst.msk [vmem:[#allocation2 + $0xe0] sm:$0xff] %vm1535, %v1516
    %1551 = vst.msk [vmem:[#allocation2 + $0xf0] sm:$0xff] %vm1535, %v1518
    %1552 = vmatprep.subr.mxu0 0.0
    %1553 = vmatpush1.msra.mxu0 %v1361
    %1554 = vmatprep.subr.mxu0 0.0
    %1555 = vmatpush1.msra.mxu0 %v1366
    %1556 = vmatprep.subr.mxu0 0.0
    %1557 = vmatpush1.msra.mxu0 %v1371
    %1558 = vmatprep.subr.mxu0 0.0
    %1559 = vmatpush1.msra.mxu0 %v1376
    %1560 = vmatprep.subr.mxu0 0.0
    %1561 = vmatpush1.msra.mxu0 %v1381
    %1562 = vmatprep.subr.mxu0 0.0
    %1563 = vmatpush1.msra.mxu0 %v1386
    %1564 = vmatprep.subr.mxu0 0.0
    %1565 = vmatpush1.msra.mxu0 %v1391
    %1566 = vmatprep.subr.mxu0 0.0
    %1567 = vmatpush1.msra.mxu0 %v1396
    %1568 = vmatprep.subr.mxu0 0.0
    %1569 = vmatpush1.msra.mxu0 %v1401
    %1570 = vmatprep.subr.mxu0 0.0
    %1571 = vmatpush1.msra.mxu0 %v1406
    %1572 = vmatprep.subr.mxu0 0.0
    %1573 = vmatpush1.msra.mxu0 %v1411
    %1574 = vmatprep.subr.mxu0 0.0
    %1575 = vmatpush1.msra.mxu0 %v1416
    %1576 = vmatprep.subr.mxu0 0.0
    %1577 = vmatpush1.msra.mxu0 %v1421
    %1578 = vmatprep.subr.mxu0 0.0
    %1579 = vmatpush1.msra.mxu0 %v1426
    %1580 = vmatprep.subr.mxu0 0.0
    %1581 = vmatpush1.msra.mxu0 %v1431
    %1582 = vmatprep.subr.mxu0 0.0
    %1583 = vmatpush1.msra.mxu0 %v1436
    %1584 = vmatprep.subr.mxu0 0.0
    %1585 = vmatpush1.msra.mxu0 0.0
    %1586 = vmatprep.subr.mxu0 0.0
    %1587 = vmatpush1.msra.mxu0 0.0
    %1588 = vmatprep.subr.mxu0 0.0
    %1589 = vmatpush1.msra.mxu0 0.0
    %1590 = vmatprep.subr.mxu0 0.0
    %1591 = vmatpush1.msra.mxu0 0.0
    %1592 = vmatprep.subr.mxu0 0.0
    %1593 = vmatpush1.msra.mxu0 0.0
    %1594 = vmatprep.subr.mxu0 0.0
    %1595 = vmatpush1.msra.mxu0 0.0
    %1596 = vmatprep.subr.mxu0 0.0
    %1597 = vmatpush1.msra.mxu0 0.0
    %1598 = vmatprep.subr.mxu0 0.0
    %1599 = vmatpush1.msra.mxu0 0.0
    %1600 = vmatprep.subr.mxu0 0.0
    %1601 = vmatpush1.msra.mxu0 0.0
    %1602 = vmatprep.subr.mxu0 0.0
    %1603 = vmatpush1.msra.mxu0 0.0
    %1604 = vmatprep.subr.mxu0 0.0
    %1605 = vmatpush1.msra.mxu0 0.0
    %1606 = vmatprep.subr.mxu0 0.0
    %1607 = vmatpush1.msra.mxu0 0.0
    %1608 = vmatprep.subr.mxu0 0.0
    %1609 = vmatpush1.msra.mxu0 0.0
    %1610 = vmatprep.subr.mxu0 0.0
    %1611 = vmatpush1.msra.mxu0 0.0
    %1612 = vmatprep.subr.mxu0 0.0
    %1613 = vmatpush1.msra.mxu0 0.0
    %1614 = vmatprep.subr.mxu0 0.0
    %1615 = vmatpush1.msra.mxu0 0.0
    %1616 = vmatprep.mubr.f32.mxu0 0.0
    %1617 = vmatmul.mubr.f32.gmra.mrb[0].mxu0 %v63
    %v1618 = vpop.f32.mrb[0].mxu0
    %v1619 = vadd.f32 0.0, %v1618
    %v1620 = vpop.f32.mrb[0].mxu0
    %1621 = vmatprep.mubr.f32.mxu0 0.0
    %1622 = vmatmul.mubr.f32.gmra.mrb[0].mxu0 %v64
    %v1623 = vpop.f32.mrb[0].mxu0
    %v1624 = vadd.f32 0.0, %v1623
    %v1625 = vpop.f32.mrb[0].mxu0
    %1626 = vmatprep.mubr.f32.mxu0 0.0
    %1627 = vmatmul.mubr.f32.gmra.mrb[0].mxu0 %v65
    %v1628 = vpop.f32.mrb[0].mxu0
    %v1629 = vadd.f32 0.0, %v1628
    %v1630 = vpop.f32.mrb[0].mxu0
    %1631 = vmatprep.mubr.f32.mxu0 0.0
    %1632 = vmatmul.mubr.f32.gmra.mrb[0].mxu0 %v66
    %v1633 = vpop.f32.mrb[0].mxu0
    %v1634 = vadd.f32 0.0, %v1633
    %v1635 = vpop.f32.mrb[0].mxu0
    %1636 = vmatprep.mubr.f32.mxu0 0.0
    %1637 = vmatmul.mubr.f32.gmra.mrb[0].mxu0 %v67
    %v1638 = vpop.f32.mrb[0].mxu0
    %v1639 = vadd.f32 0.0, %v1638
    %v1640 = vpop.f32.mrb[0].mxu0
    %1641 = vmatprep.mubr.f32.mxu0 0.0
    %1642 = vmatmul.mubr.f32.gmra.mrb[0].mxu0 %v68
    %v1643 = vpop.f32.mrb[0].mxu0
    %v1644 = vadd.f32 0.0, %v1643
    %v1645 = vpop.f32.mrb[0].mxu0
    %1646 = vmatprep.mubr.f32.mxu0 0.0
    %1647 = vmatmul.mubr.f32.gmra.mrb[0].mxu0 %v69
    %v1648 = vpop.f32.mrb[0].mxu0
    %v1649 = vadd.f32 0.0, %v1648
    %v1650 = vpop.f32.mrb[0].mxu0
    %1651 = vmatprep.mubr.f32.mxu0 0.0
    %1652 = vmatmul.mubr.f32.gmra.mrb[0].mxu0 %v70
    %v1653 = vpop.f32.mrb[0].mxu0
    %v1654 = vadd.f32 0.0, %v1653
    %v1655 = vpop.f32.mrb[0].mxu0
    %1656 = vmatprep.mubr.f32.mxu0 0.0
    %1657 = vmatmul.mubr.f32.gmra.mrb[0].mxu0 %v71
    %v1658 = vpop.f32.mrb[0].mxu0
    %v1659 = vadd.f32 0.0, %v1658
    %v1660 = vpop.f32.mrb[0].mxu0
    %1661 = vmatprep.mubr.f32.mxu0 0.0
    %1662 = vmatmul.mubr.f32.gmra.mrb[0].mxu0 %v72
    %v1663 = vpop.f32.mrb[0].mxu0
    %v1664 = vadd.f32 0.0, %v1663
    %v1665 = vpop.f32.mrb[0].mxu0
    %1666 = vmatprep.mubr.f32.mxu0 0.0
    %1667 = vmatmul.mubr.f32.gmra.mrb[0].mxu0 %v73
    %v1668 = vpop.f32.mrb[0].mxu0
    %v1669 = vadd.f32 0.0, %v1668
    %v1670 = vpop.f32.mrb[0].mxu0
    %1671 = vmatprep.mubr.f32.mxu0 0.0
    %1672 = vmatmul.mubr.f32.gmra.mrb[0].mxu0 %v74
    %v1673 = vpop.f32.mrb[0].mxu0
    %v1674 = vadd.f32 0.0, %v1673
    %v1675 = vpop.f32.mrb[0].mxu0
    %1676 = vmatprep.mubr.f32.mxu0 0.0
    %1677 = vmatmul.mubr.f32.gmra.mrb[0].mxu0 %v75
    %v1678 = vpop.f32.mrb[0].mxu0
    %v1679 = vadd.f32 0.0, %v1678
    %v1680 = vpop.f32.mrb[0].mxu0
    %1681 = vmatprep.mubr.f32.mxu0 0.0
    %1682 = vmatmul.mubr.f32.gmra.mrb[0].mxu0 %v76
    %v1683 = vpop.f32.mrb[0].mxu0
    %v1684 = vadd.f32 0.0, %v1683
    %v1685 = vpop.f32.mrb[0].mxu0
    %1686 = vmatprep.mubr.f32.mxu0 0.0
    %1687 = vmatmul.mubr.f32.gmra.mrb[0].mxu0 %v77
    %v1688 = vpop.f32.mrb[0].mxu0
    %v1689 = vadd.f32 0.0, %v1688
    %v1690 = vpop.f32.mrb[0].mxu0
    %1691 = vmatprep.mubr.f32.mxu0 0.0
    %1692 = vmatmul.mubr.f32.gmra.mrb[0].mxu0 %v78
    %v1693 = vpop.f32.mrb[0].mxu0
    %v1694 = vadd.f32 0.0, %v1693
    %v1695 = vpop.f32.mrb[0].mxu0
    %1696 = vdwg.mxu0
    %1697 = vmatprep.subr.mxu0 0.0
    %1698 = vmatpush1.msra.mxu0 %v1619
    %1699 = vmatprep.subr.mxu0 0.0
    %1700 = vmatpush1.msra.mxu0 %v1624
    %1701 = vmatprep.subr.mxu0 0.0
    %1702 = vmatpush1.msra.mxu0 %v1629
    %1703 = vmatprep.subr.mxu0 0.0
    %1704 = vmatpush1.msra.mxu0 %v1634
    %1705 = vmatprep.subr.mxu0 0.0
    %1706 = vmatpush1.msra.mxu0 %v1639
    %1707 = vmatprep.subr.mxu0 0.0
    %1708 = vmatpush1.msra.mxu0 %v1644
    %1709 = vmatprep.subr.mxu0 0.0
    %1710 = vmatpush1.msra.mxu0 %v1649
    %1711 = vmatprep.subr.mxu0 0.0
    %1712 = vmatpush1.msra.mxu0 %v1654
    %1713 = vmatprep.subr.mxu0 0.0
    %1714 = vmatpush1.msra.mxu0 %v1659
    %1715 = vmatprep.subr.mxu0 0.0
    %1716 = vmatpush1.msra.mxu0 %v1664
    %1717 = vmatprep.subr.mxu0 0.0
    %1718 = vmatpush1.msra.mxu0 %v1669
    %1719 = vmatprep.subr.mxu0 0.0
    %1720 = vmatpush1.msra.mxu0 %v1674
    %1721 = vmatprep.subr.mxu0 0.0
    %1722 = vmatpush1.msra.mxu0 %v1679
    %1723 = vmatprep.subr.mxu0 0.0
    %1724 = vmatpush1.msra.mxu0 %v1684
    %1725 = vmatprep.subr.mxu0 0.0
    %1726 = vmatpush1.msra.mxu0 %v1689
    %1727 = vmatprep.subr.mxu0 0.0
    %1728 = vmatpush1.msra.mxu0 %v1694
    %1729 = vmatprep.subr.mxu0 0.0
    %1730 = vmatpush1.msra.mxu0 0.0
    %1731 = vmatprep.subr.mxu0 0.0
    %1732 = vmatpush1.msra.mxu0 0.0
    %1733 = vmatprep.subr.mxu0 0.0
    %1734 = vmatpush1.msra.mxu0 0.0
    %1735 = vmatprep.subr.mxu0 0.0
    %1736 = vmatpush1.msra.mxu0 0.0
    %1737 = vmatprep.subr.mxu0 0.0
    %1738 = vmatpush1.msra.mxu0 0.0
    %1739 = vmatprep.subr.mxu0 0.0
    %1740 = vmatpush1.msra.mxu0 0.0
    %1741 = vmatprep.subr.mxu0 0.0
    %1742 = vmatpush1.msra.mxu0 0.0
    %1743 = vmatprep.subr.mxu0 0.0
    %1744 = vmatpush1.msra.mxu0 0.0
    %1745 = vmatprep.subr.mxu0 0.0
    %1746 = vmatpush1.msra.mxu0 0.0
    %1747 = vmatprep.subr.mxu0 0.0
    %1748 = vmatpush1.msra.mxu0 0.0
    %1749 = vmatprep.subr.mxu0 0.0
    %1750 = vmatpush1.msra.mxu0 0.0
    %1751 = vmatprep.subr.mxu0 0.0
    %1752 = vmatpush1.msra.mxu0 0.0
    %1753 = vmatprep.subr.mxu0 0.0
    %1754 = vmatpush1.msra.mxu0 0.0
    %1755 = vmatprep.subr.mxu0 0.0
    %1756 = vmatpush1.msra.mxu0 0.0
    %1757 = vmatprep.subr.mxu0 0.0
    %1758 = vmatpush1.msra.mxu0 0.0
    %1759 = vmatprep.subr.mxu0 0.0
    %1760 = vmatpush1.msra.mxu0 0.0
    %1761 = vmatprep.mubr.f32.mxu0 0.0
    %1762 = vmatmul.mubr.f32.gmra.mrb[0].mxu0 %v63
    %v1763 = vpop.f32.mrb[0].mxu0
    %v1764 = vadd.f32 0.0, %v1763
    %v1765 = vpop.f32.mrb[0].mxu0
    %1766 = vmatprep.mubr.f32.mxu0 0.0
    %1767 = vmatmul.mubr.f32.gmra.mrb[0].mxu0 %v64
    %v1768 = vpop.f32.mrb[0].mxu0
    %v1769 = vadd.f32 0.0, %v1768
    %v1770 = vpop.f32.mrb[0].mxu0
    %1771 = vmatprep.mubr.f32.mxu0 0.0
    %1772 = vmatmul.mubr.f32.gmra.mrb[0].mxu0 %v65
    %v1773 = vpop.f32.mrb[0].mxu0
    %v1774 = vadd.f32 0.0, %v1773
    %v1775 = vpop.f32.mrb[0].mxu0
    %1776 = vmatprep.mubr.f32.mxu0 0.0
    %1777 = vmatmul.mubr.f32.gmra.mrb[0].mxu0 %v66
    %v1778 = vpop.f32.mrb[0].mxu0
    %v1779 = vadd.f32 0.0, %v1778
    %v1780 = vpop.f32.mrb[0].mxu0
    %1781 = vmatprep.mubr.f32.mxu0 0.0
    %1782 = vmatmul.mubr.f32.gmra.mrb[0].mxu0 %v67
    %v1783 = vpop.f32.mrb[0].mxu0
    %v1784 = vadd.f32 0.0, %v1783
    %v1785 = vpop.f32.mrb[0].mxu0
    %1786 = vmatprep.mubr.f32.mxu0 0.0
    %1787 = vmatmul.mubr.f32.gmra.mrb[0].mxu0 %v68
    %v1788 = vpop.f32.mrb[0].mxu0
    %v1789 = vadd.f32 0.0, %v1788
    %v1790 = vpop.f32.mrb[0].mxu0
    %1791 = vmatprep.mubr.f32.mxu0 0.0
    %1792 = vmatmul.mubr.f32.gmra.mrb[0].mxu0 %v69
    %v1793 = vpop.f32.mrb[0].mxu0
    %v1794 = vadd.f32 0.0, %v1793
    %v1795 = vpop.f32.mrb[0].mxu0
    %1796 = vmatprep.mubr.f32.mxu0 0.0
    %1797 = vmatmul.mubr.f32.gmra.mrb[0].mxu0 %v70
    %v1798 = vpop.f32.mrb[0].mxu0
    %v1799 = vadd.f32 0.0, %v1798
    %v1800 = vpop.f32.mrb[0].mxu0
    %1801 = vmatprep.mubr.f32.mxu0 0.0
    %1802 = vmatmul.mubr.f32.gmra.mrb[0].mxu0 %v71
    %v1803 = vpop.f32.mrb[0].mxu0
    %v1804 = vadd.f32 0.0, %v1803
    %v1805 = vpop.f32.mrb[0].mxu0
    %1806 = vmatprep.mubr.f32.mxu0 0.0
    %1807 = vmatmul.mubr.f32.gmra.mrb[0].mxu0 %v72
    %v1808 = vpop.f32.mrb[0].mxu0
    %v1809 = vadd.f32 0.0, %v1808
    %v1810 = vpop.f32.mrb[0].mxu0
    %1811 = vmatprep.mubr.f32.mxu0 0.0
    %1812 = vmatmul.mubr.f32.gmra.mrb[0].mxu0 %v73
    %v1813 = vpop.f32.mrb[0].mxu0
    %v1814 = vadd.f32 0.0, %v1813
    %v1815 = vpop.f32.mrb[0].mxu0
    %1816 = vmatprep.mubr.f32.mxu0 0.0
    %1817 = vmatmul.mubr.f32.gmra.mrb[0].mxu0 %v74
    %v1818 = vpop.f32.mrb[0].mxu0
    %v1819 = vadd.f32 0.0, %v1818
    %v1820 = vpop.f32.mrb[0].mxu0
    %1821 = vmatprep.mubr.f32.mxu0 0.0
    %1822 = vmatmul.mubr.f32.gmra.mrb[0].mxu0 %v75
    %v1823 = vpop.f32.mrb[0].mxu0
    %v1824 = vadd.f32 0.0, %v1823
    %v1825 = vpop.f32.mrb[0].mxu0
    %1826 = vmatprep.mubr.f32.mxu0 0.0
    %1827 = vmatmul.mubr.f32.gmra.mrb[0].mxu0 %v76
    %v1828 = vpop.f32.mrb[0].mxu0
    %v1829 = vadd.f32 0.0, %v1828
    %v1830 = vpop.f32.mrb[0].mxu0
    %1831 = vmatprep.mubr.f32.mxu0 0.0
    %1832 = vmatmul.mubr.f32.gmra.mrb[0].mxu0 %v77
    %v1833 = vpop.f32.mrb[0].mxu0
    %v1834 = vadd.f32 0.0, %v1833
    %v1835 = vpop.f32.mrb[0].mxu0
    %1836 = vmatprep.mubr.f32.mxu0 0.0
    %1837 = vmatmul.mubr.f32.gmra.mrb[0].mxu0 %v78
    %v1838 = vpop.f32.mrb[0].mxu0
    %v1839 = vadd.f32 0.0, %v1838
    %v1840 = vpop.f32.mrb[0].mxu0
    %1841 = vdwg.mxu0
    %v1842 = vsub.f32 %v1361, %v1764
    %v1843 = vsub.f32 %v1366, %v1769
    %v1844 = vsub.f32 %v1371, %v1774
    %v1845 = vsub.f32 %v1376, %v1779
    %v1846 = vsub.f32 %v1381, %v1784
    %v1847 = vsub.f32 %v1386, %v1789
    %v1848 = vsub.f32 %v1391, %v1794
    %v1849 = vsub.f32 %v1396, %v1799
    %v1850 = vsub.f32 %v1401, %v1804
    %v1851 = vsub.f32 %v1406, %v1809
    %v1852 = vsub.f32 %v1411, %v1814
    %v1853 = vsub.f32 %v1416, %v1819
    %v1854 = vsub.f32 %v1421, %v1824
    %v1855 = vsub.f32 %v1426, %v1829
    %v1856 = vsub.f32 %v1431, %v1834
    %v1857 = vsub.f32 %v1436, %v1839
    %v1858 = vand.u32 2147483647, %v1842
    %v1859 = vand.u32 2147483647, %v1843
    %v1860 = vand.u32 2147483647, %v1844
    %v1861 = vand.u32 2147483647, %v1845
    %v1862 = vand.u32 2147483647, %v1846
    %v1863 = vand.u32 2147483647, %v1847
    %v1864 = vand.u32 2147483647, %v1848
    %v1865 = vand.u32 2147483647, %v1849
    %v1866 = vand.u32 2147483647, %v1850
    %v1867 = vand.u32 2147483647, %v1851
    %v1868 = vand.u32 2147483647, %v1852
    %v1869 = vand.u32 2147483647, %v1853
    %v1870 = vand.u32 2147483647, %v1854
    %v1871 = vand.u32 2147483647, %v1855
    %v1872 = vand.u32 2147483647, %v1856
    %v1873 = vand.u32 2147483647, %v1857
    %1874 = vst.msk [vmem:[#allocation2 + $0x8] sm:$0xff] %vm342, %v1858
    %1875 = vst.msk [vmem:[#allocation2 + $0x18] sm:$0xff] %vm342, %v1859
    %1876 = vst.msk [vmem:[#allocation2 + $0x28] sm:$0xff] %vm342, %v1860
    %1877 = vst.msk [vmem:[#allocation2 + $0x38] sm:$0xff] %vm342, %v1861
    %1878 = vst.msk [vmem:[#allocation2 + $0x48] sm:$0xff] %vm342, %v1862
    %1879 = vst.msk [vmem:[#allocation2 + $0x58] sm:$0xff] %vm342, %v1863
    %1880 = vst.msk [vmem:[#allocation2 + $0x68] sm:$0xff] %vm342, %v1864
    %1881 = vst.msk [vmem:[#allocation2 + $0x78] sm:$0xff] %vm342, %v1865
    %1882 = vst.msk [vmem:[#allocation2 + $0x88] sm:$0xff] %vm342, %v1866
    %1883 = vst.msk [vmem:[#allocation2 + $0x98] sm:$0xff] %vm342, %v1867
    %1884 = vst.msk [vmem:[#allocation2 + $0xa8] sm:$0xff] %vm342, %v1868
    %1885 = vst.msk [vmem:[#allocation2 + $0xb8] sm:$0xff] %vm342, %v1869
    %1886 = vst.msk [vmem:[#allocation2 + $0xc8] sm:$0xff] %vm342, %v1870
    %1887 = vst.msk [vmem:[#allocation2 + $0xd8] sm:$0xff] %vm342, %v1871
    %1888 = vst.msk [vmem:[#allocation2 + $0xe8] sm:$0xff] %vm342, %v1872
    %1889 = vst.msk [vmem:[#allocation2 + $0xf8] sm:$0xff] %vm342, %v1873
    %1890 = vmatprep.subr.mxu0 0.0
    %1891 = vmatpush1.msra.mxu0 %v1764
    %1892 = vmatprep.subr.mxu0 0.0
    %1893 = vmatpush1.msra.mxu0 %v1769
    %1894 = vmatprep.subr.mxu0 0.0
    %1895 = vmatpush1.msra.mxu0 %v1774
    %1896 = vmatprep.subr.mxu0 0.0
    %1897 = vmatpush1.msra.mxu0 %v1779
    %1898 = vmatprep.subr.mxu0 0.0
    %1899 = vmatpush1.msra.mxu0 %v1784
    %1900 = vmatprep.subr.mxu0 0.0
    %1901 = vmatpush1.msra.mxu0 %v1789
    %1902 = vmatprep.subr.mxu0 0.0
    %1903 = vmatpush1.msra.mxu0 %v1794
    %1904 = vmatprep.subr.mxu0 0.0
    %1905 = vmatpush1.msra.mxu0 %v1799
    %1906 = vmatprep.subr.mxu0 0.0
    %1907 = vmatpush1.msra.mxu0 %v1804
    %1908 = vmatprep.subr.mxu0 0.0
    %1909 = vmatpush1.msra.mxu0 %v1809
    %1910 = vmatprep.subr.mxu0 0.0
    %1911 = vmatpush1.msra.mxu0 %v1814
    %1912 = vmatprep.subr.mxu0 0.0
    %1913 = vmatpush1.msra.mxu0 %v1819
    %1914 = vmatprep.subr.mxu0 0.0
    %1915 = vmatpush1.msra.mxu0 %v1824
    %1916 = vmatprep.subr.mxu0 0.0
    %1917 = vmatpush1.msra.mxu0 %v1829
    %1918 = vmatprep.subr.mxu0 0.0
    %1919 = vmatpush1.msra.mxu0 %v1834
    %1920 = vmatprep.subr.mxu0 0.0
    %1921 = vmatpush1.msra.mxu0 %v1839
    %1922 = vmatprep.subr.mxu0 0.0
    %1923 = vmatpush1.msra.mxu0 0.0
    %1924 = vmatprep.subr.mxu0 0.0
    %1925 = vmatpush1.msra.mxu0 0.0
    %1926 = vmatprep.subr.mxu0 0.0
    %1927 = vmatpush1.msra.mxu0 0.0
    %1928 = vmatprep.subr.mxu0 0.0
    %1929 = vmatpush1.msra.mxu0 0.0
    %1930 = vmatprep.subr.mxu0 0.0
    %1931 = vmatpush1.msra.mxu0 0.0
    %1932 = vmatprep.subr.mxu0 0.0
    %1933 = vmatpush1.msra.mxu0 0.0
    %1934 = vmatprep.subr.mxu0 0.0
    %1935 = vmatpush1.msra.mxu0 0.0
    %1936 = vmatprep.subr.mxu0 0.0
    %1937 = vmatpush1.msra.mxu0 0.0
    %1938 = vmatprep.subr.mxu0 0.0
    %1939 = vmatpush1.msra.mxu0 0.0
    %1940 = vmatprep.subr.mxu0 0.0
    %1941 = vmatpush1.msra.mxu0 0.0
    %1942 = vmatprep.subr.mxu0 0.0
    %1943 = vmatpush1.msra.mxu0 0.0
    %1944 = vmatprep.subr.mxu0 0.0
    %1945 = vmatpush1.msra.mxu0 0.0
    %1946 = vmatprep.subr.mxu0 0.0
    %1947 = vmatpush1.msra.mxu0 0.0
    %1948 = vmatprep.subr.mxu0 0.0
    %1949 = vmatpush1.msra.mxu0 0.0
    %1950 = vmatprep.subr.mxu0 0.0
    %1951 = vmatpush1.msra.mxu0 0.0
    %1952 = vmatprep.subr.mxu0 0.0
    %1953 = vmatpush1.msra.mxu0 0.0
    %1954 = vmatprep.mubr.f32.mxu0 0.0
    %1955 = vmatmul.mubr.f32.gmra.mrb[0].mxu0 %v63
    %v1956 = vpop.f32.mrb[0].mxu0
    %v1957 = vadd.f32 0.0, %v1956
    %v1958 = vpop.f32.mrb[0].mxu0
    %1959 = vmatprep.mubr.f32.mxu0 0.0
    %1960 = vmatmul.mubr.f32.gmra.mrb[0].mxu0 %v64
    %v1961 = vpop.f32.mrb[0].mxu0
    %v1962 = vadd.f32 0.0, %v1961
    %v1963 = vpop.f32.mrb[0].mxu0
    %1964 = vmatprep.mubr.f32.mxu0 0.0
    %1965 = vmatmul.mubr.f32.gmra.mrb[0].mxu0 %v65
    %v1966 = vpop.f32.mrb[0].mxu0
    %v1967 = vadd.f32 0.0, %v1966
    %v1968 = vpop.f32.mrb[0].mxu0
    %1969 = vmatprep.mubr.f32.mxu0 0.0
    %1970 = vmatmul.mubr.f32.gmra.mrb[0].mxu0 %v66
    %v1971 = vpop.f32.mrb[0].mxu0
    %v1972 = vadd.f32 0.0, %v1971
    %v1973 = vpop.f32.mrb[0].mxu0
    %1974 = vmatprep.mubr.f32.mxu0 0.0
    %1975 = vmatmul.mubr.f32.gmra.mrb[0].mxu0 %v67
    %v1976 = vpop.f32.mrb[0].mxu0
    %v1977 = vadd.f32 0.0, %v1976
    %v1978 = vpop.f32.mrb[0].mxu0
    %1979 = vmatprep.mubr.f32.mxu0 0.0
    %1980 = vmatmul.mubr.f32.gmra.mrb[0].mxu0 %v68
    %v1981 = vpop.f32.mrb[0].mxu0
    %v1982 = vadd.f32 0.0, %v1981
    %v1983 = vpop.f32.mrb[0].mxu0
    %1984 = vmatprep.mubr.f32.mxu0 0.0
    %1985 = vmatmul.mubr.f32.gmra.mrb[0].mxu0 %v69
    %v1986 = vpop.f32.mrb[0].mxu0
    %v1987 = vadd.f32 0.0, %v1986
    %v1988 = vpop.f32.mrb[0].mxu0
    %1989 = vmatprep.mubr.f32.mxu0 0.0
    %1990 = vmatmul.mubr.f32.gmra.mrb[0].mxu0 %v70
    %v1991 = vpop.f32.mrb[0].mxu0
    %v1992 = vadd.f32 0.0, %v1991
    %v1993 = vpop.f32.mrb[0].mxu0
    %1994 = vmatprep.mubr.f32.mxu0 0.0
    %1995 = vmatmul.mubr.f32.gmra.mrb[0].mxu0 %v71
    %v1996 = vpop.f32.mrb[0].mxu0
    %v1997 = vadd.f32 0.0, %v1996
    %v1998 = vpop.f32.mrb[0].mxu0
    %1999 = vmatprep.mubr.f32.mxu0 0.0
    %2000 = vmatmul.mubr.f32.gmra.mrb[0].mxu0 %v72
    %v2001 = vpop.f32.mrb[0].mxu0
    %v2002 = vadd.f32 0.0, %v2001
    %v2003 = vpop.f32.mrb[0].mxu0
    %2004 = vmatprep.mubr.f32.mxu0 0.0
    %2005 = vmatmul.mubr.f32.gmra.mrb[0].mxu0 %v73
    %v2006 = vpop.f32.mrb[0].mxu0
    %v2007 = vadd.f32 0.0, %v2006
    %v2008 = vpop.f32.mrb[0].mxu0
    %2009 = vmatprep.mubr.f32.mxu0 0.0
    %2010 = vmatmul.mubr.f32.gmra.mrb[0].mxu0 %v74
    %v2011 = vpop.f32.mrb[0].mxu0
    %v2012 = vadd.f32 0.0, %v2011
    %v2013 = vpop.f32.mrb[0].mxu0
    %2014 = vmatprep.mubr.f32.mxu0 0.0
    %2015 = vmatmul.mubr.f32.gmra.mrb[0].mxu0 %v75
    %v2016 = vpop.f32.mrb[0].mxu0
    %v2017 = vadd.f32 0.0, %v2016
    %v2018 = vpop.f32.mrb[0].mxu0
    %2019 = vmatprep.mubr.f32.mxu0 0.0
    %2020 = vmatmul.mubr.f32.gmra.mrb[0].mxu0 %v76
    %v2021 = vpop.f32.mrb[0].mxu0
    %v2022 = vadd.f32 0.0, %v2021
    %v2023 = vpop.f32.mrb[0].mxu0
    %2024 = vmatprep.mubr.f32.mxu0 0.0
    %2025 = vmatmul.mubr.f32.gmra.mrb[0].mxu0 %v77
    %v2026 = vpop.f32.mrb[0].mxu0
    %v2027 = vadd.f32 0.0, %v2026
    %v2028 = vpop.f32.mrb[0].mxu0
    %2029 = vmatprep.mubr.f32.mxu0 0.0
    %2030 = vmatmul.mubr.f32.gmra.mrb[0].mxu0 %v78
    %v2031 = vpop.f32.mrb[0].mxu0
    %v2032 = vadd.f32 0.0, %v2031
    %v2033 = vpop.f32.mrb[0].mxu0
    %2034 = vdwg.mxu0
    %2035 = vmatprep.subr.mxu0 0.0
    %2036 = vmatpush1.msra.mxu0 %v1957
    %2037 = vmatprep.subr.mxu0 0.0
    %2038 = vmatpush1.msra.mxu0 %v1962
    %2039 = vmatprep.subr.mxu0 0.0
    %2040 = vmatpush1.msra.mxu0 %v1967
    %2041 = vmatprep.subr.mxu0 0.0
    %2042 = vmatpush1.msra.mxu0 %v1972
    %2043 = vmatprep.subr.mxu0 0.0
    %2044 = vmatpush1.msra.mxu0 %v1977
    %2045 = vmatprep.subr.mxu0 0.0
    %2046 = vmatpush1.msra.mxu0 %v1982
    %2047 = vmatprep.subr.mxu0 0.0
    %2048 = vmatpush1.msra.mxu0 %v1987
    %2049 = vmatprep.subr.mxu0 0.0
    %2050 = vmatpush1.msra.mxu0 %v1992
    %2051 = vmatprep.subr.mxu0 0.0
    %2052 = vmatpush1.msra.mxu0 %v1997
    %2053 = vmatprep.subr.mxu0 0.0
    %2054 = vmatpush1.msra.mxu0 %v2002
    %2055 = vmatprep.subr.mxu0 0.0
    %2056 = vmatpush1.msra.mxu0 %v2007
    %2057 = vmatprep.subr.mxu0 0.0
    %2058 = vmatpush1.msra.mxu0 %v2012
    %2059 = vmatprep.subr.mxu0 0.0
    %2060 = vmatpush1.msra.mxu0 %v2017
    %2061 = vmatprep.subr.mxu0 0.0
    %2062 = vmatpush1.msra.mxu0 %v2022
    %2063 = vmatprep.subr.mxu0 0.0
    %2064 = vmatpush1.msra.mxu0 %v2027
    %2065 = vmatprep.subr.mxu0 0.0
    %2066 = vmatpush1.msra.mxu0 %v2032
    %2067 = vmatprep.subr.mxu0 0.0
    %2068 = vmatpush1.msra.mxu0 0.0
    %2069 = vmatprep.subr.mxu0 0.0
    %2070 = vmatpush1.msra.mxu0 0.0
    %2071 = vmatprep.subr.mxu0 0.0
    %2072 = vmatpush1.msra.mxu0 0.0
    %2073 = vmatprep.subr.mxu0 0.0
    %2074 = vmatpush1.msra.mxu0 0.0
    %2075 = vmatprep.subr.mxu0 0.0
    %2076 = vmatpush1.msra.mxu0 0.0
    %2077 = vmatprep.subr.mxu0 0.0
    %2078 = vmatpush1.msra.mxu0 0.0
    %2079 = vmatprep.subr.mxu0 0.0
    %2080 = vmatpush1.msra.mxu0 0.0
    %2081 = vmatprep.subr.mxu0 0.0
    %2082 = vmatpush1.msra.mxu0 0.0
    %2083 = vmatprep.subr.mxu0 0.0
    %2084 = vmatpush1.msra.mxu0 0.0
    %2085 = vmatprep.subr.mxu0 0.0
    %2086 = vmatpush1.msra.mxu0 0.0
    %2087 = vmatprep.subr.mxu0 0.0
    %2088 = vmatpush1.msra.mxu0 0.0
    %2089 = vmatprep.subr.mxu0 0.0
    %2090 = vmatpush1.msra.mxu0 0.0
    %2091 = vmatprep.subr.mxu0 0.0
    %2092 = vmatpush1.msra.mxu0 0.0
    %2093 = vmatprep.subr.mxu0 0.0
    %2094 = vmatpush1.msra.mxu0 0.0
    %2095 = vmatprep.subr.mxu0 0.0
    %2096 = vmatpush1.msra.mxu0 0.0
    %2097 = vmatprep.subr.mxu0 0.0
    %2098 = vmatpush1.msra.mxu0 0.0
    %2099 = vmatprep.mubr.f32.mxu0 0.0
    %2100 = vmatmul.mubr.f32.gmra.mrb[0].mxu0 %v63
    %v2101 = vpop.f32.mrb[0].mxu0
    %v2102 = vadd.f32 0.0, %v2101
    %v2103 = vpop.f32.mrb[0].mxu0
    %2104 = vmatprep.mubr.f32.mxu0 0.0
    %2105 = vmatmul.mubr.f32.gmra.mrb[0].mxu0 %v64
    %v2106 = vpop.f32.mrb[0].mxu0
    %v2107 = vadd.f32 0.0, %v2106
    %v2108 = vpop.f32.mrb[0].mxu0
    %2109 = vmatprep.mubr.f32.mxu0 0.0
    %2110 = vmatmul.mubr.f32.gmra.mrb[0].mxu0 %v65
    %v2111 = vpop.f32.mrb[0].mxu0
    %v2112 = vadd.f32 0.0, %v2111
    %v2113 = vpop.f32.mrb[0].mxu0
    %2114 = vmatprep.mubr.f32.mxu0 0.0
    %2115 = vmatmul.mubr.f32.gmra.mrb[0].mxu0 %v66
    %v2116 = vpop.f32.mrb[0].mxu0
    %v2117 = vadd.f32 0.0, %v2116
    %v2118 = vpop.f32.mrb[0].mxu0
    %2119 = vmatprep.mubr.f32.mxu0 0.0
    %2120 = vmatmul.mubr.f32.gmra.mrb[0].mxu0 %v67
    %v2121 = vpop.f32.mrb[0].mxu0
    %v2122 = vadd.f32 0.0, %v2121
    %v2123 = vpop.f32.mrb[0].mxu0
    %2124 = vmatprep.mubr.f32.mxu0 0.0
    %2125 = vmatmul.mubr.f32.gmra.mrb[0].mxu0 %v68
    %v2126 = vpop.f32.mrb[0].mxu0
    %v2127 = vadd.f32 0.0, %v2126
    %v2128 = vpop.f32.mrb[0].mxu0
    %2129 = vmatprep.mubr.f32.mxu0 0.0
    %2130 = vmatmul.mubr.f32.gmra.mrb[0].mxu0 %v69
    %v2131 = vpop.f32.mrb[0].mxu0
    %v2132 = vadd.f32 0.0, %v2131
    %v2133 = vpop.f32.mrb[0].mxu0
    %2134 = vmatprep.mubr.f32.mxu0 0.0
    %2135 = vmatmul.mubr.f32.gmra.mrb[0].mxu0 %v70
    %v2136 = vpop.f32.mrb[0].mxu0
    %v2137 = vadd.f32 0.0, %v2136
    %v2138 = vpop.f32.mrb[0].mxu0
    %2139 = vmatprep.mubr.f32.mxu0 0.0
    %2140 = vmatmul.mubr.f32.gmra.mrb[0].mxu0 %v71
    %v2141 = vpop.f32.mrb[0].mxu0
    %v2142 = vadd.f32 0.0, %v2141
    %v2143 = vpop.f32.mrb[0].mxu0
    %2144 = vmatprep.mubr.f32.mxu0 0.0
    %2145 = vmatmul.mubr.f32.gmra.mrb[0].mxu0 %v72
    %v2146 = vpop.f32.mrb[0].mxu0
    %v2147 = vadd.f32 0.0, %v2146
    %v2148 = vpop.f32.mrb[0].mxu0
    %2149 = vmatprep.mubr.f32.mxu0 0.0
    %2150 = vmatmul.mubr.f32.gmra.mrb[0].mxu0 %v73
    %v2151 = vpop.f32.mrb[0].mxu0
    %v2152 = vadd.f32 0.0, %v2151
    %v2153 = vpop.f32.mrb[0].mxu0
    %2154 = vmatprep.mubr.f32.mxu0 0.0
    %2155 = vmatmul.mubr.f32.gmra.mrb[0].mxu0 %v74
    %v2156 = vpop.f32.mrb[0].mxu0
    %v2157 = vadd.f32 0.0, %v2156
    %v2158 = vpop.f32.mrb[0].mxu0
    %2159 = vmatprep.mubr.f32.mxu0 0.0
    %2160 = vmatmul.mubr.f32.gmra.mrb[0].mxu0 %v75
    %v2161 = vpop.f32.mrb[0].mxu0
    %v2162 = vadd.f32 0.0, %v2161
    %v2163 = vpop.f32.mrb[0].mxu0
    %2164 = vmatprep.mubr.f32.mxu0 0.0
    %2165 = vmatmul.mubr.f32.gmra.mrb[0].mxu0 %v76
    %v2166 = vpop.f32.mrb[0].mxu0
    %v2167 = vadd.f32 0.0, %v2166
    %v2168 = vpop.f32.mrb[0].mxu0
    %2169 = vmatprep.mubr.f32.mxu0 0.0
    %2170 = vmatmul.mubr.f32.gmra.mrb[0].mxu0 %v77
    %v2171 = vpop.f32.mrb[0].mxu0
    %v2172 = vadd.f32 0.0, %v2171
    %v2173 = vpop.f32.mrb[0].mxu0
    %2174 = vmatprep.mubr.f32.mxu0 0.0
    %2175 = vmatmul.mubr.f32.gmra.mrb[0].mxu0 %v78
    %v2176 = vpop.f32.mrb[0].mxu0
    %v2177 = vadd.f32 0.0, %v2176
    %v2178 = vpop.f32.mrb[0].mxu0
    %2179 = vdwg.mxu0
    %2180 = vmatprep.subr.mxu0 0.0
    %2181 = vmatpush1.msra.mxu0 %v2102
    %2182 = vmatprep.subr.mxu0 0.0
    %2183 = vmatpush1.msra.mxu0 %v2107
    %2184 = vmatprep.subr.mxu0 0.0
    %2185 = vmatpush1.msra.mxu0 %v2112
    %2186 = vmatprep.subr.mxu0 0.0
    %2187 = vmatpush1.msra.mxu0 %v2117
    %2188 = vmatprep.subr.mxu0 0.0
    %2189 = vmatpush1.msra.mxu0 %v2122
    %2190 = vmatprep.subr.mxu0 0.0
    %2191 = vmatpush1.msra.mxu0 %v2127
    %2192 = vmatprep.subr.mxu0 0.0
    %2193 = vmatpush1.msra.mxu0 %v2132
    %2194 = vmatprep.subr.mxu0 0.0
    %2195 = vmatpush1.msra.mxu0 %v2137
    %2196 = vmatprep.subr.mxu0 0.0
    %2197 = vmatpush1.msra.mxu0 %v2142
    %2198 = vmatprep.subr.mxu0 0.0
    %2199 = vmatpush1.msra.mxu0 %v2147
    %2200 = vmatprep.subr.mxu0 0.0
    %2201 = vmatpush1.msra.mxu0 %v2152
    %2202 = vmatprep.subr.mxu0 0.0
    %2203 = vmatpush1.msra.mxu0 %v2157
    %2204 = vmatprep.subr.mxu0 0.0
    %2205 = vmatpush1.msra.mxu0 %v2162
    %2206 = vmatprep.subr.mxu0 0.0
    %2207 = vmatpush1.msra.mxu0 %v2167
    %2208 = vmatprep.subr.mxu0 0.0
    %2209 = vmatpush1.msra.mxu0 %v2172
    %2210 = vmatprep.subr.mxu0 0.0
    %2211 = vmatpush1.msra.mxu0 %v2177
    %2212 = vmatprep.subr.mxu0 0.0
    %2213 = vmatpush1.msra.mxu0 0.0
    %2214 = vmatprep.subr.mxu0 0.0
    %2215 = vmatpush1.msra.mxu0 0.0
    %2216 = vmatprep.subr.mxu0 0.0
    %2217 = vmatpush1.msra.mxu0 0.0
    %2218 = vmatprep.subr.mxu0 0.0
    %2219 = vmatpush1.msra.mxu0 0.0
    %2220 = vmatprep.subr.mxu0 0.0
    %2221 = vmatpush1.msra.mxu0 0.0
    %2222 = vmatprep.subr.mxu0 0.0
    %2223 = vmatpush1.msra.mxu0 0.0
    %2224 = vmatprep.subr.mxu0 0.0
    %2225 = vmatpush1.msra.mxu0 0.0
    %2226 = vmatprep.subr.mxu0 0.0
    %2227 = vmatpush1.msra.mxu0 0.0
    %2228 = vmatprep.subr.mxu0 0.0
    %2229 = vmatpush1.msra.mxu0 0.0
    %2230 = vmatprep.subr.mxu0 0.0
    %2231 = vmatpush1.msra.mxu0 0.0
    %2232 = vmatprep.subr.mxu0 0.0
    %2233 = vmatpush1.msra.mxu0 0.0
    %2234 = vmatprep.subr.mxu0 0.0
    %2235 = vmatpush1.msra.mxu0 0.0
    %2236 = vmatprep.subr.mxu0 0.0
    %2237 = vmatpush1.msra.mxu0 0.0
    %2238 = vmatprep.subr.mxu0 0.0
    %2239 = vmatpush1.msra.mxu0 0.0
    %2240 = vmatprep.subr.mxu0 0.0
    %2241 = vmatpush1.msra.mxu0 0.0
    %2242 = vmatprep.subr.mxu0 0.0
    %2243 = vmatpush1.msra.mxu0 0.0
    %2244 = vmatprep.mubr.f32.mxu0 0.0
    %2245 = vmatmul.mubr.f32.gmra.mrb[0].mxu0 %v63
    %v2246 = vpop.f32.mrb[0].mxu0
    %v2247 = vadd.f32 0.0, %v2246
    %v2248 = vpop.f32.mrb[0].mxu0
    %2249 = vmatprep.mubr.f32.mxu0 0.0
    %2250 = vmatmul.mubr.f32.gmra.mrb[0].mxu0 %v64
    %v2251 = vpop.f32.mrb[0].mxu0
    %v2252 = vadd.f32 0.0, %v2251
    %v2253 = vpop.f32.mrb[0].mxu0
    %2254 = vmatprep.mubr.f32.mxu0 0.0
    %2255 = vmatmul.mubr.f32.gmra.mrb[0].mxu0 %v65
    %v2256 = vpop.f32.mrb[0].mxu0
    %v2257 = vadd.f32 0.0, %v2256
    %v2258 = vpop.f32.mrb[0].mxu0
    %2259 = vmatprep.mubr.f32.mxu0 0.0
    %2260 = vmatmul.mubr.f32.gmra.mrb[0].mxu0 %v66
    %v2261 = vpop.f32.mrb[0].mxu0
    %v2262 = vadd.f32 0.0, %v2261
    %v2263 = vpop.f32.mrb[0].mxu0
    %2264 = vmatprep.mubr.f32.mxu0 0.0
    %2265 = vmatmul.mubr.f32.gmra.mrb[0].mxu0 %v67
    %v2266 = vpop.f32.mrb[0].mxu0
    %v2267 = vadd.f32 0.0, %v2266
    %v2268 = vpop.f32.mrb[0].mxu0
    %2269 = vmatprep.mubr.f32.mxu0 0.0
    %2270 = vmatmul.mubr.f32.gmra.mrb[0].mxu0 %v68
    %v2271 = vpop.f32.mrb[0].mxu0
    %v2272 = vadd.f32 0.0, %v2271
    %v2273 = vpop.f32.mrb[0].mxu0
    %2274 = vmatprep.mubr.f32.mxu0 0.0
    %2275 = vmatmul.mubr.f32.gmra.mrb[0].mxu0 %v69
    %v2276 = vpop.f32.mrb[0].mxu0
    %v2277 = vadd.f32 0.0, %v2276
    %v2278 = vpop.f32.mrb[0].mxu0
    %2279 = vmatprep.mubr.f32.mxu0 0.0
    %2280 = vmatmul.mubr.f32.gmra.mrb[0].mxu0 %v70
    %v2281 = vpop.f32.mrb[0].mxu0
    %v2282 = vadd.f32 0.0, %v2281
    %v2283 = vpop.f32.mrb[0].mxu0
    %2284 = vmatprep.mubr.f32.mxu0 0.0
    %2285 = vmatmul.mubr.f32.gmra.mrb[0].mxu0 %v71
    %v2286 = vpop.f32.mrb[0].mxu0
    %v2287 = vadd.f32 0.0, %v2286
    %v2288 = vpop.f32.mrb[0].mxu0
    %2289 = vmatprep.mubr.f32.mxu0 0.0
    %2290 = vmatmul.mubr.f32.gmra.mrb[0].mxu0 %v72
    %v2291 = vpop.f32.mrb[0].mxu0
    %v2292 = vadd.f32 0.0, %v2291
    %v2293 = vpop.f32.mrb[0].mxu0
    %2294 = vmatprep.mubr.f32.mxu0 0.0
    %2295 = vmatmul.mubr.f32.gmra.mrb[0].mxu0 %v73
    %v2296 = vpop.f32.mrb[0].mxu0
    %v2297 = vadd.f32 0.0, %v2296
    %v2298 = vpop.f32.mrb[0].mxu0
    %2299 = vmatprep.mubr.f32.mxu0 0.0
    %2300 = vmatmul.mubr.f32.gmra.mrb[0].mxu0 %v74
    %v2301 = vpop.f32.mrb[0].mxu0
    %v2302 = vadd.f32 0.0, %v2301
    %v2303 = vpop.f32.mrb[0].mxu0
    %2304 = vmatprep.mubr.f32.mxu0 0.0
    %2305 = vmatmul.mubr.f32.gmra.mrb[0].mxu0 %v75
    %v2306 = vpop.f32.mrb[0].mxu0
    %v2307 = vadd.f32 0.0, %v2306
    %v2308 = vpop.f32.mrb[0].mxu0
    %2309 = vmatprep.mubr.f32.mxu0 0.0
    %2310 = vmatmul.mubr.f32.gmra.mrb[0].mxu0 %v76
    %v2311 = vpop.f32.mrb[0].mxu0
    %v2312 = vadd.f32 0.0, %v2311
    %v2313 = vpop.f32.mrb[0].mxu0
    %2314 = vmatprep.mubr.f32.mxu0 0.0
    %2315 = vmatmul.mubr.f32.gmra.mrb[0].mxu0 %v77
    %v2316 = vpop.f32.mrb[0].mxu0
    %v2317 = vadd.f32 0.0, %v2316
    %v2318 = vpop.f32.mrb[0].mxu0
    %2319 = vmatprep.mubr.f32.mxu0 0.0
    %2320 = vmatmul.mubr.f32.gmra.mrb[0].mxu0 %v78
    %v2321 = vpop.f32.mrb[0].mxu0
    %v2322 = vadd.f32 0.0, %v2321
    %v2323 = vpop.f32.mrb[0].mxu0
    %2324 = vdwg.mxu0
    %2325 = vmatprep.subr.mxu0 0.0
    %2326 = vmatpush1.msra.mxu0 %v2247
    %2327 = vmatprep.subr.mxu0 0.0
    %2328 = vmatpush1.msra.mxu0 %v2252
    %2329 = vmatprep.subr.mxu0 0.0
    %2330 = vmatpush1.msra.mxu0 %v2257
    %2331 = vmatprep.subr.mxu0 0.0
    %2332 = vmatpush1.msra.mxu0 %v2262
    %2333 = vmatprep.subr.mxu0 0.0
    %2334 = vmatpush1.msra.mxu0 %v2267
    %2335 = vmatprep.subr.mxu0 0.0
    %2336 = vmatpush1.msra.mxu0 %v2272
    %2337 = vmatprep.subr.mxu0 0.0
    %2338 = vmatpush1.msra.mxu0 %v2277
    %2339 = vmatprep.subr.mxu0 0.0
    %2340 = vmatpush1.msra.mxu0 %v2282
    %2341 = vmatprep.subr.mxu0 0.0
    %2342 = vmatpush1.msra.mxu0 %v2287
    %2343 = vmatprep.subr.mxu0 0.0
    %2344 = vmatpush1.msra.mxu0 %v2292
    %2345 = vmatprep.subr.mxu0 0.0
    %2346 = vmatpush1.msra.mxu0 %v2297
    %2347 = vmatprep.subr.mxu0 0.0
    %2348 = vmatpush1.msra.mxu0 %v2302
    %2349 = vmatprep.subr.mxu0 0.0
    %2350 = vmatpush1.msra.mxu0 %v2307
    %2351 = vmatprep.subr.mxu0 0.0
    %2352 = vmatpush1.msra.mxu0 %v2312
    %2353 = vmatprep.subr.mxu0 0.0
    %2354 = vmatpush1.msra.mxu0 %v2317
    %2355 = vmatprep.subr.mxu0 0.0
    %2356 = vmatpush1.msra.mxu0 %v2322
    %2357 = vmatprep.subr.mxu0 0.0
    %2358 = vmatpush1.msra.mxu0 0.0
    %2359 = vmatprep.subr.mxu0 0.0
    %2360 = vmatpush1.msra.mxu0 0.0
    %2361 = vmatprep.subr.mxu0 0.0
    %2362 = vmatpush1.msra.mxu0 0.0
    %2363 = vmatprep.subr.mxu0 0.0
    %2364 = vmatpush1.msra.mxu0 0.0
    %2365 = vmatprep.subr.mxu0 0.0
    %2366 = vmatpush1.msra.mxu0 0.0
    %2367 = vmatprep.subr.mxu0 0.0
    %2368 = vmatpush1.msra.mxu0 0.0
    %2369 = vmatprep.subr.mxu0 0.0
    %2370 = vmatpush1.msra.mxu0 0.0
    %2371 = vmatprep.subr.mxu0 0.0
    %2372 = vmatpush1.msra.mxu0 0.0
    %2373 = vmatprep.subr.mxu0 0.0
    %2374 = vmatpush1.msra.mxu0 0.0
    %2375 = vmatprep.subr.mxu0 0.0
    %2376 = vmatpush1.msra.mxu0 0.0
    %2377 = vmatprep.subr.mxu0 0.0
    %2378 = vmatpush1.msra.mxu0 0.0
    %2379 = vmatprep.subr.mxu0 0.0
    %2380 = vmatpush1.msra.mxu0 0.0
    %2381 = vmatprep.subr.mxu0 0.0
    %2382 = vmatpush1.msra.mxu0 0.0
    %2383 = vmatprep.subr.mxu0 0.0
    %2384 = vmatpush1.msra.mxu0 0.0
    %2385 = vmatprep.subr.mxu0 0.0
    %2386 = vmatpush1.msra.mxu0 0.0
    %2387 = vmatprep.subr.mxu0 0.0
    %2388 = vmatpush1.msra.mxu0 0.0
    %2389 = vmatprep.mubr.f32.mxu0 0.0
    %2390 = vmatmul.mubr.f32.gmra.mrb[0].mxu0 %v63
    %v2391 = vpop.f32.mrb[0].mxu0
    %v2392 = vadd.f32 0.0, %v2391
    %v2393 = vpop.f32.mrb[0].mxu0
    %2394 = vmatprep.mubr.f32.mxu0 0.0
    %2395 = vmatmul.mubr.f32.gmra.mrb[0].mxu0 %v64
    %v2396 = vpop.f32.mrb[0].mxu0
    %v2397 = vadd.f32 0.0, %v2396
    %v2398 = vpop.f32.mrb[0].mxu0
    %2399 = vmatprep.mubr.f32.mxu0 0.0
    %2400 = vmatmul.mubr.f32.gmra.mrb[0].mxu0 %v65
    %v2401 = vpop.f32.mrb[0].mxu0
    %v2402 = vadd.f32 0.0, %v2401
    %v2403 = vpop.f32.mrb[0].mxu0
    %2404 = vmatprep.mubr.f32.mxu0 0.0
    %2405 = vmatmul.mubr.f32.gmra.mrb[0].mxu0 %v66
    %v2406 = vpop.f32.mrb[0].mxu0
    %v2407 = vadd.f32 0.0, %v2406
    %v2408 = vpop.f32.mrb[0].mxu0
    %2409 = vmatprep.mubr.f32.mxu0 0.0
    %2410 = vmatmul.mubr.f32.gmra.mrb[0].mxu0 %v67
    %v2411 = vpop.f32.mrb[0].mxu0
    %v2412 = vadd.f32 0.0, %v2411
    %v2413 = vpop.f32.mrb[0].mxu0
    %2414 = vmatprep.mubr.f32.mxu0 0.0
    %2415 = vmatmul.mubr.f32.gmra.mrb[0].mxu0 %v68
    %v2416 = vpop.f32.mrb[0].mxu0
    %v2417 = vadd.f32 0.0, %v2416
    %v2418 = vpop.f32.mrb[0].mxu0
    %2419 = vmatprep.mubr.f32.mxu0 0.0
    %2420 = vmatmul.mubr.f32.gmra.mrb[0].mxu0 %v69
    %v2421 = vpop.f32.mrb[0].mxu0
    %v2422 = vadd.f32 0.0, %v2421
    %v2423 = vpop.f32.mrb[0].mxu0
    %2424 = vmatprep.mubr.f32.mxu0 0.0
    %2425 = vmatmul.mubr.f32.gmra.mrb[0].mxu0 %v70
    %v2426 = vpop.f32.mrb[0].mxu0
    %v2427 = vadd.f32 0.0, %v2426
    %v2428 = vpop.f32.mrb[0].mxu0
    %2429 = vmatprep.mubr.f32.mxu0 0.0
    %2430 = vmatmul.mubr.f32.gmra.mrb[0].mxu0 %v71
    %v2431 = vpop.f32.mrb[0].mxu0
    %v2432 = vadd.f32 0.0, %v2431
    %v2433 = vpop.f32.mrb[0].mxu0
    %2434 = vmatprep.mubr.f32.mxu0 0.0
    %2435 = vmatmul.mubr.f32.gmra.mrb[0].mxu0 %v72
    %v2436 = vpop.f32.mrb[0].mxu0
    %v2437 = vadd.f32 0.0, %v2436
    %v2438 = vpop.f32.mrb[0].mxu0
    %2439 = vmatprep.mubr.f32.mxu0 0.0
    %2440 = vmatmul.mubr.f32.gmra.mrb[0].mxu0 %v73
    %v2441 = vpop.f32.mrb[0].mxu0
    %v2442 = vadd.f32 0.0, %v2441
    %v2443 = vpop.f32.mrb[0].mxu0
    %2444 = vmatprep.mubr.f32.mxu0 0.0
    %2445 = vmatmul.mubr.f32.gmra.mrb[0].mxu0 %v74
    %v2446 = vpop.f32.mrb[0].mxu0
    %v2447 = vadd.f32 0.0, %v2446
    %v2448 = vpop.f32.mrb[0].mxu0
    %2449 = vmatprep.mubr.f32.mxu0 0.0
    %2450 = vmatmul.mubr.f32.gmra.mrb[0].mxu0 %v75
    %v2451 = vpop.f32.mrb[0].mxu0
    %v2452 = vadd.f32 0.0, %v2451
    %v2453 = vpop.f32.mrb[0].mxu0
    %2454 = vmatprep.mubr.f32.mxu0 0.0
    %2455 = vmatmul.mubr.f32.gmra.mrb[0].mxu0 %v76
    %v2456 = vpop.f32.mrb[0].mxu0
    %v2457 = vadd.f32 0.0, %v2456
    %v2458 = vpop.f32.mrb[0].mxu0
    %2459 = vmatprep.mubr.f32.mxu0 0.0
    %2460 = vmatmul.mubr.f32.gmra.mrb[0].mxu0 %v77
    %v2461 = vpop.f32.mrb[0].mxu0
    %v2462 = vadd.f32 0.0, %v2461
    %v2463 = vpop.f32.mrb[0].mxu0
    %2464 = vmatprep.mubr.f32.mxu0 0.0
    %2465 = vmatmul.mubr.f32.gmra.mrb[0].mxu0 %v78
    %v2466 = vpop.f32.mrb[0].mxu0
    %v2467 = vadd.f32 0.0, %v2466
    %v2468 = vpop.f32.mrb[0].mxu0
    %2469 = vdwg.mxu0
    %v2470 = vsub.f32 %v1764, %v2392
    %v2471 = vsub.f32 %v1769, %v2397
    %v2472 = vsub.f32 %v1774, %v2402
    %v2473 = vsub.f32 %v1779, %v2407
    %v2474 = vsub.f32 %v1784, %v2412
    %v2475 = vsub.f32 %v1789, %v2417
    %v2476 = vsub.f32 %v1794, %v2422
    %v2477 = vsub.f32 %v1799, %v2427
    %v2478 = vsub.f32 %v1804, %v2432
    %v2479 = vsub.f32 %v1809, %v2437
    %v2480 = vsub.f32 %v1814, %v2442
    %v2481 = vsub.f32 %v1819, %v2447
    %v2482 = vsub.f32 %v1824, %v2452
    %v2483 = vsub.f32 %v1829, %v2457
    %v2484 = vsub.f32 %v1834, %v2462
    %v2485 = vsub.f32 %v1839, %v2467
    %v2486 = vand.u32 2147483647, %v2470
    %v2487 = vand.u32 2147483647, %v2471
    %v2488 = vand.u32 2147483647, %v2472
    %v2489 = vand.u32 2147483647, %v2473
    %v2490 = vand.u32 2147483647, %v2474
    %v2491 = vand.u32 2147483647, %v2475
    %v2492 = vand.u32 2147483647, %v2476
    %v2493 = vand.u32 2147483647, %v2477
    %v2494 = vand.u32 2147483647, %v2478
    %v2495 = vand.u32 2147483647, %v2479
    %v2496 = vand.u32 2147483647, %v2480
    %v2497 = vand.u32 2147483647, %v2481
    %v2498 = vand.u32 2147483647, %v2482
    %v2499 = vand.u32 2147483647, %v2483
    %v2500 = vand.u32 2147483647, %v2484
    %v2501 = vand.u32 2147483647, %v2485
    %2518 = vrot.lane.b32.xlu0 %v2486, 32
    %v2519 = vpop.permute.xlu0 %2518
    %2520 = vrot.lane.b32.xlu0 %v2487, 32
    %v2521 = vpop.permute.xlu0 %2520
    %2522 = vrot.lane.b32.xlu0 %v2488, 32
    %v2523 = vpop.permute.xlu0 %2522
    %2524 = vrot.lane.b32.xlu0 %v2489, 32
    %v2525 = vpop.permute.xlu0 %2524
    %2526 = vrot.lane.b32.xlu0 %v2490, 32
    %v2527 = vpop.permute.xlu0 %2526
    %2528 = vrot.lane.b32.xlu0 %v2491, 32
    %v2529 = vpop.permute.xlu0 %2528
    %2530 = vrot.lane.b32.xlu0 %v2492, 32
    %v2531 = vpop.permute.xlu0 %2530
    %2532 = vrot.lane.b32.xlu0 %v2493, 32
    %v2533 = vpop.permute.xlu0 %2532
    %2534 = vrot.lane.b32.xlu0 %v2494, 32
    %v2535 = vpop.permute.xlu0 %2534
    %2536 = vrot.lane.b32.xlu0 %v2495, 32
    %v2537 = vpop.permute.xlu0 %2536
    %2538 = vrot.lane.b32.xlu0 %v2496, 32
    %v2539 = vpop.permute.xlu0 %2538
    %2540 = vrot.lane.b32.xlu0 %v2497, 32
    %v2541 = vpop.permute.xlu0 %2540
    %2542 = vrot.lane.b32.xlu0 %v2498, 32
    %v2543 = vpop.permute.xlu0 %2542
    %2544 = vrot.lane.b32.xlu0 %v2499, 32
    %v2545 = vpop.permute.xlu0 %2544
    %2546 = vrot.lane.b32.xlu0 %v2500, 32
    %v2547 = vpop.permute.xlu0 %2546
    %2548 = vrot.lane.b32.xlu0 %v2501, 32
    %v2549 = vpop.permute.xlu0 %2548
    %2566 = vst.msk [vmem:[#allocation2 + $0x8] sm:$0xff] %vm906, %v2519
    %2567 = vst.msk [vmem:[#allocation2 + $0x18] sm:$0xff] %vm906, %v2521
    %2568 = vst.msk [vmem:[#allocation2 + $0x28] sm:$0xff] %vm906, %v2523
    %2569 = vst.msk [vmem:[#allocation2 + $0x38] sm:$0xff] %vm906, %v2525
    %2570 = vst.msk [vmem:[#allocation2 + $0x48] sm:$0xff] %vm906, %v2527
    %2571 = vst.msk [vmem:[#allocation2 + $0x58] sm:$0xff] %vm906, %v2529
    %2572 = vst.msk [vmem:[#allocation2 + $0x68] sm:$0xff] %vm906, %v2531
    %2573 = vst.msk [vmem:[#allocation2 + $0x78] sm:$0xff] %vm906, %v2533
    %2574 = vst.msk [vmem:[#allocation2 + $0x88] sm:$0xff] %vm906, %v2535
    %2575 = vst.msk [vmem:[#allocation2 + $0x98] sm:$0xff] %vm906, %v2537
    %2576 = vst.msk [vmem:[#allocation2 + $0xa8] sm:$0xff] %vm906, %v2539
    %2577 = vst.msk [vmem:[#allocation2 + $0xb8] sm:$0xff] %vm906, %v2541
    %2578 = vst.msk [vmem:[#allocation2 + $0xc8] sm:$0xff] %vm906, %v2543
    %2579 = vst.msk [vmem:[#allocation2 + $0xd8] sm:$0xff] %vm906, %v2545
    %2580 = vst.msk [vmem:[#allocation2 + $0xe8] sm:$0xff] %vm906, %v2547
    %2581 = vst.msk [vmem:[#allocation2 + $0xf8] sm:$0xff] %vm906, %v2549
    %v2582 = vld [vmem:[#allocation2] sm:$0xff]
    %v2583 = vld [vmem:[#allocation2 + $0x8] sm:$0xff]
    %v2584 = vld [vmem:[#allocation2 + $0x10] sm:$0xff]
    %v2585 = vld [vmem:[#allocation2 + $0x18] sm:$0xff]
    %v2586 = vld [vmem:[#allocation2 + $0x20] sm:$0xff]
    %v2587 = vld [vmem:[#allocation2 + $0x28] sm:$0xff]
    %v2588 = vld [vmem:[#allocation2 + $0x30] sm:$0xff]
    %v2589 = vld [vmem:[#allocation2 + $0x38] sm:$0xff]
    %v2590 = vld [vmem:[#allocation2 + $0x40] sm:$0xff]
    %v2591 = vld [vmem:[#allocation2 + $0x48] sm:$0xff]
    %v2592 = vld [vmem:[#allocation2 + $0x50] sm:$0xff]
    %v2593 = vld [vmem:[#allocation2 + $0x58] sm:$0xff]
    %v2594 = vld [vmem:[#allocation2 + $0x60] sm:$0xff]
    %v2595 = vld [vmem:[#allocation2 + $0x68] sm:$0xff]
    %v2596 = vld [vmem:[#allocation2 + $0x70] sm:$0xff]
    %v2597 = vld [vmem:[#allocation2 + $0x78] sm:$0xff]
    %v2598 = vld [vmem:[#allocation2 + $0x80] sm:$0xff]
    %v2599 = vld [vmem:[#allocation2 + $0x88] sm:$0xff]
    %v2600 = vld [vmem:[#allocation2 + $0x90] sm:$0xff]
    %v2601 = vld [vmem:[#allocation2 + $0x98] sm:$0xff]
    %v2602 = vld [vmem:[#allocation2 + $0xa0] sm:$0xff]
    %v2603 = vld [vmem:[#allocation2 + $0xa8] sm:$0xff]
    %v2604 = vld [vmem:[#allocation2 + $0xb0] sm:$0xff]
    %v2605 = vld [vmem:[#allocation2 + $0xb8] sm:$0xff]
    %v2606 = vld [vmem:[#allocation2 + $0xc0] sm:$0xff]
    %v2607 = vld [vmem:[#allocation2 + $0xc8] sm:$0xff]
    %v2608 = vld [vmem:[#allocation2 + $0xd0] sm:$0xff]
    %v2609 = vld [vmem:[#allocation2 + $0xd8] sm:$0xff]
    %v2610 = vld [vmem:[#allocation2 + $0xe0] sm:$0xff]
    %v2611 = vld [vmem:[#allocation2 + $0xe8] sm:$0xff]
    %v2612 = vld [vmem:[#allocation2 + $0xf0] sm:$0xff]
    %v2613 = vld [vmem:[#allocation2 + $0xf8] sm:$0xff]
    %vm2614 = vcmp.gt.f32.partialorder %v2582, 0.0
    %vm2615 = vcmp.gt.f32.partialorder %v2583, 0.0
    %vm2616 = vcmp.gt.f32.partialorder %v2584, 0.0
    %vm2617 = vcmp.gt.f32.partialorder %v2585, 0.0
    %vm2618 = vcmp.gt.f32.partialorder %v2586, 0.0
    %vm2619 = vcmp.gt.f32.partialorder %v2587, 0.0
    %vm2620 = vcmp.gt.f32.partialorder %v2588, 0.0
    %vm2621 = vcmp.gt.f32.partialorder %v2589, 0.0
    %vm2622 = vcmp.gt.f32.partialorder %v2590, 0.0
    %vm2623 = vcmp.gt.f32.partialorder %v2591, 0.0
    %vm2624 = vcmp.gt.f32.partialorder %v2592, 0.0
    %vm2625 = vcmp.gt.f32.partialorder %v2593, 0.0
    %vm2626 = vcmp.gt.f32.partialorder %v2594, 0.0
    %vm2627 = vcmp.gt.f32.partialorder %v2595, 0.0
    %vm2628 = vcmp.gt.f32.partialorder %v2596, 0.0
    %vm2629 = vcmp.gt.f32.partialorder %v2597, 0.0
    %vm2630 = vcmp.gt.f32.partialorder %v2598, 0.0
    %vm2631 = vcmp.gt.f32.partialorder %v2599, 0.0
    %vm2632 = vcmp.gt.f32.partialorder %v2600, 0.0
    %vm2633 = vcmp.gt.f32.partialorder %v2601, 0.0
    %vm2634 = vcmp.gt.f32.partialorder %v2602, 0.0
    %vm2635 = vcmp.gt.f32.partialorder %v2603, 0.0
    %vm2636 = vcmp.gt.f32.partialorder %v2604, 0.0
    %vm2637 = vcmp.gt.f32.partialorder %v2605, 0.0
    %vm2638 = vcmp.gt.f32.partialorder %v2606, 0.0
    %vm2639 = vcmp.gt.f32.partialorder %v2607, 0.0
    %vm2640 = vcmp.gt.f32.partialorder %v2608, 0.0
    %vm2641 = vcmp.gt.f32.partialorder %v2609, 0.0
    %vm2642 = vcmp.gt.f32.partialorder %v2610, 0.0
    %vm2643 = vcmp.gt.f32.partialorder %v2611, 0.0
    %vm2644 = vcmp.gt.f32.partialorder %v2612, 0.0
    %vm2645 = vcmp.gt.f32.partialorder %v2613, 0.0
    %v2646 = vmul.f32 %v2582, 0.1
    %v2647 = vmul.f32 %v2583, 0.1
    %v2648 = vmul.f32 %v2584, 0.1
    %v2649 = vmul.f32 %v2585, 0.1
    %v2650 = vmul.f32 %v2586, 0.1
    %v2651 = vmul.f32 %v2587, 0.1
    %v2652 = vmul.f32 %v2588, 0.1
    %v2653 = vmul.f32 %v2589, 0.1
    %v2654 = vmul.f32 %v2590, 0.1
    %v2655 = vmul.f32 %v2591, 0.1
    %v2656 = vmul.f32 %v2592, 0.1
    %v2657 = vmul.f32 %v2593, 0.1
    %v2658 = vmul.f32 %v2594, 0.1
    %v2659 = vmul.f32 %v2595, 0.1
    %v2660 = vmul.f32 %v2596, 0.1
    %v2661 = vmul.f32 %v2597, 0.1
    %v2662 = vmul.f32 %v2598, 0.1
    %v2663 = vmul.f32 %v2599, 0.1
    %v2664 = vmul.f32 %v2600, 0.1
    %v2665 = vmul.f32 %v2601, 0.1
    %v2666 = vmul.f32 %v2602, 0.1
    %v2667 = vmul.f32 %v2603, 0.1
    %v2668 = vmul.f32 %v2604, 0.1
    %v2669 = vmul.f32 %v2605, 0.1
    %v2670 = vmul.f32 %v2606, 0.1
    %v2671 = vmul.f32 %v2607, 0.1
    %v2672 = vmul.f32 %v2608, 0.1
    %v2673 = vmul.f32 %v2609, 0.1
    %v2674 = vmul.f32 %v2610, 0.1
    %v2675 = vmul.f32 %v2611, 0.1
    %v2676 = vmul.f32 %v2612, 0.1
    %v2677 = vmul.f32 %v2613, 0.1
    %v2678 = vsel %vm2614, %v2582, %v2646
    %v2679 = vsel %vm2615, %v2583, %v2647
    %v2680 = vsel %vm2616, %v2584, %v2648
    %v2681 = vsel %vm2617, %v2585, %v2649
    %v2682 = vsel %vm2618, %v2586, %v2650
    %v2683 = vsel %vm2619, %v2587, %v2651
    %v2684 = vsel %vm2620, %v2588, %v2652
    %v2685 = vsel %vm2621, %v2589, %v2653
    %v2686 = vsel %vm2622, %v2590, %v2654
    %v2687 = vsel %vm2623, %v2591, %v2655
    %v2688 = vsel %vm2624, %v2592, %v2656
    %v2689 = vsel %vm2625, %v2593, %v2657
    %v2690 = vsel %vm2626, %v2594, %v2658
    %v2691 = vsel %vm2627, %v2595, %v2659
    %v2692 = vsel %vm2628, %v2596, %v2660
    %v2693 = vsel %vm2629, %v2597, %v2661
    %v2694 = vsel %vm2630, %v2598, %v2662
    %v2695 = vsel %vm2631, %v2599, %v2663
    %v2696 = vsel %vm2632, %v2600, %v2664
    %v2697 = vsel %vm2633, %v2601, %v2665
    %v2698 = vsel %vm2634, %v2602, %v2666
    %v2699 = vsel %vm2635, %v2603, %v2667
    %v2700 = vsel %vm2636, %v2604, %v2668
    %v2701 = vsel %vm2637, %v2605, %v2669
    %v2702 = vsel %vm2638, %v2606, %v2670
    %v2703 = vsel %vm2639, %v2607, %v2671
    %v2704 = vsel %vm2640, %v2608, %v2672
    %v2705 = vsel %vm2641, %v2609, %v2673
    %v2706 = vsel %vm2642, %v2610, %v2674
    %v2707 = vsel %vm2643, %v2611, %v2675
    %v2708 = vsel %vm2644, %v2612, %v2676
    %v2709 = vsel %vm2645, %v2613, %v2677
    %v2710 = vld [vmem:[%s5] sm:$0xff]
    %v2711 = vld [vmem:[%s5 + $0x8] sm:$0xff]
    %v2712 = vld [vmem:[%s5 + $0x10] sm:$0xff]
    %v2713 = vld [vmem:[%s5 + $0x18] sm:$0xff]
    %v2714 = vld [vmem:[%s5 + $0x20] sm:$0xff]
    %v2715 = vld [vmem:[%s5 + $0x28] sm:$0xff]
    %v2716 = vld [vmem:[%s5 + $0x30] sm:$0xff]
    %v2717 = vld [vmem:[%s5 + $0x38] sm:$0xff]
    %v2718 = vld [vmem:[%s5 + $0x40] sm:$0xff]
    %v2719 = vld [vmem:[%s5 + $0x48] sm:$0xff]
    %v2720 = vld [vmem:[%s5 + $0x50] sm:$0xff]
    %v2721 = vld [vmem:[%s5 + $0x58] sm:$0xff]
    %v2722 = vld [vmem:[%s5 + $0x60] sm:$0xff]
    %v2723 = vld [vmem:[%s5 + $0x68] sm:$0xff]
    %v2724 = vld [vmem:[%s5 + $0x70] sm:$0xff]
    %v2725 = vld [vmem:[%s5 + $0x78] sm:$0xff]
    %v2726 = vld [vmem:[%s5 + $0x80] sm:$0xff]
    %v2727 = vld [vmem:[%s5 + $0x88] sm:$0xff]
    %v2728 = vld [vmem:[%s5 + $0x90] sm:$0xff]
    %v2729 = vld [vmem:[%s5 + $0x98] sm:$0xff]
    %v2730 = vld [vmem:[%s5 + $0xa0] sm:$0xff]
    %v2731 = vld [vmem:[%s5 + $0xa8] sm:$0xff]
    %v2732 = vld [vmem:[%s5 + $0xb0] sm:$0xff]
    %v2733 = vld [vmem:[%s5 + $0xb8] sm:$0xff]
    %vm2734 = vcmask 523264
    %v2736 = vsel %vm2734, %v2679, 0
    %v2739 = vsel %vm2734, %v2681, 0
    %v2742 = vsel %vm2734, %v2683, 0
    %v2745 = vsel %vm2734, %v2685, 0
    %v2748 = vsel %vm2734, %v2687, 0
    %v2751 = vsel %vm2734, %v2689, 0
    %v2754 = vsel %vm2734, %v2691, 0
    %v2757 = vsel %vm2734, %v2693, 0
    %v2760 = vsel %vm2734, %v2695, 0
    %v2763 = vsel %vm2734, %v2697, 0
    %v2766 = vsel %vm2734, %v2699, 0
    %v2769 = vsel %vm2734, %v2701, 0
    %v2772 = vsel %vm2734, %v2703, 0
    %v2775 = vsel %vm2734, %v2705, 0
    %v2778 = vsel %vm2734, %v2707, 0
    %v2781 = vsel %vm2734, %v2709, 0
    %2783 = vmatprep.subr.mxu0 0.0
    %2784 = vmatpush1.msra.mxu0 %v2710
    %2785 = vmatprep.subr.mxu0 0.0
    %2786 = vmatpush1.msra.mxu0 %v2711
    %2787 = vmatprep.subr.mxu0 0.0
    %2788 = vmatpush1.msra.mxu0 %v2712
    %2789 = vmatprep.subr.mxu0 0.0
    %2790 = vmatpush1.msra.mxu0 %v2713
    %2791 = vmatprep.subr.mxu0 0.0
    %2792 = vmatpush1.msra.mxu0 %v2714
    %2793 = vmatprep.subr.mxu0 0.0
    %2794 = vmatpush1.msra.mxu0 %v2715
    %2795 = vmatprep.subr.mxu0 0.0
    %2796 = vmatpush1.msra.mxu0 %v2716
    %2797 = vmatprep.subr.mxu0 0.0
    %2798 = vmatpush1.msra.mxu0 %v2717
    %2799 = vmatprep.subr.mxu0 0.0
    %2800 = vmatpush1.msra.mxu0 %v2718
    %2801 = vmatprep.subr.mxu0 0.0
    %2802 = vmatpush1.msra.mxu0 %v2719
    %2803 = vmatprep.subr.mxu0 0.0
    %2804 = vmatpush1.msra.mxu0 %v2720
    %2805 = vmatprep.subr.mxu0 0.0
    %2806 = vmatpush1.msra.mxu0 %v2721
    %2807 = vmatprep.subr.mxu0 0.0
    %2808 = vmatpush1.msra.mxu0 %v2722
    %2809 = vmatprep.subr.mxu0 0.0
    %2810 = vmatpush1.msra.mxu0 %v2723
    %2811 = vmatprep.subr.mxu0 0.0
    %2812 = vmatpush1.msra.mxu0 %v2724
    %2813 = vmatprep.subr.mxu0 0.0
    %2814 = vmatpush1.msra.mxu0 %v2725
    %2815 = vmatprep.subr.mxu0 0.0
    %2816 = vmatpush1.msra.mxu0 %v2726
    %2817 = vmatprep.subr.mxu0 0.0
    %2818 = vmatpush1.msra.mxu0 %v2727
    %2819 = vmatprep.subr.mxu0 0.0
    %2820 = vmatpush1.msra.mxu0 %v2728
    %2821 = vmatprep.subr.mxu0 0.0
    %2822 = vmatpush1.msra.mxu0 %v2729
    %2823 = vmatprep.subr.mxu0 0.0
    %2824 = vmatpush1.msra.mxu0 %v2730
    %2825 = vmatprep.subr.mxu0 0.0
    %2826 = vmatpush1.msra.mxu0 %v2731
    %2827 = vmatprep.subr.mxu0 0.0
    %2828 = vmatpush1.msra.mxu0 %v2732
    %2829 = vmatprep.subr.mxu0 0.0
    %2830 = vmatpush1.msra.mxu0 %v2733
    %2831 = vmatprep.subr.mxu0 0.0
    %2832 = vmatpush1.msra.mxu0 0.0
    %2833 = vmatprep.subr.mxu0 0.0
    %2834 = vmatpush1.msra.mxu0 0.0
    %2835 = vmatprep.subr.mxu0 0.0
    %2836 = vmatpush1.msra.mxu0 0.0
    %2837 = vmatprep.subr.mxu0 0.0
    %2838 = vmatpush1.msra.mxu0 0.0
    %2839 = vmatprep.subr.mxu0 0.0
    %2840 = vmatpush1.msra.mxu0 0.0
    %2841 = vmatprep.subr.mxu0 0.0
    %2842 = vmatpush1.msra.mxu0 0.0
    %2843 = vmatprep.subr.mxu0 0.0
    %2844 = vmatpush1.msra.mxu0 0.0
    %2845 = vmatprep.subr.mxu0 0.0
    %2846 = vmatpush1.msra.mxu0 0.0
    %2847 = vmatprep.mubr.f32.mxu0 %v2736
    %2848 = vmatmul.mubr.f32.gmra.mrb[0].mxu0 %v2678
    %v2849 = vpop.f32.mrb[0].mxu0
    %v2850 = vadd.f32 0.0, %v2849
    %v2851 = vpop.f32.mrb[0].mxu0
    %2852 = vmatprep.mubr.f32.mxu0 %v2739
    %2853 = vmatmul.mubr.f32.gmra.mrb[0].mxu0 %v2680
    %v2854 = vpop.f32.mrb[0].mxu0
    %v2855 = vadd.f32 0.0, %v2854
    %v2856 = vpop.f32.mrb[0].mxu0
    %2857 = vmatprep.mubr.f32.mxu0 %v2742
    %2858 = vmatmul.mubr.f32.gmra.mrb[0].mxu0 %v2682
    %v2859 = vpop.f32.mrb[0].mxu0
    %v2860 = vadd.f32 0.0, %v2859
    %v2861 = vpop.f32.mrb[0].mxu0
    %2862 = vmatprep.mubr.f32.mxu0 %v2745
    %2863 = vmatmul.mubr.f32.gmra.mrb[0].mxu0 %v2684
    %v2864 = vpop.f32.mrb[0].mxu0
    %v2865 = vadd.f32 0.0, %v2864
    %v2866 = vpop.f32.mrb[0].mxu0
    %2867 = vmatprep.mubr.f32.mxu0 %v2748
    %2868 = vmatmul.mubr.f32.gmra.mrb[0].mxu0 %v2686
    %v2869 = vpop.f32.mrb[0].mxu0
    %v2870 = vadd.f32 0.0, %v2869
    %v2871 = vpop.f32.mrb[0].mxu0
    %2872 = vmatprep.mubr.f32.mxu0 %v2751
    %2873 = vmatmul.mubr.f32.gmra.mrb[0].mxu0 %v2688
    %v2874 = vpop.f32.mrb[0].mxu0
    %v2875 = vadd.f32 0.0, %v2874
    %v2876 = vpop.f32.mrb[0].mxu0
    %2877 = vmatprep.mubr.f32.mxu0 %v2754
    %2878 = vmatmul.mubr.f32.gmra.mrb[0].mxu0 %v2690
    %v2879 = vpop.f32.mrb[0].mxu0
    %v2880 = vadd.f32 0.0, %v2879
    %v2881 = vpop.f32.mrb[0].mxu0
    %2882 = vmatprep.mubr.f32.mxu0 %v2757
    %2883 = vmatmul.mubr.f32.gmra.mrb[0].mxu0 %v2692
    %v2884 = vpop.f32.mrb[0].mxu0
    %v2885 = vadd.f32 0.0, %v2884
    %v2886 = vpop.f32.mrb[0].mxu0
    %2887 = vmatprep.mubr.f32.mxu0 %v2760
    %2888 = vmatmul.mubr.f32.gmra.mrb[0].mxu0 %v2694
    %v2889 = vpop.f32.mrb[0].mxu0
    %v2890 = vadd.f32 0.0, %v2889
    %v2891 = vpop.f32.mrb[0].mxu0
    %2892 = vmatprep.mubr.f32.mxu0 %v2763
    %2893 = vmatmul.mubr.f32.gmra.mrb[0].mxu0 %v2696
    %v2894 = vpop.f32.mrb[0].mxu0
    %v2895 = vadd.f32 0.0, %v2894
    %v2896 = vpop.f32.mrb[0].mxu0
    %2897 = vmatprep.mubr.f32.mxu0 %v2766
    %2898 = vmatmul.mubr.f32.gmra.mrb[0].mxu0 %v2698
    %v2899 = vpop.f32.mrb[0].mxu0
    %v2900 = vadd.f32 0.0, %v2899
    %v2901 = vpop.f32.mrb[0].mxu0
    %2902 = vmatprep.mubr.f32.mxu0 %v2769
    %2903 = vmatmul.mubr.f32.gmra.mrb[0].mxu0 %v2700
    %v2904 = vpop.f32.mrb[0].mxu0
    %v2905 = vadd.f32 0.0, %v2904
    %v2906 = vpop.f32.mrb[0].mxu0
    %2907 = vmatprep.mubr.f32.mxu0 %v2772
    %2908 = vmatmul.mubr.f32.gmra.mrb[0].mxu0 %v2702
    %v2909 = vpop.f32.mrb[0].mxu0
    %v2910 = vadd.f32 0.0, %v2909
    %v2911 = vpop.f32.mrb[0].mxu0
    %2912 = vmatprep.mubr.f32.mxu0 %v2775
    %2913 = vmatmul.mubr.f32.gmra.mrb[0].mxu0 %v2704
    %v2914 = vpop.f32.mrb[0].mxu0
    %v2915 = vadd.f32 0.0, %v2914
    %v2916 = vpop.f32.mrb[0].mxu0
    %2917 = vmatprep.mubr.f32.mxu0 %v2778
    %2918 = vmatmul.mubr.f32.gmra.mrb[0].mxu0 %v2706
    %v2919 = vpop.f32.mrb[0].mxu0
    %v2920 = vadd.f32 0.0, %v2919
    %v2921 = vpop.f32.mrb[0].mxu0
    %2922 = vmatprep.mubr.f32.mxu0 %v2781
    %2923 = vmatmul.mubr.f32.gmra.mrb[0].mxu0 %v2708
    %v2924 = vpop.f32.mrb[0].mxu0
    %v2925 = vadd.f32 0.0, %v2924
    %v2926 = vpop.f32.mrb[0].mxu0
    %2927 = vdwg.mxu0
    %2929 = vset.pattern.permute.xlu0 0
    %2930 = vperm.xlu0 %2929, %v458
    %v2931 = vpop.permute.xlu0 %2930
    %2934 = vset.pattern.permute.xlu0 0
    %2935 = vperm.xlu0 %2934, %v463
    %v2936 = vpop.permute.xlu0 %2935
    %2939 = vset.pattern.permute.xlu0 0
    %2940 = vperm.xlu0 %2939, %v468
    %v2941 = vpop.permute.xlu0 %2940
    %2944 = vset.pattern.permute.xlu0 0
    %2945 = vperm.xlu0 %2944, %v473
    %v2946 = vpop.permute.xlu0 %2945
    %2949 = vset.pattern.permute.xlu0 0
    %2950 = vperm.xlu0 %2949, %v478
    %v2951 = vpop.permute.xlu0 %2950
    %2954 = vset.pattern.permute.xlu0 0
    %2955 = vperm.xlu0 %2954, %v483
    %v2956 = vpop.permute.xlu0 %2955
    %2959 = vset.pattern.permute.xlu0 0
    %2960 = vperm.xlu0 %2959, %v488
    %v2961 = vpop.permute.xlu0 %2960
    %2964 = vset.pattern.permute.xlu0 0
    %2965 = vperm.xlu0 %2964, %v493
    %v2966 = vpop.permute.xlu0 %2965
    %2969 = vset.pattern.permute.xlu0 0
    %2970 = vperm.xlu0 %2969, %v498
    %v2971 = vpop.permute.xlu0 %2970
    %2974 = vset.pattern.permute.xlu0 0
    %2975 = vperm.xlu0 %2974, %v503
    %v2976 = vpop.permute.xlu0 %2975
    %2979 = vset.pattern.permute.xlu0 0
    %2980 = vperm.xlu0 %2979, %v508
    %v2981 = vpop.permute.xlu0 %2980
    %2984 = vset.pattern.permute.xlu0 0
    %2985 = vperm.xlu0 %2984, %v513
    %v2986 = vpop.permute.xlu0 %2985
    %2989 = vset.pattern.permute.xlu0 0
    %2990 = vperm.xlu0 %2989, %v518
    %v2991 = vpop.permute.xlu0 %2990
    %2994 = vset.pattern.permute.xlu0 0
    %2995 = vperm.xlu0 %2994, %v523
    %v2996 = vpop.permute.xlu0 %2995
    %2999 = vset.pattern.permute.xlu0 0
    %3000 = vperm.xlu0 %2999, %v528
    %v3001 = vpop.permute.xlu0 %3000
    %3004 = vset.pattern.permute.xlu0 0
    %3005 = vperm.xlu0 %3004, %v533
    %v3006 = vpop.permute.xlu0 %3005
    %v3008 = vadd.f32 %v2931, %v2850
    %v3009 = vadd.f32 %v2936, %v2855
    %v3010 = vadd.f32 %v2941, %v2860
    %v3011 = vadd.f32 %v2946, %v2865
    %v3012 = vadd.f32 %v2951, %v2870
    %v3013 = vadd.f32 %v2956, %v2875
    %v3014 = vadd.f32 %v2961, %v2880
    %v3015 = vadd.f32 %v2966, %v2885
    %v3016 = vadd.f32 %v2971, %v2890
    %v3017 = vadd.f32 %v2976, %v2895
    %v3018 = vadd.f32 %v2981, %v2900
    %v3019 = vadd.f32 %v2986, %v2905
    %v3020 = vadd.f32 %v2991, %v2910
    %v3021 = vadd.f32 %v2996, %v2915
    %v3022 = vadd.f32 %v3001, %v2920
    %v3023 = vadd.f32 %v3006, %v2925
    %vm3024 = vcmask 48128
    %v3025 = vsel %vm3024, %v3008, -inf
    %3026 = vmax.xlane.f32.xlu0 %v3025
    %v3027 = vpop.xlane.xlu0 %3026
    %v3028 = vsel %vm3024, %v3009, -inf
    %3029 = vmax.xlane.f32.xlu0 %v3028
    %v3030 = vpop.xlane.xlu0 %3029
    %v3031 = vsel %vm3024, %v3010, -inf
    %3032 = vmax.xlane.f32.xlu0 %v3031
    %v3033 = vpop.xlane.xlu0 %3032
    %v3034 = vsel %vm3024, %v3011, -inf
    %3035 = vmax.xlane.f32.xlu0 %v3034
    %v3036 = vpop.xlane.xlu0 %3035
    %v3037 = vsel %vm3024, %v3012, -inf
    %3038 = vmax.xlane.f32.xlu0 %v3037
    %v3039 = vpop.xlane.xlu0 %3038
    %v3040 = vsel %vm3024, %v3013, -inf
    %3041 = vmax.xlane.f32.xlu0 %v3040
    %v3042 = vpop.xlane.xlu0 %3041
    %v3043 = vsel %vm3024, %v3014, -inf
    %3044 = vmax.xlane.f32.xlu0 %v3043
    %v3045 = vpop.xlane.xlu0 %3044
    %v3046 = vsel %vm3024, %v3015, -inf
    %3047 = vmax.xlane.f32.xlu0 %v3046
    %v3048 = vpop.xlane.xlu0 %3047
    %v3049 = vsel %vm3024, %v3016, -inf
    %3050 = vmax.xlane.f32.xlu0 %v3049
    %v3051 = vpop.xlane.xlu0 %3050
    %v3052 = vsel %vm3024, %v3017, -inf
    %3053 = vmax.xlane.f32.xlu0 %v3052
    %v3054 = vpop.xlane.xlu0 %3053
    %v3055 = vsel %vm3024, %v3018, -inf
    %3056 = vmax.xlane.f32.xlu0 %v3055
    %v3057 = vpop.xlane.xlu0 %3056
    %v3058 = vsel %vm3024, %v3019, -inf
    %3059 = vmax.xlane.f32.xlu0 %v3058
    %v3060 = vpop.xlane.xlu0 %3059
    %v3061 = vsel %vm3024, %v3020, -inf
    %3062 = vmax.xlane.f32.xlu0 %v3061
    %v3063 = vpop.xlane.xlu0 %3062
    %v3064 = vsel %vm3024, %v3021, -inf
    %3065 = vmax.xlane.f32.xlu0 %v3064
    %v3066 = vpop.xlane.xlu0 %3065
    %v3067 = vsel %vm3024, %v3022, -inf
    %3068 = vmax.xlane.f32.xlu0 %v3067
    %v3069 = vpop.xlane.xlu0 %3068
    %v3070 = vsel %vm3024, %v3023, -inf
    %3071 = vmax.xlane.f32.xlu0 %v3070
    %v3072 = vpop.xlane.xlu0 %3071
    %v3073 = vsub.f32 %v3008, %v3027
    %v3074 = vsub.f32 %v3009, %v3030
    %v3075 = vsub.f32 %v3010, %v3033
    %v3076 = vsub.f32 %v3011, %v3036
    %v3077 = vsub.f32 %v3012, %v3039
    %v3078 = vsub.f32 %v3013, %v3042
    %v3079 = vsub.f32 %v3014, %v3045
    %v3080 = vsub.f32 %v3015, %v3048
    %v3081 = vsub.f32 %v3016, %v3051
    %v3082 = vsub.f32 %v3017, %v3054
    %v3083 = vsub.f32 %v3018, %v3057
    %v3084 = vsub.f32 %v3019, %v3060
    %v3085 = vsub.f32 %v3020, %v3063
    %v3086 = vsub.f32 %v3021, %v3066
    %v3087 = vsub.f32 %v3022, %v3069
    %v3088 = vsub.f32 %v3023, %v3072
    %v3089 = vmul.f32 %v3073, 1.442695
    %v3090 = vpow.pop %v3089
    %v3091 = vmul.f32 %v3074, 1.442695
    %v3092 = vpow.pop %v3091
    %v3093 = vmul.f32 %v3075, 1.442695
    %v3094 = vpow.pop %v3093
    %v3095 = vmul.f32 %v3076, 1.442695
    %v3096 = vpow.pop %v3095
    %v3097 = vmul.f32 %v3077, 1.442695
    %v3098 = vpow.pop %v3097
    %v3099 = vmul.f32 %v3078, 1.442695
    %v3100 = vpow.pop %v3099
    %v3101 = vmul.f32 %v3079, 1.442695
    %v3102 = vpow.pop %v3101
    %v3103 = vmul.f32 %v3080, 1.442695
    %v3104 = vpow.pop %v3103
    %v3105 = vmul.f32 %v3081, 1.442695
    %v3106 = vpow.pop %v3105
    %v3107 = vmul.f32 %v3082, 1.442695
    %v3108 = vpow.pop %v3107
    %v3109 = vmul.f32 %v3083, 1.442695
    %v3110 = vpow.pop %v3109
    %v3111 = vmul.f32 %v3084, 1.442695
    %v3112 = vpow.pop %v3111
    %v3113 = vmul.f32 %v3085, 1.442695
    %v3114 = vpow.pop %v3113
    %v3115 = vmul.f32 %v3086, 1.442695
    %v3116 = vpow.pop %v3115
    %v3117 = vmul.f32 %v3087, 1.442695
    %v3118 = vpow.pop %v3117
    %v3119 = vmul.f32 %v3088, 1.442695
    %v3120 = vpow.pop %v3119
    %v3121 = vsel %vm3024, %v3090, 0.0
    %3122 = vadd.xlane.f32.xlu0 %v3121
    %v3123 = vpop.xlane.xlu0 %3122
    %v3124 = vsel %vm3024, %v3092, 0.0
    %3125 = vadd.xlane.f32.xlu0 %v3124
    %v3126 = vpop.xlane.xlu0 %3125
    %v3127 = vsel %vm3024, %v3094, 0.0
    %3128 = vadd.xlane.f32.xlu0 %v3127
    %v3129 = vpop.xlane.xlu0 %3128
    %v3130 = vsel %vm3024, %v3096, 0.0
    %3131 = vadd.xlane.f32.xlu0 %v3130
    %v3132 = vpop.xlane.xlu0 %3131
    %v3133 = vsel %vm3024, %v3098, 0.0
    %3134 = vadd.xlane.f32.xlu0 %v3133
    %v3135 = vpop.xlane.xlu0 %3134
    %v3136 = vsel %vm3024, %v3100, 0.0
    %3137 = vadd.xlane.f32.xlu0 %v3136
    %v3138 = vpop.xlane.xlu0 %3137
    %v3139 = vsel %vm3024, %v3102, 0.0
    %3140 = vadd.xlane.f32.xlu0 %v3139
    %v3141 = vpop.xlane.xlu0 %3140
    %v3142 = vsel %vm3024, %v3104, 0.0
    %3143 = vadd.xlane.f32.xlu0 %v3142
    %v3144 = vpop.xlane.xlu0 %3143
    %v3145 = vsel %vm3024, %v3106, 0.0
    %3146 = vadd.xlane.f32.xlu0 %v3145
    %v3147 = vpop.xlane.xlu0 %3146
    %v3148 = vsel %vm3024, %v3108, 0.0
    %3149 = vadd.xlane.f32.xlu0 %v3148
    %v3150 = vpop.xlane.xlu0 %3149
    %v3151 = vsel %vm3024, %v3110, 0.0
    %3152 = vadd.xlane.f32.xlu0 %v3151
    %v3153 = vpop.xlane.xlu0 %3152
    %v3154 = vsel %vm3024, %v3112, 0.0
    %3155 = vadd.xlane.f32.xlu0 %v3154
    %v3156 = vpop.xlane.xlu0 %3155
    %v3157 = vsel %vm3024, %v3114, 0.0
    %3158 = vadd.xlane.f32.xlu0 %v3157
    %v3159 = vpop.xlane.xlu0 %3158
    %v3160 = vsel %vm3024, %v3116, 0.0
    %3161 = vadd.xlane.f32.xlu0 %v3160
    %v3162 = vpop.xlane.xlu0 %3161
    %v3163 = vsel %vm3024, %v3118, 0.0
    %3164 = vadd.xlane.f32.xlu0 %v3163
    %v3165 = vpop.xlane.xlu0 %3164
    %v3166 = vsel %vm3024, %v3120, 0.0
    %3167 = vadd.xlane.f32.xlu0 %v3166
    %v3168 = vpop.xlane.xlu0 %3167
    %v3169 = vrcp.pop %v3123
    %v3170 = vrcp.pop %v3126
    %v3171 = vrcp.pop %v3129
    %v3172 = vrcp.pop %v3132
    %v3173 = vrcp.pop %v3135
    %v3174 = vrcp.pop %v3138
    %v3175 = vrcp.pop %v3141
    %v3176 = vrcp.pop %v3144
    %v3177 = vrcp.pop %v3147
    %v3178 = vrcp.pop %v3150
    %v3179 = vrcp.pop %v3153
    %v3180 = vrcp.pop %v3156
    %v3181 = vrcp.pop %v3159
    %v3182 = vrcp.pop %v3162
    %v3183 = vrcp.pop %v3165
    %v3184 = vrcp.pop %v3168
    %v3185 = vmul.f32 %v3123, %v3169
    %v3186 = vmul.f32 %v3126, %v3170
    %v3187 = vmul.f32 %v3129, %v3171
    %v3188 = vmul.f32 %v3132, %v3172
    %v3189 = vmul.f32 %v3135, %v3173
    %v3190 = vmul.f32 %v3138, %v3174
    %v3191 = vmul.f32 %v3141, %v3175
    %v3192 = vmul.f32 %v3144, %v3176
    %v3193 = vmul.f32 %v3147, %v3177
    %v3194 = vmul.f32 %v3150, %v3178
    %v3195 = vmul.f32 %v3153, %v3179
    %v3196 = vmul.f32 %v3156, %v3180
    %v3197 = vmul.f32 %v3159, %v3181
    %v3198 = vmul.f32 %v3162, %v3182
    %v3199 = vmul.f32 %v3165, %v3183
    %v3200 = vmul.f32 %v3168, %v3184
    %v3201 = vsub.f32 2.0, %v3185
    %v3202 = vsub.f32 2.0, %v3186
    %v3203 = vsub.f32 2.0, %v3187
    %v3204 = vsub.f32 2.0, %v3188
    %v3205 = vsub.f32 2.0, %v3189
    %v3206 = vsub.f32 2.0, %v3190
    %v3207 = vsub.f32 2.0, %v3191
    %v3208 = vsub.f32 2.0, %v3192
    %v3209 = vsub.f32 2.0, %v3193
    %v3210 = vsub.f32 2.0, %v3194
    %v3211 = vsub.f32 2.0, %v3195
    %v3212 = vsub.f32 2.0, %v3196
    %v3213 = vsub.f32 2.0, %v3197
    %v3214 = vsub.f32 2.0, %v3198
    %v3215 = vsub.f32 2.0, %v3199
    %v3216 = vsub.f32 2.0, %v3200
    %v3217 = vmul.f32 %v3169, %v3201
    %v3218 = vmul.f32 %v3170, %v3202
    %v3219 = vmul.f32 %v3171, %v3203
    %v3220 = vmul.f32 %v3172, %v3204
    %v3221 = vmul.f32 %v3173, %v3205
    %v3222 = vmul.f32 %v3174, %v3206
    %v3223 = vmul.f32 %v3175, %v3207
    %v3224 = vmul.f32 %v3176, %v3208
    %v3225 = vmul.f32 %v3177, %v3209
    %v3226 = vmul.f32 %v3178, %v3210
    %v3227 = vmul.f32 %v3179, %v3211
    %v3228 = vmul.f32 %v3180, %v3212
    %v3229 = vmul.f32 %v3181, %v3213
    %v3230 = vmul.f32 %v3182, %v3214
    %v3231 = vmul.f32 %v3183, %v3215
    %v3232 = vmul.f32 %v3184, %v3216
    %v3233 = vmul.f32 %v3090, %v3217
    %v3234 = vmul.f32 %v3092, %v3218
    %v3235 = vmul.f32 %v3094, %v3219
    %v3236 = vmul.f32 %v3096, %v3220
    %v3237 = vmul.f32 %v3098, %v3221
    %v3238 = vmul.f32 %v3100, %v3222
    %v3239 = vmul.f32 %v3102, %v3223
    %v3240 = vmul.f32 %v3104, %v3224
    %v3241 = vmul.f32 %v3106, %v3225
    %v3242 = vmul.f32 %v3108, %v3226
    %v3243 = vmul.f32 %v3110, %v3227
    %v3244 = vmul.f32 %v3112, %v3228
    %v3245 = vmul.f32 %v3114, %v3229
    %v3246 = vmul.f32 %v3116, %v3230
    %v3247 = vmul.f32 %v3118, %v3231
    %v3248 = vmul.f32 %v3120, %v3232
    %v3249 = vld [vmem:[%s6] sm:$0x3f]
    %v3250 = vld [vmem:[%s6 + $0x8] sm:$0x3f]
    %v3252 = vsel %vm3024, %v3233, 0
    %v3255 = vsel %vm3024, %v3234, 0
    %v3258 = vsel %vm3024, %v3235, 0
    %v3261 = vsel %vm3024, %v3236, 0
    %v3264 = vsel %vm3024, %v3237, 0
    %v3267 = vsel %vm3024, %v3238, 0
    %v3270 = vsel %vm3024, %v3239, 0
    %v3273 = vsel %vm3024, %v3240, 0
    %v3276 = vsel %vm3024, %v3241, 0
    %v3279 = vsel %vm3024, %v3242, 0
    %v3282 = vsel %vm3024, %v3243, 0
    %v3285 = vsel %vm3024, %v3244, 0
    %v3288 = vsel %vm3024, %v3245, 0
    %v3291 = vsel %vm3024, %v3246, 0
    %v3294 = vsel %vm3024, %v3247, 0
    %v3297 = vsel %vm3024, %v3248, 0
    %vm3299 = vcmask 1045504
    %v3301 = vsel %vm3299, %v3249, 0
    %v3304 = vsel %vm3299, %v3250, 0
    %3306 = vmatprep.subr.mxu0 %v3304
    %3307 = vmatpush1.msra.mxu0 %v3301
    %3308 = vmatprep.subr.mxu0 0.0
    %3309 = vmatpush1.msra.mxu0 0.0
    %3310 = vmatprep.subr.mxu0 0.0
    %3311 = vmatpush1.msra.mxu0 0.0
    %3312 = vmatprep.subr.mxu0 0.0
    %3313 = vmatpush1.msra.mxu0 0.0
    %3314 = vmatprep.subr.mxu0 0.0
    %3315 = vmatpush1.msra.mxu0 0.0
    %3316 = vmatprep.subr.mxu0 0.0
    %3317 = vmatpush1.msra.mxu0 0.0
    %3318 = vmatprep.subr.mxu0 0.0
    %3319 = vmatpush1.msra.mxu0 0.0
    %3320 = vmatprep.subr.mxu0 0.0
    %3321 = vmatpush1.msra.mxu0 0.0
    %3322 = vmatprep.subr.mxu0 0.0
    %3323 = vmatpush1.msra.mxu0 0.0
    %3324 = vmatprep.subr.mxu0 0.0
    %3325 = vmatpush1.msra.mxu0 0.0
    %3326 = vmatprep.subr.mxu0 0.0
    %3327 = vmatpush1.msra.mxu0 0.0
    %3328 = vmatprep.subr.mxu0 0.0
    %3329 = vmatpush1.msra.mxu0 0.0
    %3330 = vmatprep.subr.mxu0 0.0
    %3331 = vmatpush1.msra.mxu0 0.0
    %3332 = vmatprep.subr.mxu0 0.0
    %3333 = vmatpush1.msra.mxu0 0.0
    %3334 = vmatprep.subr.mxu0 0.0
    %3335 = vmatpush1.msra.mxu0 0.0
    %3336 = vmatprep.subr.mxu0 0.0
    %3337 = vmatpush1.msra.mxu0 0.0
    %3338 = vmatprep.subr.mxu0 0.0
    %3339 = vmatpush1.msra.mxu0 0.0
    %3340 = vmatprep.subr.mxu0 0.0
    %3341 = vmatpush1.msra.mxu0 0.0
    %3342 = vmatprep.subr.mxu0 0.0
    %3343 = vmatpush1.msra.mxu0 0.0
    %3344 = vmatprep.subr.mxu0 0.0
    %3345 = vmatpush1.msra.mxu0 0.0
    %3346 = vmatprep.subr.mxu0 0.0
    %3347 = vmatpush1.msra.mxu0 0.0
    %3348 = vmatprep.subr.mxu0 0.0
    %3349 = vmatpush1.msra.mxu0 0.0
    %3350 = vmatprep.subr.mxu0 0.0
    %3351 = vmatpush1.msra.mxu0 0.0
    %3352 = vmatprep.subr.mxu0 0.0
    %3353 = vmatpush1.msra.mxu0 0.0
    %3354 = vmatprep.subr.mxu0 0.0
    %3355 = vmatpush1.msra.mxu0 0.0
    %3356 = vmatprep.subr.mxu0 0.0
    %3357 = vmatpush1.msra.mxu0 0.0
    %3358 = vmatprep.subr.mxu0 0.0
    %3359 = vmatpush1.msra.mxu0 0.0
    %3360 = vmatprep.subr.mxu0 0.0
    %3361 = vmatpush1.msra.mxu0 0.0
    %3362 = vmatprep.subr.mxu0 0.0
    %3363 = vmatpush1.msra.mxu0 0.0
    %3364 = vmatprep.subr.mxu0 0.0
    %3365 = vmatpush1.msra.mxu0 0.0
    %3366 = vmatprep.subr.mxu0 0.0
    %3367 = vmatpush1.msra.mxu0 0.0
    %3368 = vmatprep.subr.mxu0 0.0
    %3369 = vmatpush1.msra.mxu0 0.0
    %3370 = vmatprep.mubr.f32.mxu0 0.0
    %3371 = vmatmul.mubr.f32.gmra.mrb[0].mxu0 %v3252
    %v3372 = vpop.f32.mrb[0].mxu0
    %v3373 = vadd.f32 0.0, %v3372
    %v3374 = vpop.f32.mrb[0].mxu0
    %v3375 = vadd.f32 0.0, %v3374
    %3376 = vmatprep.mubr.f32.mxu0 0.0
    %3377 = vmatmul.mubr.f32.gmra.mrb[0].mxu0 %v3255
    %v3378 = vpop.f32.mrb[0].mxu0
    %v3379 = vadd.f32 0.0, %v3378
    %v3380 = vpop.f32.mrb[0].mxu0
    %v3381 = vadd.f32 0.0, %v3380
    %3382 = vmatprep.mubr.f32.mxu0 0.0
    %3383 = vmatmul.mubr.f32.gmra.mrb[0].mxu0 %v3258
    %v3384 = vpop.f32.mrb[0].mxu0
    %v3385 = vadd.f32 0.0, %v3384
    %v3386 = vpop.f32.mrb[0].mxu0
    %v3387 = vadd.f32 0.0, %v3386
    %3388 = vmatprep.mubr.f32.mxu0 0.0
    %3389 = vmatmul.mubr.f32.gmra.mrb[0].mxu0 %v3261
    %v3390 = vpop.f32.mrb[0].mxu0
    %v3391 = vadd.f32 0.0, %v3390
    %v3392 = vpop.f32.mrb[0].mxu0
    %v3393 = vadd.f32 0.0, %v3392
    %3394 = vmatprep.mubr.f32.mxu0 0.0
    %3395 = vmatmul.mubr.f32.gmra.mrb[0].mxu0 %v3264
    %v3396 = vpop.f32.mrb[0].mxu0
    %v3397 = vadd.f32 0.0, %v3396
    %v3398 = vpop.f32.mrb[0].mxu0
    %v3399 = vadd.f32 0.0, %v3398
    %3400 = vmatprep.mubr.f32.mxu0 0.0
    %3401 = vmatmul.mubr.f32.gmra.mrb[0].mxu0 %v3267
    %v3402 = vpop.f32.mrb[0].mxu0
    %v3403 = vadd.f32 0.0, %v3402
    %v3404 = vpop.f32.mrb[0].mxu0
    %v3405 = vadd.f32 0.0, %v3404
    %3406 = vmatprep.mubr.f32.mxu0 0.0
    %3407 = vmatmul.mubr.f32.gmra.mrb[0].mxu0 %v3270
    %v3408 = vpop.f32.mrb[0].mxu0
    %v3409 = vadd.f32 0.0, %v3408
    %v3410 = vpop.f32.mrb[0].mxu0
    %v3411 = vadd.f32 0.0, %v3410
    %3412 = vmatprep.mubr.f32.mxu0 0.0
    %3413 = vmatmul.mubr.f32.gmra.mrb[0].mxu0 %v3273
    %v3414 = vpop.f32.mrb[0].mxu0
    %v3415 = vadd.f32 0.0, %v3414
    %v3416 = vpop.f32.mrb[0].mxu0
    %v3417 = vadd.f32 0.0, %v3416
    %3418 = vmatprep.mubr.f32.mxu0 0.0
    %3419 = vmatmul.mubr.f32.gmra.mrb[0].mxu0 %v3276
    %v3420 = vpop.f32.mrb[0].mxu0
    %v3421 = vadd.f32 0.0, %v3420
    %v3422 = vpop.f32.mrb[0].mxu0
    %v3423 = vadd.f32 0.0, %v3422
    %3424 = vmatprep.mubr.f32.mxu0 0.0
    %3425 = vmatmul.mubr.f32.gmra.mrb[0].mxu0 %v3279
    %v3426 = vpop.f32.mrb[0].mxu0
    %v3427 = vadd.f32 0.0, %v3426
    %v3428 = vpop.f32.mrb[0].mxu0
    %v3429 = vadd.f32 0.0, %v3428
    %3430 = vmatprep.mubr.f32.mxu0 0.0
    %3431 = vmatmul.mubr.f32.gmra.mrb[0].mxu0 %v3282
    %v3432 = vpop.f32.mrb[0].mxu0
    %v3433 = vadd.f32 0.0, %v3432
    %v3434 = vpop.f32.mrb[0].mxu0
    %v3435 = vadd.f32 0.0, %v3434
    %3436 = vmatprep.mubr.f32.mxu0 0.0
    %3437 = vmatmul.mubr.f32.gmra.mrb[0].mxu0 %v3285
    %v3438 = vpop.f32.mrb[0].mxu0
    %v3439 = vadd.f32 0.0, %v3438
    %v3440 = vpop.f32.mrb[0].mxu0
    %v3441 = vadd.f32 0.0, %v3440
    %3442 = vmatprep.mubr.f32.mxu0 0.0
    %3443 = vmatmul.mubr.f32.gmra.mrb[0].mxu0 %v3288
    %v3444 = vpop.f32.mrb[0].mxu0
    %v3445 = vadd.f32 0.0, %v3444
    %v3446 = vpop.f32.mrb[0].mxu0
    %v3447 = vadd.f32 0.0, %v3446
    %3448 = vmatprep.mubr.f32.mxu0 0.0
    %3449 = vmatmul.mubr.f32.gmra.mrb[0].mxu0 %v3291
    %v3450 = vpop.f32.mrb[0].mxu0
    %v3451 = vadd.f32 0.0, %v3450
    %v3452 = vpop.f32.mrb[0].mxu0
    %v3453 = vadd.f32 0.0, %v3452
    %3454 = vmatprep.mubr.f32.mxu0 0.0
    %3455 = vmatmul.mubr.f32.gmra.mrb[0].mxu0 %v3294
    %v3456 = vpop.f32.mrb[0].mxu0
    %v3457 = vadd.f32 0.0, %v3456
    %v3458 = vpop.f32.mrb[0].mxu0
    %v3459 = vadd.f32 0.0, %v3458
    %3460 = vmatprep.mubr.f32.mxu0 0.0
    %3461 = vmatmul.mubr.f32.gmra.mrb[0].mxu0 %v3297
    %v3462 = vpop.f32.mrb[0].mxu0
    %v3463 = vadd.f32 0.0, %v3462
    %v3464 = vpop.f32.mrb[0].mxu0
    %v3465 = vadd.f32 0.0, %v3464
    %3466 = vdwg.mxu0
    %v3467 = vmul.f32 %v2582, %v3373
    %v3468 = vmul.f32 %v2583, %v3375
    %v3469 = vmul.f32 %v2584, %v3379
    %v3470 = vmul.f32 %v2585, %v3381
    %v3471 = vmul.f32 %v2586, %v3385
    %v3472 = vmul.f32 %v2587, %v3387
    %v3473 = vmul.f32 %v2588, %v3391
    %v3474 = vmul.f32 %v2589, %v3393
    %v3475 = vmul.f32 %v2590, %v3397
    %v3476 = vmul.f32 %v2591, %v3399
    %v3477 = vmul.f32 %v2592, %v3403
    %v3478 = vmul.f32 %v2593, %v3405
    %v3479 = vmul.f32 %v2594, %v3409
    %v3480 = vmul.f32 %v2595, %v3411
    %v3481 = vmul.f32 %v2596, %v3415
    %v3482 = vmul.f32 %v2597, %v3417
    %v3483 = vmul.f32 %v2598, %v3421
    %v3484 = vmul.f32 %v2599, %v3423
    %v3485 = vmul.f32 %v2600, %v3427
    %v3486 = vmul.f32 %v2601, %v3429
    %v3487 = vmul.f32 %v2602, %v3433
    %v3488 = vmul.f32 %v2603, %v3435
    %v3489 = vmul.f32 %v2604, %v3439
    %v3490 = vmul.f32 %v2605, %v3441
    %v3491 = vmul.f32 %v2606, %v3445
    %v3492 = vmul.f32 %v2607, %v3447
    %v3493 = vmul.f32 %v2608, %v3451
    %v3494 = vmul.f32 %v2609, %v3453
    %v3495 = vmul.f32 %v2610, %v3457
    %v3496 = vmul.f32 %v2611, %v3459
    %v3497 = vmul.f32 %v2612, %v3463
    %v3498 = vmul.f32 %v2613, %v3465
    %v3499 = vld [vmem:[%s7] sm:$0xff]
    %v3500 = vld [vmem:[%s7 + $0x8] sm:$0xff]
    %v3501 = vld [vmem:[%s7 + $0x10] sm:$0xff]
    %v3502 = vld [vmem:[%s7 + $0x18] sm:$0xff]
    %v3503 = vld [vmem:[%s7 + $0x20] sm:$0xff]
    %v3504 = vld [vmem:[%s7 + $0x28] sm:$0xff]
    %v3505 = vld [vmem:[%s7 + $0x30] sm:$0xff]
    %v3506 = vld [vmem:[%s7 + $0x38] sm:$0xff]
    %v3507 = vld [vmem:[%s7 + $0x40] sm:$0xff]
    %v3508 = vld [vmem:[%s7 + $0x48] sm:$0xff]
    %v3509 = vld [vmem:[%s7 + $0x50] sm:$0xff]
    %v3510 = vld [vmem:[%s7 + $0x58] sm:$0xff]
    %v3511 = vld [vmem:[%s7 + $0x60] sm:$0xff]
    %v3512 = vld [vmem:[%s7 + $0x68] sm:$0xff]
    %v3513 = vld [vmem:[%s7 + $0x70] sm:$0xff]
    %v3514 = vld [vmem:[%s7 + $0x78] sm:$0xff]
    %v3515 = vld [vmem:[%s7 + $0x80] sm:$0xff]
    %v3516 = vld [vmem:[%s7 + $0x88] sm:$0xff]
    %v3517 = vld [vmem:[%s7 + $0x90] sm:$0xff]
    %v3518 = vld [vmem:[%s7 + $0x98] sm:$0xff]
    %v3519 = vld [vmem:[%s7 + $0xa0] sm:$0xff]
    %v3520 = vld [vmem:[%s7 + $0xa8] sm:$0xff]
    %v3521 = vld [vmem:[%s7 + $0xb0] sm:$0xff]
    %v3522 = vld [vmem:[%s7 + $0xb8] sm:$0xff]
    %v3524 = vsel %vm2734, %v3468, 0
    %v3527 = vsel %vm2734, %v3470, 0
    %v3530 = vsel %vm2734, %v3472, 0
    %v3533 = vsel %vm2734, %v3474, 0
    %v3536 = vsel %vm2734, %v3476, 0
    %v3539 = vsel %vm2734, %v3478, 0
    %v3542 = vsel %vm2734, %v3480, 0
    %v3545 = vsel %vm2734, %v3482, 0
    %v3548 = vsel %vm2734, %v3484, 0
    %v3551 = vsel %vm2734, %v3486, 0
    %v3554 = vsel %vm2734, %v3488, 0
    %v3557 = vsel %vm2734, %v3490, 0
    %v3560 = vsel %vm2734, %v3492, 0
    %v3563 = vsel %vm2734, %v3494, 0
    %v3566 = vsel %vm2734, %v3496, 0
    %v3569 = vsel %vm2734, %v3498, 0
    %3571 = vmatprep.subr.mxu0 0.0
    %3572 = vmatpush1.msra.mxu0 %v3499
    %3573 = vmatprep.subr.mxu0 0.0
    %3574 = vmatpush1.msra.mxu0 %v3500
    %3575 = vmatprep.subr.mxu0 0.0
    %3576 = vmatpush1.msra.mxu0 %v3501
    %3577 = vmatprep.subr.mxu0 0.0
    %3578 = vmatpush1.msra.mxu0 %v3502
    %3579 = vmatprep.subr.mxu0 0.0
    %3580 = vmatpush1.msra.mxu0 %v3503
    %3581 = vmatprep.subr.mxu0 0.0
    %3582 = vmatpush1.msra.mxu0 %v3504
    %3583 = vmatprep.subr.mxu0 0.0
    %3584 = vmatpush1.msra.mxu0 %v3505
    %3585 = vmatprep.subr.mxu0 0.0
    %3586 = vmatpush1.msra.mxu0 %v3506
    %3587 = vmatprep.subr.mxu0 0.0
    %3588 = vmatpush1.msra.mxu0 %v3507
    %3589 = vmatprep.subr.mxu0 0.0
    %3590 = vmatpush1.msra.mxu0 %v3508
    %3591 = vmatprep.subr.mxu0 0.0
    %3592 = vmatpush1.msra.mxu0 %v3509
    %3593 = vmatprep.subr.mxu0 0.0
    %3594 = vmatpush1.msra.mxu0 %v3510
    %3595 = vmatprep.subr.mxu0 0.0
    %3596 = vmatpush1.msra.mxu0 %v3511
    %3597 = vmatprep.subr.mxu0 0.0
    %3598 = vmatpush1.msra.mxu0 %v3512
    %3599 = vmatprep.subr.mxu0 0.0
    %3600 = vmatpush1.msra.mxu0 %v3513
    %3601 = vmatprep.subr.mxu0 0.0
    %3602 = vmatpush1.msra.mxu0 %v3514
    %3603 = vmatprep.subr.mxu0 0.0
    %3604 = vmatpush1.msra.mxu0 %v3515
    %3605 = vmatprep.subr.mxu0 0.0
    %3606 = vmatpush1.msra.mxu0 %v3516
    %3607 = vmatprep.subr.mxu0 0.0
    %3608 = vmatpush1.msra.mxu0 %v3517
    %3609 = vmatprep.subr.mxu0 0.0
    %3610 = vmatpush1.msra.mxu0 %v3518
    %3611 = vmatprep.subr.mxu0 0.0
    %3612 = vmatpush1.msra.mxu0 %v3519
    %3613 = vmatprep.subr.mxu0 0.0
    %3614 = vmatpush1.msra.mxu0 %v3520
    %3615 = vmatprep.subr.mxu0 0.0
    %3616 = vmatpush1.msra.mxu0 %v3521
    %3617 = vmatprep.subr.mxu0 0.0
    %3618 = vmatpush1.msra.mxu0 %v3522
    %3619 = vmatprep.subr.mxu0 0.0
    %3620 = vmatpush1.msra.mxu0 0.0
    %3621 = vmatprep.subr.mxu0 0.0
    %3622 = vmatpush1.msra.mxu0 0.0
    %3623 = vmatprep.subr.mxu0 0.0
    %3624 = vmatpush1.msra.mxu0 0.0
    %3625 = vmatprep.subr.mxu0 0.0
    %3626 = vmatpush1.msra.mxu0 0.0
    %3627 = vmatprep.subr.mxu0 0.0
    %3628 = vmatpush1.msra.mxu0 0.0
    %3629 = vmatprep.subr.mxu0 0.0
    %3630 = vmatpush1.msra.mxu0 0.0
    %3631 = vmatprep.subr.mxu0 0.0
    %3632 = vmatpush1.msra.mxu0 0.0
    %3633 = vmatprep.subr.mxu0 0.0
    %3634 = vmatpush1.msra.mxu0 0.0
    %3635 = vmatprep.mubr.f32.mxu0 %v3524
    %3636 = vmatmul.mubr.f32.gmra.mrb[0].mxu0 %v3467
    %v3637 = vpop.f32.mrb[0].mxu0
    %v3638 = vadd.f32 0.0, %v3637
    %v3639 = vpop.f32.mrb[0].mxu0
    %3640 = vmatprep.mubr.f32.mxu0 %v3527
    %3641 = vmatmul.mubr.f32.gmra.mrb[0].mxu0 %v3469
    %v3642 = vpop.f32.mrb[0].mxu0
    %v3643 = vadd.f32 0.0, %v3642
    %v3644 = vpop.f32.mrb[0].mxu0
    %3645 = vmatprep.mubr.f32.mxu0 %v3530
    %3646 = vmatmul.mubr.f32.gmra.mrb[0].mxu0 %v3471
    %v3647 = vpop.f32.mrb[0].mxu0
    %v3648 = vadd.f32 0.0, %v3647
    %v3649 = vpop.f32.mrb[0].mxu0
    %3650 = vmatprep.mubr.f32.mxu0 %v3533
    %3651 = vmatmul.mubr.f32.gmra.mrb[0].mxu0 %v3473
    %v3652 = vpop.f32.mrb[0].mxu0
    %v3653 = vadd.f32 0.0, %v3652
    %v3654 = vpop.f32.mrb[0].mxu0
    %3655 = vmatprep.mubr.f32.mxu0 %v3536
    %3656 = vmatmul.mubr.f32.gmra.mrb[0].mxu0 %v3475
    %v3657 = vpop.f32.mrb[0].mxu0
    %v3658 = vadd.f32 0.0, %v3657
    %v3659 = vpop.f32.mrb[0].mxu0
    %3660 = vmatprep.mubr.f32.mxu0 %v3539
    %3661 = vmatmul.mubr.f32.gmra.mrb[0].mxu0 %v3477
    %v3662 = vpop.f32.mrb[0].mxu0
    %v3663 = vadd.f32 0.0, %v3662
    %v3664 = vpop.f32.mrb[0].mxu0
    %3665 = vmatprep.mubr.f32.mxu0 %v3542
    %3666 = vmatmul.mubr.f32.gmra.mrb[0].mxu0 %v3479
    %v3667 = vpop.f32.mrb[0].mxu0
    %v3668 = vadd.f32 0.0, %v3667
    %v3669 = vpop.f32.mrb[0].mxu0
    %3670 = vmatprep.mubr.f32.mxu0 %v3545
    %3671 = vmatmul.mubr.f32.gmra.mrb[0].mxu0 %v3481
    %v3672 = vpop.f32.mrb[0].mxu0
    %v3673 = vadd.f32 0.0, %v3672
    %v3674 = vpop.f32.mrb[0].mxu0
    %3675 = vmatprep.mubr.f32.mxu0 %v3548
    %3676 = vmatmul.mubr.f32.gmra.mrb[0].mxu0 %v3483
    %v3677 = vpop.f32.mrb[0].mxu0
    %v3678 = vadd.f32 0.0, %v3677
    %v3679 = vpop.f32.mrb[0].mxu0
    %3680 = vmatprep.mubr.f32.mxu0 %v3551
    %3681 = vmatmul.mubr.f32.gmra.mrb[0].mxu0 %v3485
    %v3682 = vpop.f32.mrb[0].mxu0
    %v3683 = vadd.f32 0.0, %v3682
    %v3684 = vpop.f32.mrb[0].mxu0
    %3685 = vmatprep.mubr.f32.mxu0 %v3554
    %3686 = vmatmul.mubr.f32.gmra.mrb[0].mxu0 %v3487
    %v3687 = vpop.f32.mrb[0].mxu0
    %v3688 = vadd.f32 0.0, %v3687
    %v3689 = vpop.f32.mrb[0].mxu0
    %3690 = vmatprep.mubr.f32.mxu0 %v3557
    %3691 = vmatmul.mubr.f32.gmra.mrb[0].mxu0 %v3489
    %v3692 = vpop.f32.mrb[0].mxu0
    %v3693 = vadd.f32 0.0, %v3692
    %v3694 = vpop.f32.mrb[0].mxu0
    %3695 = vmatprep.mubr.f32.mxu0 %v3560
    %3696 = vmatmul.mubr.f32.gmra.mrb[0].mxu0 %v3491
    %v3697 = vpop.f32.mrb[0].mxu0
    %v3698 = vadd.f32 0.0, %v3697
    %v3699 = vpop.f32.mrb[0].mxu0
    %3700 = vmatprep.mubr.f32.mxu0 %v3563
    %3701 = vmatmul.mubr.f32.gmra.mrb[0].mxu0 %v3493
    %v3702 = vpop.f32.mrb[0].mxu0
    %v3703 = vadd.f32 0.0, %v3702
    %v3704 = vpop.f32.mrb[0].mxu0
    %3705 = vmatprep.mubr.f32.mxu0 %v3566
    %3706 = vmatmul.mubr.f32.gmra.mrb[0].mxu0 %v3495
    %v3707 = vpop.f32.mrb[0].mxu0
    %v3708 = vadd.f32 0.0, %v3707
    %v3709 = vpop.f32.mrb[0].mxu0
    %3710 = vmatprep.mubr.f32.mxu0 %v3569
    %3711 = vmatmul.mubr.f32.gmra.mrb[0].mxu0 %v3497
    %v3712 = vpop.f32.mrb[0].mxu0
    %v3713 = vadd.f32 0.0, %v3712
    %v3714 = vpop.f32.mrb[0].mxu0
    %3715 = vdwg.mxu0
    %v3716 = vmul.f32 %v3638, 0.16666667
    %v3717 = vmul.f32 %v3643, 0.16666667
    %v3718 = vmul.f32 %v3648, 0.16666667
    %v3719 = vmul.f32 %v3653, 0.16666667
    %v3720 = vmul.f32 %v3658, 0.16666667
    %v3721 = vmul.f32 %v3663, 0.16666667
    %v3722 = vmul.f32 %v3668, 0.16666667
    %v3723 = vmul.f32 %v3673, 0.16666667
    %v3724 = vmul.f32 %v3678, 0.16666667
    %v3725 = vmul.f32 %v3683, 0.16666667
    %v3726 = vmul.f32 %v3688, 0.16666667
    %v3727 = vmul.f32 %v3693, 0.16666667
    %v3728 = vmul.f32 %v3698, 0.16666667
    %v3729 = vmul.f32 %v3703, 0.16666667
    %v3730 = vmul.f32 %v3708, 0.16666667
    %v3731 = vmul.f32 %v3713, 0.16666667
    %v3732 = vld [vmem:[%s8] sm:$0x3f]
    %v3734 = vsel %vm3299, %v3732, 0
    %3736 = vmatprep.subr.mxu0 0.0
    %3737 = vmatpush1.msra.mxu0 %v3734
    %3738 = vmatprep.subr.mxu0 0.0
    %3739 = vmatpush1.msra.mxu0 0.0
    %3740 = vmatprep.subr.mxu0 0.0
    %3741 = vmatpush1.msra.mxu0 0.0
    %3742 = vmatprep.subr.mxu0 0.0
    %3743 = vmatpush1.msra.mxu0 0.0
    %3744 = vmatprep.subr.mxu0 0.0
    %3745 = vmatpush1.msra.mxu0 0.0
    %3746 = vmatprep.subr.mxu0 0.0
    %3747 = vmatpush1.msra.mxu0 0.0
    %3748 = vmatprep.subr.mxu0 0.0
    %3749 = vmatpush1.msra.mxu0 0.0
    %3750 = vmatprep.subr.mxu0 0.0
    %3751 = vmatpush1.msra.mxu0 0.0
    %3752 = vmatprep.subr.mxu0 0.0
    %3753 = vmatpush1.msra.mxu0 0.0
    %3754 = vmatprep.subr.mxu0 0.0
    %3755 = vmatpush1.msra.mxu0 0.0
    %3756 = vmatprep.subr.mxu0 0.0
    %3757 = vmatpush1.msra.mxu0 0.0
    %3758 = vmatprep.subr.mxu0 0.0
    %3759 = vmatpush1.msra.mxu0 0.0
    %3760 = vmatprep.subr.mxu0 0.0
    %3761 = vmatpush1.msra.mxu0 0.0
    %3762 = vmatprep.subr.mxu0 0.0
    %3763 = vmatpush1.msra.mxu0 0.0
    %3764 = vmatprep.subr.mxu0 0.0
    %3765 = vmatpush1.msra.mxu0 0.0
    %3766 = vmatprep.subr.mxu0 0.0
    %3767 = vmatpush1.msra.mxu0 0.0
    %3768 = vmatprep.subr.mxu0 0.0
    %3769 = vmatpush1.msra.mxu0 0.0
    %3770 = vmatprep.subr.mxu0 0.0
    %3771 = vmatpush1.msra.mxu0 0.0
    %3772 = vmatprep.subr.mxu0 0.0
    %3773 = vmatpush1.msra.mxu0 0.0
    %3774 = vmatprep.subr.mxu0 0.0
    %3775 = vmatpush1.msra.mxu0 0.0
    %3776 = vmatprep.subr.mxu0 0.0
    %3777 = vmatpush1.msra.mxu0 0.0
    %3778 = vmatprep.subr.mxu0 0.0
    %3779 = vmatpush1.msra.mxu0 0.0
    %3780 = vmatprep.subr.mxu0 0.0
    %3781 = vmatpush1.msra.mxu0 0.0
    %3782 = vmatprep.subr.mxu0 0.0
    %3783 = vmatpush1.msra.mxu0 0.0
    %3784 = vmatprep.subr.mxu0 0.0
    %3785 = vmatpush1.msra.mxu0 0.0
    %3786 = vmatprep.subr.mxu0 0.0
    %3787 = vmatpush1.msra.mxu0 0.0
    %3788 = vmatprep.subr.mxu0 0.0
    %3789 = vmatpush1.msra.mxu0 0.0
    %3790 = vmatprep.subr.mxu0 0.0
    %3791 = vmatpush1.msra.mxu0 0.0
    %3792 = vmatprep.subr.mxu0 0.0
    %3793 = vmatpush1.msra.mxu0 0.0
    %3794 = vmatprep.subr.mxu0 0.0
    %3795 = vmatpush1.msra.mxu0 0.0
    %3796 = vmatprep.subr.mxu0 0.0
    %3797 = vmatpush1.msra.mxu0 0.0
    %3798 = vmatprep.subr.mxu0 0.0
    %3799 = vmatpush1.msra.mxu0 0.0
    %3800 = vmatprep.mubr.f32.mxu0 0.0
    %3801 = vmatmul.mubr.f32.gmra.mrb[0].mxu0 %v3252
    %v3802 = vpop.f32.mrb[0].mxu0
    %v3803 = vadd.f32 0.0, %v3802
    %v3804 = vpop.f32.mrb[0].mxu0
    %3805 = vmatprep.mubr.f32.mxu0 0.0
    %3806 = vmatmul.mubr.f32.gmra.mrb[0].mxu0 %v3255
    %v3807 = vpop.f32.mrb[0].mxu0
    %v3808 = vadd.f32 0.0, %v3807
    %v3809 = vpop.f32.mrb[0].mxu0
    %3810 = vmatprep.mubr.f32.mxu0 0.0
    %3811 = vmatmul.mubr.f32.gmra.mrb[0].mxu0 %v3258
    %v3812 = vpop.f32.mrb[0].mxu0
    %v3813 = vadd.f32 0.0, %v3812
    %v3814 = vpop.f32.mrb[0].mxu0
    %3815 = vmatprep.mubr.f32.mxu0 0.0
    %3816 = vmatmul.mubr.f32.gmra.mrb[0].mxu0 %v3261
    %v3817 = vpop.f32.mrb[0].mxu0
    %v3818 = vadd.f32 0.0, %v3817
    %v3819 = vpop.f32.mrb[0].mxu0
    %3820 = vmatprep.mubr.f32.mxu0 0.0
    %3821 = vmatmul.mubr.f32.gmra.mrb[0].mxu0 %v3264
    %v3822 = vpop.f32.mrb[0].mxu0
    %v3823 = vadd.f32 0.0, %v3822
    %v3824 = vpop.f32.mrb[0].mxu0
    %3825 = vmatprep.mubr.f32.mxu0 0.0
    %3826 = vmatmul.mubr.f32.gmra.mrb[0].mxu0 %v3267
    %v3827 = vpop.f32.mrb[0].mxu0
    %v3828 = vadd.f32 0.0, %v3827
    %v3829 = vpop.f32.mrb[0].mxu0
    %3830 = vmatprep.mubr.f32.mxu0 0.0
    %3831 = vmatmul.mubr.f32.gmra.mrb[0].mxu0 %v3270
    %v3832 = vpop.f32.mrb[0].mxu0
    %v3833 = vadd.f32 0.0, %v3832
    %v3834 = vpop.f32.mrb[0].mxu0
    %3835 = vmatprep.mubr.f32.mxu0 0.0
    %3836 = vmatmul.mubr.f32.gmra.mrb[0].mxu0 %v3273
    %v3837 = vpop.f32.mrb[0].mxu0
    %v3838 = vadd.f32 0.0, %v3837
    %v3839 = vpop.f32.mrb[0].mxu0
    %3840 = vmatprep.mubr.f32.mxu0 0.0
    %3841 = vmatmul.mubr.f32.gmra.mrb[0].mxu0 %v3276
    %v3842 = vpop.f32.mrb[0].mxu0
    %v3843 = vadd.f32 0.0, %v3842
    %v3844 = vpop.f32.mrb[0].mxu0
    %3845 = vmatprep.mubr.f32.mxu0 0.0
    %3846 = vmatmul.mubr.f32.gmra.mrb[0].mxu0 %v3279
    %v3847 = vpop.f32.mrb[0].mxu0
    %v3848 = vadd.f32 0.0, %v3847
    %v3849 = vpop.f32.mrb[0].mxu0
    %3850 = vmatprep.mubr.f32.mxu0 0.0
    %3851 = vmatmul.mubr.f32.gmra.mrb[0].mxu0 %v3282
    %v3852 = vpop.f32.mrb[0].mxu0
    %v3853 = vadd.f32 0.0, %v3852
    %v3854 = vpop.f32.mrb[0].mxu0
    %3855 = vmatprep.mubr.f32.mxu0 0.0
    %3856 = vmatmul.mubr.f32.gmra.mrb[0].mxu0 %v3285
    %v3857 = vpop.f32.mrb[0].mxu0
    %v3858 = vadd.f32 0.0, %v3857
    %v3859 = vpop.f32.mrb[0].mxu0
    %3860 = vmatprep.mubr.f32.mxu0 0.0
    %3861 = vmatmul.mubr.f32.gmra.mrb[0].mxu0 %v3288
    %v3862 = vpop.f32.mrb[0].mxu0
    %v3863 = vadd.f32 0.0, %v3862
    %v3864 = vpop.f32.mrb[0].mxu0
    %3865 = vmatprep.mubr.f32.mxu0 0.0
    %3866 = vmatmul.mubr.f32.gmra.mrb[0].mxu0 %v3291
    %v3867 = vpop.f32.mrb[0].mxu0
    %v3868 = vadd.f32 0.0, %v3867
    %v3869 = vpop.f32.mrb[0].mxu0
    %3870 = vmatprep.mubr.f32.mxu0 0.0
    %3871 = vmatmul.mubr.f32.gmra.mrb[0].mxu0 %v3294
    %v3872 = vpop.f32.mrb[0].mxu0
    %v3873 = vadd.f32 0.0, %v3872
    %v3874 = vpop.f32.mrb[0].mxu0
    %3875 = vmatprep.mubr.f32.mxu0 0.0
    %3876 = vmatmul.mubr.f32.gmra.mrb[0].mxu0 %v3297
    %v3877 = vpop.f32.mrb[0].mxu0
    %v3878 = vadd.f32 0.0, %v3877
    %v3879 = vpop.f32.mrb[0].mxu0
    %3880 = vdwg.mxu0
    %v3881 = vadd.f32 %v3716, %v3803
    %v3882 = vadd.f32 %v3717, %v3808
    %v3883 = vadd.f32 %v3718, %v3813
    %v3884 = vadd.f32 %v3719, %v3818
    %v3885 = vadd.f32 %v3720, %v3823
    %v3886 = vadd.f32 %v3721, %v3828
    %v3887 = vadd.f32 %v3722, %v3833
    %v3888 = vadd.f32 %v3723, %v3838
    %v3889 = vadd.f32 %v3724, %v3843
    %v3890 = vadd.f32 %v3725, %v3848
    %v3891 = vadd.f32 %v3726, %v3853
    %v3892 = vadd.f32 %v3727, %v3858
    %v3893 = vadd.f32 %v3728, %v3863
    %v3894 = vadd.f32 %v3729, %v3868
    %v3895 = vadd.f32 %v3730, %v3873
    %v3896 = vadd.f32 %v3731, %v3878
    %3897 = vst [vmem:[#allocation6] sm:$0xff] %v3881
    %3898 = vst [vmem:[#allocation6 + $0x8] sm:$0xff] %v3882
    %3899 = vst [vmem:[#allocation6 + $0x10] sm:$0xff] %v3883
    %3900 = vst [vmem:[#allocation6 + $0x18] sm:$0xff] %v3884
    %3901 = vst [vmem:[#allocation6 + $0x20] sm:$0xff] %v3885
    %3902 = vst [vmem:[#allocation6 + $0x28] sm:$0xff] %v3886
    %3903 = vst [vmem:[#allocation6 + $0x30] sm:$0xff] %v3887
    %3904 = vst [vmem:[#allocation6 + $0x38] sm:$0xff] %v3888
    %3905 = vst [vmem:[#allocation6 + $0x40] sm:$0xff] %v3889
    %3906 = vst [vmem:[#allocation6 + $0x48] sm:$0xff] %v3890
    %3907 = vst [vmem:[#allocation6 + $0x50] sm:$0xff] %v3891
    %3908 = vst [vmem:[#allocation6 + $0x58] sm:$0xff] %v3892
    %3909 = vst [vmem:[#allocation6 + $0x60] sm:$0xff] %v3893
    %3910 = vst [vmem:[#allocation6 + $0x68] sm:$0xff] %v3894
    %3911 = vst [vmem:[#allocation6 + $0x70] sm:$0xff] %v3895
    %3912 = vst [vmem:[#allocation6 + $0x78] sm:$0xff] %v3896
    // Predicated region
    $region42: #{tpu_custom_call.1} parent=1 // pred_check
      _
    $region43: #{tpu_custom_call.1} parent=1 // pred_check_branch
      %3914 = sbr.rel (0) target = $region45
    $region44: #{tpu_custom_call.1} parent=1 // pred_region
      %s3916 = ssub.s32 2048, 2048
      %3917 = vsyncadd [#allocation5], %s3916
      %s3918 = sshll.u32 [#allocation6], 4
      %s3919 = int_to_ptr.vmem [resolvable:$true] %s3918
      %3924 = dma.vmem_to_hbm [thread:$0]  %s3919, 2048, %s9, [#allocation5], 128, 128, 8
    $region45: #{tpu_custom_call.1} parent=1 // pred_fallthru
      _
    // Predicated region
    $region46: #{tpu_custom_call.1} parent=1 // pred_check
      _
    $region47: #{tpu_custom_call.1} parent=1 // pred_check_branch
      %3926 = sbr.rel (0) target = $region49
    $region48: #{tpu_custom_call.1} parent=1 // pred_region
      %3927 = dma.done [#allocation5], 2048
    $region49: #{tpu_custom_call.1} parent=1 // pred_fallthru
      _
    %3928 = vsyncpa [#allocation4], 1
    %3929 = vsyncpa [#allocation5], 1

</llo_original>
